<compile_context>
chip_gen: v5e
topology: v5e:2x2
jax: 0.10.0
libtpu: 0.0.40
codegen_flags: <defaults>
</compile_context>

<pallas_src>
from functools import partial

import numpy as np
import jax
import jax.numpy as jnp
from jax.experimental import pallas as pl
from jax.experimental.pallas import tpu as pltpu

_NEG_INF = -1e30


def _round_up(x, m):
    return (x + m - 1) // m * m


def _pick_tile(extent, align, max_tile):
    """Largest multiple of `align` <= max_tile that divides round_up(extent, align).

    Guarantees the padded extent is an exact multiple of the tile, so no padding
    beyond the minimal 8/128 alignment is ever introduced (fixes the K=768->1024
    over-padding from the previous version).
    """
    padded = _round_up(max(extent, 1), align)
    limit = min(max_tile, padded)
    best = align
    t = align
    while t <= limit:
        if padded % t == 0:
            best = t
        t += align
    return best


# --------------------------------------------------------------------------------------
# Tiled linear:  y = x @ w_t + b   (bf16 MXU operands, f32 VMEM accumulator)
# --------------------------------------------------------------------------------------
def _linear_kernel(x_ref, w_ref, b_ref, o_ref, acc_ref):
    k = pl.program_id(2)

    @pl.when(k == 0)
    def _():
        acc_ref[...] = jnp.zeros_like(acc_ref)

    acc_ref[...] += jnp.dot(x_ref[...], w_ref[...],
                            preferred_element_type=jnp.float32)

    @pl.when(k == pl.num_programs(2) - 1)
    def _():
        o_ref[...] = (acc_ref[...] + b_ref[...]).astype(o_ref.dtype)


def pallas_linear(x2d, w_t, b, *, out_dtype=jnp.float32, tm=256, tn=256, tk=512):
    """y = x2d @ w_t + b.  w_t is (K, Nout) (torch weight transposed)."""
    M, K = x2d.shape
    Nout = w_t.shape[1]

    # tiles that exactly divide the minimally padded extents (no extra K/N padding)
    tm = _pick_tile(M, 8, tm)
    tn = _pick_tile(Nout, 128, tn)
    tk = _pick_tile(K, 128, tk)
    Mp, Kp, Np = _round_up(M, 8), _round_up(K, 128), _round_up(Nout, 128)

    xp = jnp.pad(x2d, ((0, Mp - M), (0, Kp - K))) if (Mp, Kp) != (M, K) else x2d
    wp = jnp.pad(w_t, ((0, Kp - K), (0, Np - Nout))) if (Kp, Np) != (K, Nout) else w_t
    bp = jnp.pad(b, (0, Np - Nout)) if Np != Nout else b

    xp = xp.astype(jnp.bfloat16)
    wp = wp.astype(jnp.bfloat16)
    bp = bp.astype(jnp.float32).reshape(1, Np)

    out = pl.pallas_call(
        _linear_kernel,
        out_shape=jax.ShapeDtypeStruct((Mp, Np), out_dtype),
        grid=(Mp // tm, Np // tn, Kp // tk),
        in_specs=[
            pl.BlockSpec((tm, tk), lambda i, j, k: (i, k)),
            pl.BlockSpec((tk, tn), lambda i, j, k: (k, j)),
            pl.BlockSpec((1, tn), lambda i, j, k: (0, j)),
        ],
        out_specs=pl.BlockSpec((tm, tn), lambda i, j, k: (i, j)),
        scratch_shapes=[pltpu.VMEM((tm, tn), jnp.float32)],
        compiler_params=pltpu.CompilerParams(
            dimension_semantics=("parallel", "parallel", "arbitrary"),
            vmem_limit_bytes=32 * 1024 * 1024,
        ),
    )(xp, wp, bp)
    return out[:M, :Nout]


# --------------------------------------------------------------------------------------
# Flash-style attention core: grid (B, H, q_tiles, kv_tiles), online softmax
# --------------------------------------------------------------------------------------
def _flash_attn_kernel(q_ref, k_ref, v_ref, bias_ref, o_ref,
                       m_sc, l_sc, acc_sc, *, exp_dtype):
    ki = pl.program_id(3)

    @pl.when(ki == 0)
    def _():
        m_sc[...] = jnp.full_like(m_sc, -jnp.inf)
        l_sc[...] = jnp.zeros_like(l_sc)
        acc_sc[...] = jnp.zeros_like(acc_sc)

    q = q_ref[0, 0]          # (tq, hd) bf16, softmax scale already folded in
    k = k_ref[0, 0]          # (tkv, hd) bf16
    v = v_ref[0, 0]          # (tkv, hd) bf16

    # scores: contract on head_dim directly (no in-kernel transpose)
    s = jax.lax.dot_general(q, k, (((1,), (1,)), ((), ())),
                            preferred_element_type=jnp.float32)
    s = s + bias_ref[0].astype(jnp.float32)          # (tq, tkv); padded keys = -1e30

    m_new = jnp.maximum(m_sc[...], jnp.max(s, axis=-1, keepdims=True))
    alpha = jnp.exp(m_sc[...] - m_new)
    # bf16 exp halves EUP work on v6e/v7x (exp is the saturated slot at hd 32-64);
    # m/l/acc and the final rescale stay in f32.
    p = jnp.exp((s - m_new).astype(exp_dtype))

    l_sc[...] = alpha * l_sc[...] + jnp.sum(p.astype(jnp.float32),
                                            axis=-1, keepdims=True)
    acc_sc[...] = alpha * acc_sc[...] + jax.lax.dot_general(
        p.astype(v.dtype), v, (((1,), (0,)), ((), ())),
        preferred_element_type=jnp.float32)
    m_sc[...] = m_new

    @pl.when(ki == pl.num_programs(3) - 1)
    def _():
        o_ref[0, 0] = (acc_sc[...] *
                       pl.reciprocal(l_sc[...], approx=True)).astype(o_ref.dtype)


def pallas_flash_attention(q, k, v, bias, *, tq=None, tkv=None,
                           exp_dtype=jnp.bfloat16):
    """q/k/v: (B, H, Np, hd) bf16; bias: (H, Np, Np) bf16 -> (B, H, Np, hd) bf16."""
    B, H, Np, hd = q.shape
    tq = tq or _pick_tile(Np, 128, 256)
    tkv = tkv or _pick_tile(Np, 128, 256)

    kern = partial(_flash_attn_kernel, exp_dtype=exp_dtype)
    return pl.pallas_call(
        kern,
        out_shape=jax.ShapeDtypeStruct((B, H, Np, hd), jnp.bfloat16),
        grid=(B, H, Np // tq, Np // tkv),
        in_specs=[
            pl.BlockSpec((1, 1, tq, hd), lambda b, h, qi, ki: (b, h, qi, 0)),
            pl.BlockSpec((1, 1, tkv, hd), lambda b, h, qi, ki: (b, h, ki, 0)),
            pl.BlockSpec((1, 1, tkv, hd), lambda b, h, qi, ki: (b, h, ki, 0)),
            pl.BlockSpec((1, tq, tkv), lambda b, h, qi, ki: (h, qi, ki)),
        ],
        out_specs=pl.BlockSpec((1, 1, tq, hd), lambda b, h, qi, ki: (b, h, qi, 0)),
        scratch_shapes=[
            pltpu.VMEM((tq, 1), jnp.float32),    # running max m
            pltpu.VMEM((tq, 1), jnp.float32),    # running sum l
            pltpu.VMEM((tq, hd), jnp.float32),   # output accumulator
        ],
        compiler_params=pltpu.CompilerParams(
            dimension_semantics=("parallel", "parallel", "parallel", "arbitrary"),
            vmem_limit_bytes=32 * 1024 * 1024,   # tiles are a few hundred KiB; fits all gens
        ),
    )(q, k, v, bias)


# --------------------------------------------------------------------------------------
# Relative position index (replicates the PyTorch buffer construction exactly)
# --------------------------------------------------------------------------------------
def build_relative_position_index(window_size):
    Wh, Ww = window_size
    num_rel_dist = (2 * Wh - 1) * (2 * Ww - 1) + 3
    coords = np.stack(np.meshgrid(np.arange(Wh), np.arange(Ww), indexing="ij"))
    coords_flatten = coords.reshape(2, -1)
    rel = coords_flatten[:, :, None] - coords_flatten[:, None, :]
    rel = rel.transpose(1, 2, 0).copy()
    rel[:, :, 0] += Wh - 1
    rel[:, :, 1] += Ww - 1
    rel[:, :, 0] *= 2 * Ww - 1
    M = Wh * Ww
    index = np.zeros((M + 1, M + 1), dtype=np.int64)
    index[1:, 1:] = rel.sum(-1)
    index[0, :] = num_rel_dist - 3
    index[:, 0] = num_rel_dist - 2
    index[0, 0] = num_rel_dist - 1
    return index, num_rel_dist


def precompute_rel_pos_bias(rel_pos_table, rel_pos_index, num_heads, N, Np,
                            external_bias=None):
    """Build the padded (H, Np, Np) bf16 bias once per layer (input independent).

    Padded KEY columns get -1e30 so the softmax over real keys is unchanged; padded
    QUERY rows get 0 (they are sliced off after the projection).
    """
    if rel_pos_table is not None:
        idx = rel_pos_index.reshape(-1)
        bias = rel_pos_table[idx].reshape(N, N, num_heads)
        bias = bias.transpose(2, 0, 1).astype(jnp.float32)
    else:
        bias = jnp.zeros((num_heads, N, N), jnp.float32)
    if external_bias is not None:
        bias = bias + external_bias.reshape(-1, N, N).astype(jnp.float32)
    if Np != N:
        bias = jnp.pad(bias, ((0, 0), (0, Np - N), (0, 0)))
        bias = jnp.pad(bias, ((0, 0), (0, 0), (0, Np - N)),
                       constant_values=_NEG_INF)
    return bias.astype(jnp.bfloat16)   # -1e30 representable in bf16


# --------------------------------------------------------------------------------------
# Full Attention forward (Pallas-backed)
# --------------------------------------------------------------------------------------
def attention_forward(x, params, *, num_heads, rel_pos_bias=None, bias_hnn=None,
                      exp_dtype=jnp.bfloat16):
    B, N, C = x.shape
    all_head_dim = params["w_qkv"].shape[0] // 3
    head_dim = all_head_dim // num_heads
    scale = head_dim ** (-0.5)
    Np = _round_up(N, 128)   # lane-dense token axis / aligned BlockSpecs

    # per-layer constant; pass precomputed bias_hnn to avoid rebuilding each call
    if bias_hnn is None:
        bias_hnn = precompute_rel_pos_bias(params.get("rel_pos_table"),
                                           params.get("rel_pos_index"),
                                           num_heads, N, Np, rel_pos_bias)

    # fold 1/sqrt(head_dim) into the q columns of the qkv projection and q_bias
    w_qkv_t = params["w_qkv"].T
    w_qkv_t = w_qkv_t.at[:, :all_head_dim].multiply(scale)
    qkv_bias = jnp.concatenate([
        params["q_bias"] * scale,
        jnp.zeros_like(params["v_bias"]),
        params["v_bias"],
    ])

    if Np != N:
        x = jnp.pad(x, ((0, 0), (0, Np - N), (0, 0)))

    # qkv projection (tiled Pallas matmul; bf16 output feeds attention directly)
    qkv = pallas_linear(x.reshape(B * Np, C), w_qkv_t, qkv_bias,
                        out_dtype=jnp.bfloat16)
    qkv = qkv.reshape(B, Np, 3, num_heads, head_dim).transpose(2, 0, 3, 1, 4)
    q, k, v = qkv[0], qkv[1], qkv[2]          # (B, H, Np, hd) bf16 each

    # flash-style attention, heads + q-tiles on the grid, per-tile bf16 bias slabs
    attn = pallas_flash_attention(q, k, v, bias_hnn, exp_dtype=exp_dtype)
    attn = attn.transpose(0, 2, 1, 3).reshape(B * Np, all_head_dim)

    # output projection (tiled Pallas matmul)
    out = pallas_linear(attn, params["w_proj"].T, params["b_proj"],
                        out_dtype=jnp.float32)
    out = out.reshape(B, Np, C)[:, :N, :]
    # attn_drop / proj_drop are identity (p=0 / eval mode)
    return out


# Pure-JAX reference for verification
def attention_reference(x, params, *, num_heads, rel_pos_bias=None):
    B, N, C = x.shape
    all_head_dim = params["w_qkv"].shape[0] // 3
    head_dim = all_head_dim // num_heads
    scale = head_dim ** (-0.5)
    qkv_bias = jnp.concatenate(
        [params["q_bias"], jnp.zeros_like(params["v_bias"]), params["v_bias"]]
    )
    qkv = x.reshape(B * N, C) @ params["w_qkv"].T + qkv_bias
    qkv = qkv.reshape(B, N, 3, num_heads, head_dim).transpose(2, 0, 3, 1, 4)
    q, k, v = qkv[0] * scale, qkv[1], qkv[2]
    attn = jnp.einsum("bhqd,bhkd->bhqk", q, k)
    rel = params["rel_pos_table"][params["rel_pos_index"].reshape(-1)]
    rel = rel.reshape(N, N, num_heads).transpose(2, 0, 1)
    attn = attn + rel[None]
    if rel_pos_bias is not None:
        attn = attn + rel_pos_bias
    attn = jax.nn.softmax(attn, axis=-1)
    out = jnp.einsum("bhqk,bhkd->bhqd", attn, v)
    out = out.transpose(0, 2, 1, 3).reshape(B, N, all_head_dim)
    return out @ params["w_proj"].T + params["b_proj"]


# --------------------------------------------------------------------------------------
if __name__ == "__main__":
    # Small shapes consistent with the module: window 4x4 -> N = 17 tokens (incl. cls).
    B = 2
    dim = 128
    num_heads = 4
    window_size = (4, 4)
    N = window_size[0] * window_size[1] + 1
    head_dim = dim // num_heads
    all_head_dim = head_dim * num_heads

    index_np, num_rel_dist = build_relative_position_index(window_size)

    key = jax.random.PRNGKey(0)
    ks = jax.random.split(key, 7)
    params = {
        "w_qkv": 0.02 * jax.random.normal(ks[0], (3 * all_head_dim, dim), jnp.float32),
        "q_bias": 0.02 * jax.random.normal(ks[1], (all_head_dim,), jnp.float32),
        "v_bias": 0.02 * jax.random.normal(ks[2], (all_head_dim,), jnp.float32),
        "rel_pos_table": 0.02 * jax.random.normal(ks[3], (num_rel_dist, num_heads), jnp.float32),
        "rel_pos_index": jnp.asarray(index_np, dtype=jnp.int32),
        "w_proj": 0.02 * jax.random.normal(ks[4], (dim, all_head_dim), jnp.float32),
        "b_proj": 0.02 * jax.random.normal(ks[5], (dim,), jnp.float32),
    }

    x = jax.random.normal(ks[6], (B, N, dim), jnp.float32)

    # per-layer constant bias, built once (not per forward call)
    bias_hnn = precompute_rel_pos_bias(params["rel_pos_table"], params["rel_pos_index"],
                                       num_heads, N, _round_up(N, 128))

    fwd = jax.jit(partial(attention_forward, num_heads=num_heads))
    out = jax.block_until_ready(fwd(x, params, bias_hnn=bias_hnn))

    ref = attention_reference(x, params, num_heads=num_heads)
    assert out.shape == (B, N, dim), out.shape
    # bf16 MXU operands + bf16 exp + approx reciprocal -> loose-but-tight-enough tol
    np.testing.assert_allclose(np.asarray(out), np.asarray(ref), atol=2e-2, rtol=2e-2)

    print("KERNEL_OK")
</pallas_src>

<mosaic_0001>
module attributes {stable_mosaic.version = 11 : i64} {
  func.func @_linear_kernel(%arg0: i32, %arg1: i32, %arg2: i32, %arg3: memref<256x128xbf16, #tpu.memory_space<vmem>>, %arg4: memref<128x128xbf16, #tpu.memory_space<vmem>>, %arg5: memref<1x128xf32, #tpu.memory_space<vmem>>, %arg6: memref<256x128xbf16, #tpu.memory_space<vmem>>, %arg7: memref<256x128xf32, #tpu.memory_space<vmem>>) attributes {dimension_semantics = [#tpu.dimension_semantics<parallel>, #tpu.dimension_semantics<parallel>, #tpu.dimension_semantics<arbitrary>], iteration_bounds = array<i64: 1, 3, 1>, scalar_prefetch = 0 : i64, scratch_operands = 1 : i64, tpu.core_type = #tpu.core_type<tc>, window_params = [{transform_indices = @transform_0, window_bounds = array<i64: 256, 128>}, {transform_indices = @transform_1, window_bounds = array<i64: 128, 128>}, {transform_indices = @transform_2, window_bounds = array<i64: 1, 128>}, {transform_indices = @transform_3, window_bounds = array<i64: 256, 128>}]} {
    %c0_i32 = arith.constant 0 : i32
    %0 = arith.cmpi eq, %arg2, %c0_i32 : i32
    %1 = arith.extui %0 : i1 to i32
    %c0_i32_0 = arith.constant 0 : i32
    %2 = arith.cmpi ne, %1, %c0_i32_0 : i32
    scf.if %2 {
      %cst_10 = arith.constant 0.000000e+00 : f32
      %12 = vector.broadcast %cst_10 : f32 to vector<256x128xf32>
      %c0_11 = arith.constant 0 : index
      %c0_12 = arith.constant 0 : index
      %13 = vector.load %arg7[%c0_11, %c0_12] : memref<256x128xf32, #tpu.memory_space<vmem>>, vector<256x128xf32>
      tpu.vector_store %arg7[%c0_11, %c0_12], %12 {strides = array<i32>} : memref<256x128xf32, #tpu.memory_space<vmem>>, vector<256x128xf32>,
    } else {
    }
    %c0 = arith.constant 0 : index
    %c0_1 = arith.constant 0 : index
    %3 = vector.load %arg7[%c0, %c0_1] : memref<256x128xf32, #tpu.memory_space<vmem>>, vector<256x128xf32>
    %c0_2 = arith.constant 0 : index
    %c0_3 = arith.constant 0 : index
    %4 = vector.load %arg3[%c0_2, %c0_3] : memref<256x128xbf16, #tpu.memory_space<vmem>>, vector<256x128xbf16>
    %c0_4 = arith.constant 0 : index
    %c0_5 = arith.constant 0 : index
    %5 = vector.load %arg4[%c0_4, %c0_5] : memref<128x128xbf16, #tpu.memory_space<vmem>>, vector<128x128xbf16>
    %cst = arith.constant dense<0.000000e+00> : vector<256x128xf32>
    %6 = tpu.matmul %4, %5, %cst {dimension_numbers = #tpu.dot_dimension_numbers<[1], [0], [0], [1], [0, 0, 1, 1], [], []>} : vector<256x128xbf16>, vector<128x128xbf16>, vector<256x128xf32> -> vector<256x128xf32>
    %7 = arith.addf %3, %6 : vector<256x128xf32>
    %c0_6 = arith.constant 0 : index
    %c0_7 = arith.constant 0 : index
    %8 = vector.load %arg7[%c0_6, %c0_7] : memref<256x128xf32, #tpu.memory_space<vmem>>, vector<256x128xf32>
    tpu.vector_store %arg7[%c0_6, %c0_7], %7 {strides = array<i32>} : memref<256x128xf32, #tpu.memory_space<vmem>>, vector<256x128xf32>,
    %c0_i32_8 = arith.constant 0 : i32
    %9 = arith.cmpi eq, %arg2, %c0_i32_8 : i32
    %10 = arith.extui %9 : i1 to i32
    %c0_i32_9 = arith.constant 0 : i32
    %11 = arith.cmpi ne, %10, %c0_i32_9 : i32
    scf.if %11 {
      %c0_10 = arith.constant 0 : index
      %c0_11 = arith.constant 0 : index
      %12 = vector.load %arg7[%c0_10, %c0_11] : memref<256x128xf32, #tpu.memory_space<vmem>>, vector<256x128xf32>
      %c0_12 = arith.constant 0 : index
      %c0_13 = arith.constant 0 : index
      %13 = vector.load %arg5[%c0_12, %c0_13] : memref<1x128xf32, #tpu.memory_space<vmem>>, vector<1x128xf32>
      %14 = vector.broadcast %13 : vector<1x128xf32> to vector<256x128xf32>
      %15 = arith.addf %12, %14 : vector<256x128xf32>
      %16 = arith.truncf %15 : vector<256x128xf32> to vector<256x128xbf16>
      %c0_14 = arith.constant 0 : index
      %c0_15 = arith.constant 0 : index
      %17 = vector.load %arg6[%c0_14, %c0_15] : memref<256x128xbf16, #tpu.memory_space<vmem>>, vector<256x128xbf16>
      tpu.vector_store %arg6[%c0_14, %c0_15], %16 {strides = array<i32>} : memref<256x128xbf16, #tpu.memory_space<vmem>>, vector<256x128xbf16>,
    } else {
    }
    return
  }
  func.func @transform_0(%arg0: i32, %arg1: i32, %arg2: i32) -> (i32, i32) {
    %c0_i32 = arith.constant 0 : i32
    return %arg0, %arg2 : i32, i32
  }
  func.func @transform_1(%arg0: i32, %arg1: i32, %arg2: i32) -> (i32, i32) {
    %c0_i32 = arith.constant 0 : i32
    return %arg2, %arg1 : i32, i32
  }
  func.func @transform_2(%arg0: i32, %arg1: i32, %arg2: i32) -> (i32, i32) {
    %c0_i32 = arith.constant 0 : i32
    %c0_i32_0 = arith.constant 0 : i32
    return %c0_i32, %arg1 : i32, i32
  }
  func.func @transform_3(%arg0: i32, %arg1: i32, %arg2: i32) -> (i32, i32) {
    %c0_i32 = arith.constant 0 : i32
    return %arg0, %arg1 : i32, i32
  }
}

module attributes {stable_mosaic.version = 11 : i64} {
  func.func @_flash_attn_kernel(%arg0: i32, %arg1: i32, %arg2: i32, %arg3: i32, %arg4: memref<1x1x128x32xbf16, #tpu.memory_space<vmem>>, %arg5: memref<1x1x128x32xbf16, #tpu.memory_space<vmem>>, %arg6: memref<1x1x128x32xbf16, #tpu.memory_space<vmem>>, %arg7: memref<1x128x128xbf16, #tpu.memory_space<vmem>>, %arg8: memref<1x1x128x32xbf16, #tpu.memory_space<vmem>>, %arg9: memref<128x1xf32, #tpu.memory_space<vmem>>, %arg10: memref<128x1xf32, #tpu.memory_space<vmem>>, %arg11: memref<128x32xf32, #tpu.memory_space<vmem>>) attributes {dimension_semantics = [#tpu.dimension_semantics<parallel>, #tpu.dimension_semantics<parallel>, #tpu.dimension_semantics<parallel>, #tpu.dimension_semantics<arbitrary>], iteration_bounds = array<i64: 2, 4, 1, 1>, scalar_prefetch = 0 : i64, scratch_operands = 3 : i64, tpu.core_type = #tpu.core_type<tc>, window_params = [{transform_indices = @transform_0, window_bounds = array<i64: 1, 1, 128, 32>}, {transform_indices = @transform_1, window_bounds = array<i64: 1, 1, 128, 32>}, {transform_indices = @transform_2, window_bounds = array<i64: 1, 1, 128, 32>}, {transform_indices = @transform_3, window_bounds = array<i64: 1, 128, 128>}, {transform_indices = @transform_4, window_bounds = array<i64: 1, 1, 128, 32>}]} {
    %c0_i32 = arith.constant 0 : i32
    %0 = arith.cmpi eq, %arg3, %c0_i32 : i32
    %1 = arith.extui %0 : i1 to i32
    %c0_i32_0 = arith.constant 0 : i32
    %2 = arith.cmpi ne, %1, %c0_i32_0 : i32
    scf.if %2 {
      %cst_34 = arith.constant 0xFF800000 : f32
      %42 = vector.broadcast %cst_34 : f32 to vector<128x1xf32>
      %c0_35 = arith.constant 0 : index
      %c0_36 = arith.constant 0 : index
      %43 = vector.load %arg9[%c0_35, %c0_36] : memref<128x1xf32, #tpu.memory_space<vmem>>, vector<128x1xf32>
      tpu.vector_store %arg9[%c0_35, %c0_36], %42 {strides = array<i32>} : memref<128x1xf32, #tpu.memory_space<vmem>>, vector<128x1xf32>,
      %cst_37 = arith.constant 0.000000e+00 : f32
      %44 = vector.broadcast %cst_37 : f32 to vector<128x1xf32>
      %c0_38 = arith.constant 0 : index
      %c0_39 = arith.constant 0 : index
      %45 = vector.load %arg10[%c0_38, %c0_39] : memref<128x1xf32, #tpu.memory_space<vmem>>, vector<128x1xf32>
      tpu.vector_store %arg10[%c0_38, %c0_39], %44 {strides = array<i32>} : memref<128x1xf32, #tpu.memory_space<vmem>>, vector<128x1xf32>,
      %cst_40 = arith.constant 0.000000e+00 : f32
      %46 = vector.broadcast %cst_40 : f32 to vector<128x32xf32>
      %c0_41 = arith.constant 0 : index
      %c0_42 = arith.constant 0 : index
      %47 = vector.load %arg11[%c0_41, %c0_42] : memref<128x32xf32, #tpu.memory_space<vmem>>, vector<128x32xf32>
      tpu.vector_store %arg11[%c0_41, %c0_42], %46 {strides = array<i32>} : memref<128x32xf32, #tpu.memory_space<vmem>>, vector<128x32xf32>,
    } else {
    }
    %c0 = arith.constant 0 : index
    %c0_1 = arith.constant 0 : index
    %c0_2 = arith.constant 0 : index
    %c0_3 = arith.constant 0 : index
    %3 = vector.load %arg4[%c0, %c0_1, %c0_2, %c0_3] : memref<1x1x128x32xbf16, #tpu.memory_space<vmem>>, vector<1x1x128x32xbf16>
    %4 = vector.shape_cast %3 : vector<1x1x128x32xbf16> to vector<128x32xbf16>
    %c0_4 = arith.constant 0 : index
    %c0_5 = arith.constant 0 : index
    %c0_6 = arith.constant 0 : index
    %c0_7 = arith.constant 0 : index
    %5 = vector.load %arg5[%c0_4, %c0_5, %c0_6, %c0_7] : memref<1x1x128x32xbf16, #tpu.memory_space<vmem>>, vector<1x1x128x32xbf16>
    %6 = vector.shape_cast %5 : vector<1x1x128x32xbf16> to vector<128x32xbf16>
    %c0_8 = arith.constant 0 : index
    %c0_9 = arith.constant 0 : index
    %c0_10 = arith.constant 0 : index
    %c0_11 = arith.constant 0 : index
    %7 = vector.load %arg6[%c0_8, %c0_9, %c0_10, %c0_11] : memref<1x1x128x32xbf16, #tpu.memory_space<vmem>>, vector<1x1x128x32xbf16>
    %8 = vector.shape_cast %7 : vector<1x1x128x32xbf16> to vector<128x32xbf16>
    %cst = arith.constant dense<0.000000e+00> : vector<128x128xf32>
    %9 = tpu.matmul %4, %6, %cst {dimension_numbers = #tpu.dot_dimension_numbers<[1], [1], [0], [0], [0, 0, 1, 0], [], []>} : vector<128x32xbf16>, vector<128x32xbf16>, vector<128x128xf32> -> vector<128x128xf32>
    %c0_12 = arith.constant 0 : index
    %c0_13 = arith.constant 0 : index
    %c0_14 = arith.constant 0 : index
    %10 = vector.load %arg7[%c0_12, %c0_13, %c0_14] : memref<1x128x128xbf16, #tpu.memory_space<vmem>>, vector<1x128x128xbf16>
    %11 = vector.shape_cast %10 : vector<1x128x128xbf16> to vector<128x128xbf16>
    %12 = arith.extf %11 : vector<128x128xbf16> to vector<128x128xf32>
    %13 = arith.addf %9, %12 : vector<128x128xf32>
    %c0_15 = arith.constant 0 : index
    %c0_16 = arith.constant 0 : index
    %14 = vector.load %arg9[%c0_15, %c0_16] : memref<128x1xf32, #tpu.memory_space<vmem>>, vector<128x1xf32>
    %cst_17 = arith.constant dense<0xFF800000> : vector<128xf32>
    %15 = vector.multi_reduction <maximumf>, %13, %cst_17 [1] : vector<128x128xf32> to vector<128xf32>
    %16 = vector.shape_cast %15 : vector<128xf32> to vector<128x1xf32>
    %17 = arith.maximumf %14, %16 : vector<128x1xf32>
    %c0_18 = arith.constant 0 : index
    %c0_19 = arith.constant 0 : index
    %18 = vector.load %arg9[%c0_18, %c0_19] : memref<128x1xf32, #tpu.memory_space<vmem>>, vector<128x1xf32>
    %19 = arith.subf %18, %17 : vector<128x1xf32>
    %20 = math.exp %19 : vector<128x1xf32>
    %21 = vector.broadcast %17 : vector<128x1xf32> to vector<128x128xf32>
    %22 = arith.subf %13, %21 : vector<128x128xf32>
    %23 = arith.truncf %22 : vector<128x128xf32> to vector<128x128xbf16>
    %24 = math.exp %23 : vector<128x128xbf16>
    %c0_20 = arith.constant 0 : index
    %c0_21 = arith.constant 0 : index
    %25 = vector.load %arg10[%c0_20, %c0_21] : memref<128x1xf32, #tpu.memory_space<vmem>>, vector<128x1xf32>
    %26 = arith.mulf %20, %25 : vector<128x1xf32>
    %27 = arith.extf %24 : vector<128x128xbf16> to vector<128x128xf32>
    %cst_22 = arith.constant dense<0.000000e+00> : vector<128xf32>
    %28 = vector.multi_reduction <add>, %27, %cst_22 [1] : vector<128x128xf32> to vector<128xf32>
    %29 = vector.shape_cast %28 : vector<128xf32> to vector<128x1xf32>
    %30 = arith.addf %26, %29 : vector<128x1xf32>
    %c0_23 = arith.constant 0 : index
    %c0_24 = arith.constant 0 : index
    %31 = vector.load %arg10[%c0_23, %c0_24] : memref<128x1xf32, #tpu.memory_space<vmem>>, vector<128x1xf32>
    tpu.vector_store %arg10[%c0_23, %c0_24], %30 {strides = array<i32>} : memref<128x1xf32, #tpu.memory_space<vmem>>, vector<128x1xf32>,
    %c0_25 = arith.constant 0 : index
    %c0_26 = arith.constant 0 : index
    %32 = vector.load %arg11[%c0_25, %c0_26] : memref<128x32xf32, #tpu.memory_space<vmem>>, vector<128x32xf32>
    %33 = vector.broadcast %20 : vector<128x1xf32> to vector<128x32xf32>
    %34 = arith.mulf %33, %32 : vector<128x32xf32>
    %cst_27 = arith.constant dense<0.000000e+00> : vector<128x32xf32>
    %35 = tpu.matmul %24, %8, %cst_27 {dimension_numbers = #tpu.dot_dimension_numbers<[1], [0], [0], [1], [0, 0, 1, 1], [], []>} : vector<128x128xbf16>, vector<128x32xbf16>, vector<128x32xf32> -> vector<128x32xf32>
    %36 = arith.addf %34, %35 : vector<128x32xf32>
    %c0_28 = arith.constant 0 : index
    %c0_29 = arith.constant 0 : index
    %37 = vector.load %arg11[%c0_28, %c0_29] : memref<128x32xf32, #tpu.memory_space<vmem>>, vector<128x32xf32>
    tpu.vector_store %arg11[%c0_28, %c0_29], %36 {strides = array<i32>} : memref<128x32xf32, #tpu.memory_space<vmem>>, vector<128x32xf32>,
    %c0_30 = arith.constant 0 : index
    %c0_31 = arith.constant 0 : index
    %38 = vector.load %arg9[%c0_30, %c0_31] : memref<128x1xf32, #tpu.memory_space<vmem>>, vector<128x1xf32>
    tpu.vector_store %arg9[%c0_30, %c0_31], %17 {strides = array<i32>} : memref<128x1xf32, #tpu.memory_space<vmem>>, vector<128x1xf32>,
    %c0_i32_32 = arith.constant 0 : i32
    %39 = arith.cmpi eq, %arg3, %c0_i32_32 : i32
    %40 = arith.extui %39 : i1 to i32
    %c0_i32_33 = arith.constant 0 : i32
    %41 = arith.cmpi ne, %40, %c0_i32_33 : i32
    scf.if %41 {
      %c0_34 = arith.constant 0 : index
      %c0_35 = arith.constant 0 : index
      %42 = vector.load %arg11[%c0_34, %c0_35] : memref<128x32xf32, #tpu.memory_space<vmem>>, vector<128x32xf32>
      %c0_36 = arith.constant 0 : index
      %c0_37 = arith.constant 0 : index
      %43 = vector.load %arg10[%c0_36, %c0_37] : memref<128x1xf32, #tpu.memory_space<vmem>>, vector<128x1xf32>
      %44 = tpu.reciprocal %43 {approx = true} : vector<128x1xf32> -> vector<128x1xf32>
      %45 = vector.broadcast %44 : vector<128x1xf32> to vector<128x32xf32>
      %46 = arith.mulf %42, %45 : vector<128x32xf32>
      %47 = arith.truncf %46 : vector<128x32xf32> to vector<128x32xbf16>
      %c0_38 = arith.constant 0 : index
      %c0_39 = arith.constant 0 : index
      %c0_40 = arith.constant 0 : index
      %c0_41 = arith.constant 0 : index
      %48 = vector.load %arg8[%c0_38, %c0_39, %c0_40, %c0_41] : memref<1x1x128x32xbf16, #tpu.memory_space<vmem>>, vector<1x1x128x32xbf16>
      %49 = vector.shape_cast %48 : vector<1x1x128x32xbf16> to vector<128x32xbf16>
      %50 = vector.shape_cast %47 : vector<128x32xbf16> to vector<1x1x128x32xbf16>
      tpu.vector_store %arg8[%c0_38, %c0_39, %c0_40, %c0_41], %50 {strides = array<i32>} : memref<1x1x128x32xbf16, #tpu.memory_space<vmem>>, vector<1x1x128x32xbf16>,
    } else {
    }
    return
  }
  func.func @transform_0(%arg0: i32, %arg1: i32, %arg2: i32, %arg3: i32) -> (i32, i32, i32, i32) {
    %c0_i32 = arith.constant 0 : i32
    %c0_i32_0 = arith.constant 0 : i32
    return %arg0, %arg1, %arg2, %c0_i32 : i32, i32, i32, i32
  }
  func.func @transform_1(%arg0: i32, %arg1: i32, %arg2: i32, %arg3: i32) -> (i32, i32, i32, i32) {
    %c0_i32 = arith.constant 0 : i32
    %c0_i32_0 = arith.constant 0 : i32
    return %arg0, %arg1, %arg3, %c0_i32 : i32, i32, i32, i32
  }
  func.func @transform_2(%arg0: i32, %arg1: i32, %arg2: i32, %arg3: i32) -> (i32, i32, i32, i32) {
    %c0_i32 = arith.constant 0 : i32
    %c0_i32_0 = arith.constant 0 : i32
    return %arg0, %arg1, %arg3, %c0_i32 : i32, i32, i32, i32
  }
  func.func @transform_3(%arg0: i32, %arg1: i32, %arg2: i32, %arg3: i32) -> (i32, i32, i32) {
    %c0_i32 = arith.constant 0 : i32
    return %arg1, %arg2, %arg3 : i32, i32, i32
  }
  func.func @transform_4(%arg0: i32, %arg1: i32, %arg2: i32, %arg3: i32) -> (i32, i32, i32, i32) {
    %c0_i32 = arith.constant 0 : i32
    %c0_i32_0 = arith.constant 0 : i32
    return %arg0, %arg1, %arg2, %c0_i32 : i32, i32, i32, i32
  }
}

module attributes {stable_mosaic.version = 11 : i64} {
  func.func @_linear_kernel(%arg0: i32, %arg1: i32, %arg2: i32, %arg3: memref<256x128xbf16, #tpu.memory_space<vmem>>, %arg4: memref<128x128xbf16, #tpu.memory_space<vmem>>, %arg5: memref<1x128xf32, #tpu.memory_space<vmem>>, %arg6: memref<256x128xf32, #tpu.memory_space<vmem>>, %arg7: memref<256x128xf32, #tpu.memory_space<vmem>>) attributes {dimension_semantics = [#tpu.dimension_semantics<parallel>, #tpu.dimension_semantics<parallel>, #tpu.dimension_semantics<arbitrary>], iteration_bounds = array<i64: 1, 1, 1>, scalar_prefetch = 0 : i64, scratch_operands = 1 : i64, tpu.core_type = #tpu.core_type<tc>, window_params = [{transform_indices = @transform_0, window_bounds = array<i64: 256, 128>}, {transform_indices = @transform_1, window_bounds = array<i64: 128, 128>}, {transform_indices = @transform_2, window_bounds = array<i64: 1, 128>}, {transform_indices = @transform_3, window_bounds = array<i64: 256, 128>}]} {
    %c0_i32 = arith.constant 0 : i32
    %0 = arith.cmpi eq, %arg2, %c0_i32 : i32
    %1 = arith.extui %0 : i1 to i32
    %c0_i32_0 = arith.constant 0 : i32
    %2 = arith.cmpi ne, %1, %c0_i32_0 : i32
    scf.if %2 {
      %cst_10 = arith.constant 0.000000e+00 : f32
      %12 = vector.broadcast %cst_10 : f32 to vector<256x128xf32>
      %c0_11 = arith.constant 0 : index
      %c0_12 = arith.constant 0 : index
      %13 = vector.load %arg7[%c0_11, %c0_12] : memref<256x128xf32, #tpu.memory_space<vmem>>, vector<256x128xf32>
      tpu.vector_store %arg7[%c0_11, %c0_12], %12 {strides = array<i32>} : memref<256x128xf32, #tpu.memory_space<vmem>>, vector<256x128xf32>,
    } else {
    }
    %c0 = arith.constant 0 : index
    %c0_1 = arith.constant 0 : index
    %3 = vector.load %arg7[%c0, %c0_1] : memref<256x128xf32, #tpu.memory_space<vmem>>, vector<256x128xf32>
    %c0_2 = arith.constant 0 : index
    %c0_3 = arith.constant 0 : index
    %4 = vector.load %arg3[%c0_2, %c0_3] : memref<256x128xbf16, #tpu.memory_space<vmem>>, vector<256x128xbf16>
    %c0_4 = arith.constant 0 : index
    %c0_5 = arith.constant 0 : index
    %5 = vector.load %arg4[%c0_4, %c0_5] : memref<128x128xbf16, #tpu.memory_space<vmem>>, vector<128x128xbf16>
    %cst = arith.constant dense<0.000000e+00> : vector<256x128xf32>
    %6 = tpu.matmul %4, %5, %cst {dimension_numbers = #tpu.dot_dimension_numbers<[1], [0], [0], [1], [0, 0, 1, 1], [], []>} : vector<256x128xbf16>, vector<128x128xbf16>, vector<256x128xf32> -> vector<256x128xf32>
    %7 = arith.addf %3, %6 : vector<256x128xf32>
    %c0_6 = arith.constant 0 : index
    %c0_7 = arith.constant 0 : index
    %8 = vector.load %arg7[%c0_6, %c0_7] : memref<256x128xf32, #tpu.memory_space<vmem>>, vector<256x128xf32>
    tpu.vector_store %arg7[%c0_6, %c0_7], %7 {strides = array<i32>} : memref<256x128xf32, #tpu.memory_space<vmem>>, vector<256x128xf32>,
    %c0_i32_8 = arith.constant 0 : i32
    %9 = arith.cmpi eq, %arg2, %c0_i32_8 : i32
    %10 = arith.extui %9 : i1 to i32
    %c0_i32_9 = arith.constant 0 : i32
    %11 = arith.cmpi ne, %10, %c0_i32_9 : i32
    scf.if %11 {
      %c0_10 = arith.constant 0 : index
      %c0_11 = arith.constant 0 : index
      %12 = vector.load %arg7[%c0_10, %c0_11] : memref<256x128xf32, #tpu.memory_space<vmem>>, vector<256x128xf32>
      %c0_12 = arith.constant 0 : index
      %c0_13 = arith.constant 0 : index
      %13 = vector.load %arg5[%c0_12, %c0_13] : memref<1x128xf32, #tpu.memory_space<vmem>>, vector<1x128xf32>
      %14 = vector.broadcast %13 : vector<1x128xf32> to vector<256x128xf32>
      %15 = arith.addf %12, %14 : vector<256x128xf32>
      %c0_14 = arith.constant 0 : index
      %c0_15 = arith.constant 0 : index
      %16 = vector.load %arg6[%c0_14, %c0_15] : memref<256x128xf32, #tpu.memory_space<vmem>>, vector<256x128xf32>
      tpu.vector_store %arg6[%c0_14, %c0_15], %15 {strides = array<i32>} : memref<256x128xf32, #tpu.memory_space<vmem>>, vector<256x128xf32>,
    } else {
    }
    return
  }
  func.func @transform_0(%arg0: i32, %arg1: i32, %arg2: i32) -> (i32, i32) {
    %c0_i32 = arith.constant 0 : i32
    return %arg0, %arg2 : i32, i32
  }
  func.func @transform_1(%arg0: i32, %arg1: i32, %arg2: i32) -> (i32, i32) {
    %c0_i32 = arith.constant 0 : i32
    return %arg2, %arg1 : i32, i32
  }
  func.func @transform_2(%arg0: i32, %arg1: i32, %arg2: i32) -> (i32, i32) {
    %c0_i32 = arith.constant 0 : i32
    %c0_i32_0 = arith.constant 0 : i32
    return %c0_i32, %arg1 : i32, i32
  }
  func.func @transform_3(%arg0: i32, %arg1: i32, %arg2: i32) -> (i32, i32) {
    %c0_i32 = arith.constant 0 : i32
    return %arg0, %arg1 : i32, i32
  }
}

</mosaic_0001>

<llo_original>
// kernel: attention_forward.3
$region0: #{attention_forward.3}
  #allocation0 [shape = 'u32[]', space=smem, size = 0x4, offset = 0x4, fixed_abs, tag = 'smem constant byte address 0x4 - core index']
  #allocation1 [shape = 'u32[72,128]{1,0:T(1,128)}', space=vmem, size = 0x9000, scoped, tag = 'internal scratch']
  #allocation2 [shape = 'f32[256,128]{1,0:T(8,128)}', space=vmem, size = 0x20000, scoped, tag = 'scratch operand']
  %s0 = inlined_call_operand.vmem [shape: bf16[256,128], index: 0, kind: input, shape index: {}]
  %s1 = inlined_call_operand.vmem [shape: bf16[128,384], index: 1, kind: input, shape index: {}]
  %s2 = inlined_call_operand.vmem [shape: f32[1,384], index: 2, kind: input, shape index: {}]
  %s3 = inlined_call_operand.vmem [shape: bf16[256,384], index: 3, kind: output, shape index: {}]
  %s4 = sld [smem:[#allocation0]]
  $region131: #{attention_forward.3} parent=0
    _
  %s6 = ssub.s32 1, %s4
  %s7 = scalar_select 0, %s6, %s4
  $region1: #{attention_forward.3} parent=0
    #allocation3 [shape = 'u8[65536]{0}', space=vmem, size = 0x10000, scoped, tag = 'input window, operand 1']
    #allocation4 [shape = 'u8[131072]{0}', space=vmem, size = 0x20000, scoped, tag = 'output window, operand 0']
    loop: start=0, step=1, limit=5
    $region2: #{attention_forward.3} parent=1 // loop_pre_header
      _
    $region3: #{attention_forward.3} parent=1 // loop_header
      %s9 = sphi 0, %s13
      %p10 = scmp.ge.s32.totalorder %s9, 5
      %s16 = sphi 0, %s35
      %s17 = sphi 0, %s31
      %s18 = sphi 0, %s27
      %s19 = sphi 0, %s16
      %s20 = sphi 0, %s17
      %s21 = sphi 0, %s18
      %s22 = sphi 0, %s19
      %s23 = sphi 0, %s20
      %s24 = sphi 0, %s21
      %s40 = sphi 0, %s42
      %s43 = sphi 0, %s40
      %s44 = sphi 0, %s43
      %s60 = sphi 0, %s44
      %s68 = sphi 0, %s70
      %s71 = sphi 0, %s68
      %s72 = sphi 0, %s71
      %s88 = sphi 0, %s72
      %s94 = sphi 0, %s96
      %s97 = sphi 0, %s94
      %s98 = sphi 0, %s97
      %s114 = sphi 0, %s98
      %s122 = sphi 0, %s124
      %s125 = sphi 0, %s122
      %s126 = sphi 0, %s125
      %s142 = sphi 0, %s126
    $region4: #{attention_forward.3} parent=1 // loop_header_branch
      %12 = sbr.rel (%p10) target = $region8
    $region5: #{attention_forward.3} parent=1 // loop_body
      %s14 = ssub.s32 %s9, 1
      %s15 = ssub.s32 %s9, 2
      %s25 = sadd.s32 1, %s18
      %p26 = scmp.ge.s32.totalorder %s25, 1
      %s27 = scalar_select %p26, 0, %s25
      %s28 = sadd.s32 1, %s17
      %s29 = scalar_select %p26, %s28, %s17
      %p30 = scmp.ge.s32.totalorder %s29, 3
      %s31 = scalar_select %p30, 0, %s29
      %s32 = sadd.s32 1, %s16
      %s33 = scalar_select %p30, %s32, %s16
      %p34 = scmp.ge.s32.totalorder %s33, 1
      %s35 = scalar_select %p34, 0, %s33
      %s36 = ssub.s32 %s16, %s35
      %s37 = ssub.s32 %s18, %s27
      %s38 = sor.u32 %s36, %s37
      %p39 = scmp.eq.s32.totalorder %s38, 0
      %s41 = sadd.s32 %s40, 1
      %s42 = scalar_select %p39, %s40, %s41
      %p45 = pneg %p39
      %p46 = scmp.eq.s32.totalorder %s9, 2
      %p47 = por %p45, %p46
      %p48 = scmp.ne.s32.totalorder %s40, %s43
      %p49 = scmp.eq.s32.totalorder %s9, 0
      %p50 = por %p48, %p49
      %p51 = scmp.ne.s32.totalorder %s40, %s43
      %p52 = scmp.eq.s32.totalorder %s14, 2
      %p53 = por %p51, %p52
      %p54 = scmp.ne.s32.totalorder %s43, %s44
      %p55 = scmp.eq.s32.totalorder %s14, 0
      %p56 = por %p54, %p55
      %p57 = scmp.ne.s32.totalorder %s43, %s44
      %p58 = scmp.eq.s32.totalorder %s15, 2
      %p59 = por %p57, %p58
      %p61 = scmp.ne.s32.totalorder %s44, %s60
      %p62 = scmp.eq.s32.totalorder %s15, 0
      %p63 = por %p61, %p62
      %s64 = ssub.s32 %s18, %s27
      %s65 = ssub.s32 %s17, %s31
      %s66 = sor.u32 %s64, %s65
      %p67 = scmp.eq.s32.totalorder %s66, 0
      %s69 = sadd.s32 %s68, 1
      %s70 = scalar_select %p67, %s68, %s69
      %p73 = pneg %p67
      %p74 = scmp.eq.s32.totalorder %s9, 2
      %p75 = por %p73, %p74
      %p76 = scmp.ne.s32.totalorder %s68, %s71
      %p77 = scmp.eq.s32.totalorder %s9, 0
      %p78 = por %p76, %p77
      %p79 = scmp.ne.s32.totalorder %s68, %s71
      %p80 = scmp.eq.s32.totalorder %s14, 2
      %p81 = por %p79, %p80
      %p82 = scmp.ne.s32.totalorder %s71, %s72
      %p83 = scmp.eq.s32.totalorder %s14, 0
      %p84 = por %p82, %p83
      %p85 = scmp.ne.s32.totalorder %s71, %s72
      %p86 = scmp.eq.s32.totalorder %s15, 2
      %p87 = por %p85, %p86
      %p89 = scmp.ne.s32.totalorder %s72, %s88
      %p90 = scmp.eq.s32.totalorder %s15, 0
      %p91 = por %p89, %p90
      %s92 = ssub.s32 %s17, %s31
      %p93 = scmp.eq.s32.totalorder %s92, 0
      %s95 = sadd.s32 %s94, 1
      %s96 = scalar_select %p93, %s94, %s95
      %p99 = pneg %p93
      %p100 = scmp.eq.s32.totalorder %s9, 2
      %p101 = por %p99, %p100
      %p102 = scmp.ne.s32.totalorder %s94, %s97
      %p103 = scmp.eq.s32.totalorder %s9, 0
      %p104 = por %p102, %p103
      %p105 = scmp.ne.s32.totalorder %s94, %s97
      %p106 = scmp.eq.s32.totalorder %s14, 2
      %p107 = por %p105, %p106
      %p108 = scmp.ne.s32.totalorder %s97, %s98
      %p109 = scmp.eq.s32.totalorder %s14, 0
      %p110 = por %p108, %p109
      %p111 = scmp.ne.s32.totalorder %s97, %s98
      %p112 = scmp.eq.s32.totalorder %s15, 2
      %p113 = por %p111, %p112
      %p115 = scmp.ne.s32.totalorder %s98, %s114
      %p116 = scmp.eq.s32.totalorder %s15, 0
      %p117 = por %p115, %p116
      %s118 = ssub.s32 %s16, %s35
      %s119 = ssub.s32 %s17, %s31
      %s120 = sor.u32 %s118, %s119
      %p121 = scmp.eq.s32.totalorder %s120, 0
      %s123 = sadd.s32 %s122, 1
      %s124 = scalar_select %p121, %s122, %s123
      %p127 = pneg %p121
      %p128 = scmp.eq.s32.totalorder %s9, 2
      %p129 = por %p127, %p128
      %p130 = scmp.ne.s32.totalorder %s122, %s125
      %p131 = scmp.eq.s32.totalorder %s9, 0
      %p132 = por %p130, %p131
      %p133 = scmp.ne.s32.totalorder %s122, %s125
      %p134 = scmp.eq.s32.totalorder %s14, 2
      %p135 = por %p133, %p134
      %p136 = scmp.ne.s32.totalorder %s125, %s126
      %p137 = scmp.eq.s32.totalorder %s14, 0
      %p138 = por %p136, %p137
      %p139 = scmp.ne.s32.totalorder %s125, %s126
      %p140 = scmp.eq.s32.totalorder %s15, 2
      %p141 = por %p139, %p140
      %p143 = scmp.ne.s32.totalorder %s126, %s142
      %p144 = scmp.eq.s32.totalorder %s15, 0
      %p145 = por %p143, %p144
      %p146 = scmp.le.s32.totalorder 1, %s9
      %p147 = scmp.lt.s32.totalorder %s9, 4
      %p148 = pnand %p146, %p147
      %p149 = pneg %p148
      // Predicated region
      $region9: #{attention_forward.3} parent=5 // pred_check
        _
      $region10: #{attention_forward.3} parent=5 // pred_check_branch
        %151 = sbr.rel (%p148) target = $region12
      $region11: #{attention_forward.3} parent=5 // pred_region
        %s152 = ssub.s32 %s9, 1
        // Predicated region
        $region13: #{attention_forward.3} parent=11 // pred_check
          %p153 = pneg %p56
        $region14: #{attention_forward.3} parent=11 // pred_check_branch
          %155 = sbr.rel (%p153) target = $region16
        $region15: #{attention_forward.3} parent=11 // pred_region
          %s156 = smul.u32 32, %s19
          %p157 = scmp.lt.s32.totalorder %s156, 31
          %s158 = scalar_select %p157, %s156, 31
          %p159 = scmp.lt.s32.totalorder %s21, 0
          %s160 = scalar_select %p159, %s21, 0
          %s161 = sadd.s32 %s160, %s158
          %s162 = smul.addr %s161, 4
          %s163 = scalar_lea.vmem %s0, %s162
          %s164 = smul.u32 32, %s19
        $region16: #{attention_forward.3} parent=11 // pred_fallthru
          _
      $region12: #{attention_forward.3} parent=5 // pred_fallthru
        _
      %p165 = scmp.lt.s32.totalorder %s9, 3
      // Predicated region
      $region17: #{attention_forward.3} parent=5 // pred_check
        %p166 = pneg %p165
      $region18: #{attention_forward.3} parent=5 // pred_check_branch
        %168 = sbr.rel (%p166) target = $region20
      $region19: #{attention_forward.3} parent=5 // pred_region
        // Predicated region
        $region21: #{attention_forward.3} parent=19 // pred_check
          %p169 = pneg %p78
        $region22: #{attention_forward.3} parent=19 // pred_check_branch
          %171 = sbr.rel (%p169) target = $region24
        $region23: #{attention_forward.3} parent=19 // pred_region
          %s172 = sand.u32 %s68, 1
          %s173 = sand.u32 %s68, 1
          %s174 = smul.addr %s173, 64
          %s175 = scalar_lea.vmem [#allocation3], %s174
          %s176 = smul.u32 16, %s18
          %s177 = smul.addr %s176, 3
          %s178 = sadd.s32 %s17, %s177
          %s179 = smul.addr %s178, 4
          %s180 = scalar_lea.vmem %s1, %s179
          // Predicated region
          $region25: #{attention_forward.3} parent=23 // pred_check
            _
          $region26: #{attention_forward.3} parent=23 // pred_check_branch
            %182 = sbr.rel (0) target = $region28
          $region27: #{attention_forward.3} parent=23 // pred_region
            // Predicated region
            $region29: #{attention_forward.3} parent=27 // pred_check
              _
            $region30: #{attention_forward.3} parent=27 // pred_check_branch
              %184 = sbr.rel target = $region32
            $region31: #{attention_forward.3} parent=27 // pred_region
              // Predicated region
              $region44: #{attention_forward.3} parent=31 // pred_check
                _
              $region45: #{attention_forward.3} parent=31 // pred_check_branch
                %230 = sbr.rel (0) target = $region47
              $region46: #{attention_forward.3} parent=31 // pred_region
                loop: start=0, step=1, limit=1
                $region48: #{attention_forward.3} parent=46 // loop_pre_header
                  _
                $region49: #{attention_forward.3} parent=46 // loop_header
                  %s232 = sphi 0, %s236
                  %p233 = scmp.ge.s32.totalorder %s232, 1
                  %s237 = sphi %s180, %s180
                  %s238 = sphi %s175, %s175
                $region50: #{attention_forward.3} parent=46 // loop_header_branch
                  %235 = sbr.rel (%p233) target = $region54
                $region51: #{attention_forward.3} parent=46 // loop_body
                  _
                $region52: #{attention_forward.3} parent=46 // loop_footer
                  %s236 = sadd.s32 1, %s232
                $region53: #{attention_forward.3} parent=46 // loop_footer_branch
                  %231 = sbr.rel target = $region49
                $region54: #{attention_forward.3} parent=46 // loop_exit
                  _
                %s240 = ssub.s32 16, 1
                loop: start=0, step=1, limit=1
                $region55: #{attention_forward.3} parent=46 // loop_pre_header
                  _
                $region56: #{attention_forward.3} parent=46 // loop_header
                  %s242 = sphi 0, %s246
                  %p243 = scmp.ge.s32.totalorder %s242, 1
                  %s247 = sphi %s180, %s180
                  %s248 = sphi %s175, %s175
                $region57: #{attention_forward.3} parent=46 // loop_header_branch
                  %245 = sbr.rel (%p243) target = $region61
                $region58: #{attention_forward.3} parent=46 // loop_body
                  %v249 = vld [vmem:[%s247] sm:%s240]
                  %250 = vst [vmem:[%s248] sm:%s240] %v249
                  %v251 = vld [vmem:[%s247 + $0xc] sm:%s240]
                  %252 = vst [vmem:[%s248 + $0x4] sm:%s240] %v251
                  %v253 = vld [vmem:[%s247 + $0x18] sm:%s240]
                  %254 = vst [vmem:[%s248 + $0x8] sm:%s240] %v253
                  %v255 = vld [vmem:[%s247 + $0x24] sm:%s240]
                  %256 = vst [vmem:[%s248 + $0xc] sm:%s240] %v255
                  %v257 = vld [vmem:[%s247 + $0x30] sm:%s240]
                  %258 = vst [vmem:[%s248 + $0x10] sm:%s240] %v257
                  %v259 = vld [vmem:[%s247 + $0x3c] sm:%s240]
                  %260 = vst [vmem:[%s248 + $0x14] sm:%s240] %v259
                  %v261 = vld [vmem:[%s247 + $0x48] sm:%s240]
                  %262 = vst [vmem:[%s248 + $0x18] sm:%s240] %v261
                  %v263 = vld [vmem:[%s247 + $0x54] sm:%s240]
                  %264 = vst [vmem:[%s248 + $0x1c] sm:%s240] %v263
                  %v265 = vld [vmem:[%s247 + $0x60] sm:%s240]
                  %266 = vst [vmem:[%s248 + $0x20] sm:%s240] %v265
                  %v267 = vld [vmem:[%s247 + $0x6c] sm:%s240]
                  %268 = vst [vmem:[%s248 + $0x24] sm:%s240] %v267
                  %v269 = vld [vmem:[%s247 + $0x78] sm:%s240]
                  %270 = vst [vmem:[%s248 + $0x28] sm:%s240] %v269
                  %v271 = vld [vmem:[%s247 + $0x84] sm:%s240]
                  %272 = vst [vmem:[%s248 + $0x2c] sm:%s240] %v271
                  %v273 = vld [vmem:[%s247 + $0x90] sm:%s240]
                  %274 = vst [vmem:[%s248 + $0x30] sm:%s240] %v273
                  %v275 = vld [vmem:[%s247 + $0x9c] sm:%s240]
                  %276 = vst [vmem:[%s248 + $0x34] sm:%s240] %v275
                  %v277 = vld [vmem:[%s247 + $0xa8] sm:%s240]
                  %278 = vst [vmem:[%s248 + $0x38] sm:%s240] %v277
                  %v279 = vld [vmem:[%s247 + $0xb4] sm:%s240]
                  %280 = vst [vmem:[%s248 + $0x3c] sm:%s240] %v279
                $region59: #{attention_forward.3} parent=46 // loop_footer
                  %s246 = sadd.s32 1, %s242
                $region60: #{attention_forward.3} parent=46 // loop_footer_branch
                  %241 = sbr.rel target = $region56
                $region61: #{attention_forward.3} parent=46 // loop_exit
                  _
              $region47: #{attention_forward.3} parent=31 // pred_fallthru
                _
            $region32: #{attention_forward.3} parent=27 // pred_fallthru
              _
            // Predicated region
            $region33: #{attention_forward.3} parent=27 // pred_check
              _
            $region34: #{attention_forward.3} parent=27 // pred_check_branch
              %186 = sbr.rel (0) target = $region36
            $region35: #{attention_forward.3} parent=27 // pred_region
              %s188 = ssub.s32 16, 1
              loop: start=0, step=1, limit=1
              $region37: #{attention_forward.3} parent=35 // loop_pre_header
                _
              $region38: #{attention_forward.3} parent=35 // loop_header
                %s190 = sphi 0, %s194
                %p191 = scmp.ge.s32.totalorder %s190, 1
                %s195 = sphi %s180, %s180
                %s196 = sphi %s175, %s175
              $region39: #{attention_forward.3} parent=35 // loop_header_branch
                %193 = sbr.rel (%p191) target = $region43
              $region40: #{attention_forward.3} parent=35 // loop_body
                %v197 = vld [vmem:[%s195] sm:%s188]
                %198 = vst [vmem:[%s196] sm:%s188] %v197
                %v199 = vld [vmem:[%s195 + $0xc] sm:%s188]
                %200 = vst [vmem:[%s196 + $0x4] sm:%s188] %v199
                %v201 = vld [vmem:[%s195 + $0x18] sm:%s188]
                %202 = vst [vmem:[%s196 + $0x8] sm:%s188] %v201
                %v203 = vld [vmem:[%s195 + $0x24] sm:%s188]
                %204 = vst [vmem:[%s196 + $0xc] sm:%s188] %v203
                %v205 = vld [vmem:[%s195 + $0x30] sm:%s188]
                %206 = vst [vmem:[%s196 + $0x10] sm:%s188] %v205
                %v207 = vld [vmem:[%s195 + $0x3c] sm:%s188]
                %208 = vst [vmem:[%s196 + $0x14] sm:%s188] %v207
                %v209 = vld [vmem:[%s195 + $0x48] sm:%s188]
                %210 = vst [vmem:[%s196 + $0x18] sm:%s188] %v209
                %v211 = vld [vmem:[%s195 + $0x54] sm:%s188]
                %212 = vst [vmem:[%s196 + $0x1c] sm:%s188] %v211
                %v213 = vld [vmem:[%s195 + $0x60] sm:%s188]
                %214 = vst [vmem:[%s196 + $0x20] sm:%s188] %v213
                %v215 = vld [vmem:[%s195 + $0x6c] sm:%s188]
                %216 = vst [vmem:[%s196 + $0x24] sm:%s188] %v215
                %v217 = vld [vmem:[%s195 + $0x78] sm:%s188]
                %218 = vst [vmem:[%s196 + $0x28] sm:%s188] %v217
                %v219 = vld [vmem:[%s195 + $0x84] sm:%s188]
                %220 = vst [vmem:[%s196 + $0x2c] sm:%s188] %v219
                %v221 = vld [vmem:[%s195 + $0x90] sm:%s188]
                %222 = vst [vmem:[%s196 + $0x30] sm:%s188] %v221
                %v223 = vld [vmem:[%s195 + $0x9c] sm:%s188]
                %224 = vst [vmem:[%s196 + $0x34] sm:%s188] %v223
                %v225 = vld [vmem:[%s195 + $0xa8] sm:%s188]
                %226 = vst [vmem:[%s196 + $0x38] sm:%s188] %v225
                %v227 = vld [vmem:[%s195 + $0xb4] sm:%s188]
                %228 = vst [vmem:[%s196 + $0x3c] sm:%s188] %v227
              $region41: #{attention_forward.3} parent=35 // loop_footer
                %s194 = sadd.s32 1, %s190
              $region42: #{attention_forward.3} parent=35 // loop_footer_branch
                %189 = sbr.rel target = $region38
              $region43: #{attention_forward.3} parent=35 // loop_exit
                _
            $region36: #{attention_forward.3} parent=27 // pred_fallthru
              _
          $region28: #{attention_forward.3} parent=23 // pred_fallthru
            _
          %281 = vnop
        $region24: #{attention_forward.3} parent=19 // pred_fallthru
          _
        // Predicated region
        $region62: #{attention_forward.3} parent=19 // pred_check
          %p282 = pneg %p104
        $region63: #{attention_forward.3} parent=19 // pred_check_branch
          %284 = sbr.rel (%p282) target = $region65
        $region64: #{attention_forward.3} parent=19 // pred_region
          %p285 = scmp.lt.s32.totalorder %s17, 2
          %s286 = scalar_select %p285, %s17, 2
          %s287 = scalar_lea.vmem %s2, %s286
        $region65: #{attention_forward.3} parent=19 // pred_fallthru
          _
      $region20: #{attention_forward.3} parent=5 // pred_fallthru
        _
      %p288 = scmp.le.s32.totalorder 1, %s9
      %p289 = scmp.lt.s32.totalorder %s9, 4
      %p290 = pnand %p288, %p289
      %p291 = pneg %p290
      // Predicated region
      $region66: #{attention_forward.3} parent=5 // pred_check
        _
      $region67: #{attention_forward.3} parent=5 // pred_check_branch
        %293 = sbr.rel (%p290) target = $region69
      $region68: #{attention_forward.3} parent=5 // pred_region
        %s294 = ssub.s32 %s9, 1
        %s295 = sand.u32 %s71, 1
        %s296 = sand.u32 %s71, 1
        %s297 = smul.addr %s296, 64
        %s298 = scalar_lea.vmem [#allocation3], %s297
        // Predicated region
        $region70: #{attention_forward.3} parent=68 // pred_check
          %p299 = pneg %p84
        $region71: #{attention_forward.3} parent=68 // pred_check_branch
          %301 = sbr.rel (%p299) target = $region73
        $region72: #{attention_forward.3} parent=68 // pred_region
          _
        $region73: #{attention_forward.3} parent=68 // pred_fallthru
          _
        %s302 = smul.u32 32, %s19
        %p303 = scmp.lt.s32.totalorder %s302, 31
        %s304 = scalar_select %p303, %s302, 31
        %p305 = scmp.lt.s32.totalorder %s21, 0
        %s306 = scalar_select %p305, %s21, 0
        %s307 = sadd.s32 %s306, %s304
        %s308 = smul.addr %s307, 4
        %s309 = scalar_lea.vmem %s0, %s308
        %p310 = pneg %p56
        %p311 = pneg %p53
        %s312 = sand.u32 %s71, 1
        %s313 = sand.u32 %s71, 1
        %s314 = smul.addr %s313, 64
        %s315 = scalar_lea.vmem [#allocation3], %s314
        %p316 = pneg %p84
        %p317 = pneg %p81
        %p318 = scmp.lt.s32.totalorder %s20, 2
        %s319 = scalar_select %p318, %s20, 2
        %s320 = scalar_lea.vmem %s2, %s319
        %p321 = pneg %p110
        %p322 = pneg %p107
        %p323 = pneg %p138
        %p324 = pneg %p135
        %s325 = sand.u32 %s125, 1
        %s326 = sand.u32 %s125, 1
        %s327 = smul.addr %s326, 128
        %s328 = scalar_lea.vmem [#allocation4], %s327
        %s329 = smul.u32 32, %s19
        %p330 = scmp.lt.s32.totalorder %s329, 31
        %s331 = scalar_select %p330, %s329, 31
        %p332 = scmp.lt.s32.totalorder %s21, 0
        %s333 = scalar_select %p332, %s21, 0
        %s334 = sadd.s32 %s333, %s331
        %s335 = smul.addr %s334, 4
        %s336 = scalar_lea.vmem %s0, %s335
        %s337 = smul.u32 32, %s19
        %s338 = smul.u32 16, %s21
        %p339 = scmp.lt.s32.totalorder %s20, 2
        %s340 = scalar_select %p339, %s20, 2
        %s341 = scalar_lea.vmem %s2, %s340
        %s342 = smul.u32 32, %s19
        %p343 = scmp.eq.s32.totalorder %s21, 0
        // Predicated region
        $region74: #{attention_forward.3} parent=68 // pred_check
          %p344 = pneg %p343
        $region75: #{attention_forward.3} parent=68 // pred_check_branch
          %346 = sbr.rel (%p344) target = $region77
        $region76: #{attention_forward.3} parent=68 // pred_region
          %347 = vst [vmem:[#allocation2] sm:$0xff] 0.0
          %348 = vst [vmem:[#allocation2 + $0x8] sm:$0xff] 0.0
          %349 = vst [vmem:[#allocation2 + $0x10] sm:$0xff] 0.0
          %350 = vst [vmem:[#allocation2 + $0x18] sm:$0xff] 0.0
          %351 = vst [vmem:[#allocation2 + $0x20] sm:$0xff] 0.0
          %352 = vst [vmem:[#allocation2 + $0x28] sm:$0xff] 0.0
          %353 = vst [vmem:[#allocation2 + $0x30] sm:$0xff] 0.0
          %354 = vst [vmem:[#allocation2 + $0x38] sm:$0xff] 0.0
          %355 = vst [vmem:[#allocation2 + $0x40] sm:$0xff] 0.0
          %356 = vst [vmem:[#allocation2 + $0x48] sm:$0xff] 0.0
          %357 = vst [vmem:[#allocation2 + $0x50] sm:$0xff] 0.0
          %358 = vst [vmem:[#allocation2 + $0x58] sm:$0xff] 0.0
          %359 = vst [vmem:[#allocation2 + $0x60] sm:$0xff] 0.0
          %360 = vst [vmem:[#allocation2 + $0x68] sm:$0xff] 0.0
          %361 = vst [vmem:[#allocation2 + $0x70] sm:$0xff] 0.0
          %362 = vst [vmem:[#allocation2 + $0x78] sm:$0xff] 0.0
          %363 = vst [vmem:[#allocation2 + $0x80] sm:$0xff] 0.0
          %364 = vst [vmem:[#allocation2 + $0x88] sm:$0xff] 0.0
          %365 = vst [vmem:[#allocation2 + $0x90] sm:$0xff] 0.0
          %366 = vst [vmem:[#allocation2 + $0x98] sm:$0xff] 0.0
          %367 = vst [vmem:[#allocation2 + $0xa0] sm:$0xff] 0.0
          %368 = vst [vmem:[#allocation2 + $0xa8] sm:$0xff] 0.0
          %369 = vst [vmem:[#allocation2 + $0xb0] sm:$0xff] 0.0
          %370 = vst [vmem:[#allocation2 + $0xb8] sm:$0xff] 0.0
          %371 = vst [vmem:[#allocation2 + $0xc0] sm:$0xff] 0.0
          %372 = vst [vmem:[#allocation2 + $0xc8] sm:$0xff] 0.0
          %373 = vst [vmem:[#allocation2 + $0xd0] sm:$0xff] 0.0
          %374 = vst [vmem:[#allocation2 + $0xd8] sm:$0xff] 0.0
          %375 = vst [vmem:[#allocation2 + $0xe0] sm:$0xff] 0.0
          %376 = vst [vmem:[#allocation2 + $0xe8] sm:$0xff] 0.0
          %377 = vst [vmem:[#allocation2 + $0xf0] sm:$0xff] 0.0
          %378 = vst [vmem:[#allocation2 + $0xf8] sm:$0xff] 0.0
        $region77: #{attention_forward.3} parent=68 // pred_fallthru
          _
        %v379 = vld [vmem:[#allocation2] sm:$0xff]
        %v380 = vld [vmem:[#allocation2 + $0x8] sm:$0xff]
        %v381 = vld [vmem:[#allocation2 + $0x10] sm:$0xff]
        %v382 = vld [vmem:[#allocation2 + $0x18] sm:$0xff]
        %v383 = vld [vmem:[#allocation2 + $0x20] sm:$0xff]
        %v384 = vld [vmem:[#allocation2 + $0x28] sm:$0xff]
        %v385 = vld [vmem:[#allocation2 + $0x30] sm:$0xff]
        %v386 = vld [vmem:[#allocation2 + $0x38] sm:$0xff]
        %v387 = vld [vmem:[#allocation2 + $0x40] sm:$0xff]
        %v388 = vld [vmem:[#allocation2 + $0x48] sm:$0xff]
        %v389 = vld [vmem:[#allocation2 + $0x50] sm:$0xff]
        %v390 = vld [vmem:[#allocation2 + $0x58] sm:$0xff]
        %v391 = vld [vmem:[#allocation2 + $0x60] sm:$0xff]
        %v392 = vld [vmem:[#allocation2 + $0x68] sm:$0xff]
        %v393 = vld [vmem:[#allocation2 + $0x70] sm:$0xff]
        %v394 = vld [vmem:[#allocation2 + $0x78] sm:$0xff]
        %v395 = vld [vmem:[#allocation2 + $0x80] sm:$0xff]
        %v396 = vld [vmem:[#allocation2 + $0x88] sm:$0xff]
        %v397 = vld [vmem:[#allocation2 + $0x90] sm:$0xff]
        %v398 = vld [vmem:[#allocation2 + $0x98] sm:$0xff]
        %v399 = vld [vmem:[#allocation2 + $0xa0] sm:$0xff]
        %v400 = vld [vmem:[#allocation2 + $0xa8] sm:$0xff]
        %v401 = vld [vmem:[#allocation2 + $0xb0] sm:$0xff]
        %v402 = vld [vmem:[#allocation2 + $0xb8] sm:$0xff]
        %v403 = vld [vmem:[#allocation2 + $0xc0] sm:$0xff]
        %v404 = vld [vmem:[#allocation2 + $0xc8] sm:$0xff]
        %v405 = vld [vmem:[#allocation2 + $0xd0] sm:$0xff]
        %v406 = vld [vmem:[#allocation2 + $0xd8] sm:$0xff]
        %v407 = vld [vmem:[#allocation2 + $0xe0] sm:$0xff]
        %v408 = vld [vmem:[#allocation2 + $0xe8] sm:$0xff]
        %v409 = vld [vmem:[#allocation2 + $0xf0] sm:$0xff]
        %v410 = vld [vmem:[#allocation2 + $0xf8] sm:$0xff]
        %v411 = vld [vmem:[%s336] sm:$0xf]
        %v412 = vld [vmem:[%s336 + $0x4] sm:$0xf]
        %v413 = vld [vmem:[%s336 + $0x8] sm:$0xf]
        %v414 = vld [vmem:[%s336 + $0xc] sm:$0xf]
        %v415 = vld [vmem:[%s336 + $0x10] sm:$0xf]
        %v416 = vld [vmem:[%s336 + $0x14] sm:$0xf]
        %v417 = vld [vmem:[%s336 + $0x18] sm:$0xf]
        %v418 = vld [vmem:[%s336 + $0x1c] sm:$0xf]
        %v419 = vld [vmem:[%s336 + $0x20] sm:$0xf]
        %v420 = vld [vmem:[%s336 + $0x24] sm:$0xf]
        %v421 = vld [vmem:[%s336 + $0x28] sm:$0xf]
        %v422 = vld [vmem:[%s336 + $0x2c] sm:$0xf]
        %v423 = vld [vmem:[%s336 + $0x30] sm:$0xf]
        %v424 = vld [vmem:[%s336 + $0x34] sm:$0xf]
        %v425 = vld [vmem:[%s336 + $0x38] sm:$0xf]
        %v426 = vld [vmem:[%s336 + $0x3c] sm:$0xf]
        %v427 = vld [vmem:[%s336 + $0x40] sm:$0xf]
        %v428 = vld [vmem:[%s336 + $0x44] sm:$0xf]
        %v429 = vld [vmem:[%s336 + $0x48] sm:$0xf]
        %v430 = vld [vmem:[%s336 + $0x4c] sm:$0xf]
        %v431 = vld [vmem:[%s336 + $0x50] sm:$0xf]
        %v432 = vld [vmem:[%s336 + $0x54] sm:$0xf]
        %v433 = vld [vmem:[%s336 + $0x58] sm:$0xf]
        %v434 = vld [vmem:[%s336 + $0x5c] sm:$0xf]
        %v435 = vld [vmem:[%s336 + $0x60] sm:$0xf]
        %v436 = vld [vmem:[%s336 + $0x64] sm:$0xf]
        %v437 = vld [vmem:[%s336 + $0x68] sm:$0xf]
        %v438 = vld [vmem:[%s336 + $0x6c] sm:$0xf]
        %v439 = vld [vmem:[%s336 + $0x70] sm:$0xf]
        %v440 = vld [vmem:[%s336 + $0x74] sm:$0xf]
        %v441 = vld [vmem:[%s336 + $0x78] sm:$0xf]
        %v442 = vld [vmem:[%s336 + $0x7c] sm:$0xf]
        %v443 = vld [vmem:[%s298] sm:$0xf]
        %v444 = vld [vmem:[%s298 + $0x4] sm:$0xf]
        %v445 = vld [vmem:[%s298 + $0x8] sm:$0xf]
        %v446 = vld [vmem:[%s298 + $0xc] sm:$0xf]
        %v447 = vld [vmem:[%s298 + $0x10] sm:$0xf]
        %v448 = vld [vmem:[%s298 + $0x14] sm:$0xf]
        %v449 = vld [vmem:[%s298 + $0x18] sm:$0xf]
        %v450 = vld [vmem:[%s298 + $0x1c] sm:$0xf]
        %v451 = vld [vmem:[%s298 + $0x20] sm:$0xf]
        %v452 = vld [vmem:[%s298 + $0x24] sm:$0xf]
        %v453 = vld [vmem:[%s298 + $0x28] sm:$0xf]
        %v454 = vld [vmem:[%s298 + $0x2c] sm:$0xf]
        %v455 = vld [vmem:[%s298 + $0x30] sm:$0xf]
        %v456 = vld [vmem:[%s298 + $0x34] sm:$0xf]
        %v457 = vld [vmem:[%s298 + $0x38] sm:$0xf]
        %v458 = vld [vmem:[%s298 + $0x3c] sm:$0xf]
        %v491 = vunpack.c.l.b16 %v411
        %v492 = vunpack.c.l.b16 %v412
        %v493 = vunpack.c.l.b16 %v413
        %v494 = vunpack.c.l.b16 %v414
        %v495 = vunpack.c.l.b16 %v415
        %v496 = vunpack.c.l.b16 %v416
        %v497 = vunpack.c.l.b16 %v417
        %v498 = vunpack.c.l.b16 %v418
        %v499 = vunpack.c.l.b16 %v419
        %v500 = vunpack.c.l.b16 %v420
        %v501 = vunpack.c.l.b16 %v421
        %v502 = vunpack.c.l.b16 %v422
        %v503 = vunpack.c.l.b16 %v423
        %v504 = vunpack.c.l.b16 %v424
        %v505 = vunpack.c.l.b16 %v425
        %v506 = vunpack.c.l.b16 %v426
        %v507 = vunpack.c.l.b16 %v427
        %v508 = vunpack.c.l.b16 %v428
        %v509 = vunpack.c.l.b16 %v429
        %v510 = vunpack.c.l.b16 %v430
        %v511 = vunpack.c.l.b16 %v431
        %v512 = vunpack.c.l.b16 %v432
        %v513 = vunpack.c.l.b16 %v433
        %v514 = vunpack.c.l.b16 %v434
        %v515 = vunpack.c.l.b16 %v435
        %v516 = vunpack.c.l.b16 %v436
        %v517 = vunpack.c.l.b16 %v437
        %v518 = vunpack.c.l.b16 %v438
        %v519 = vunpack.c.l.b16 %v439
        %v520 = vunpack.c.l.b16 %v440
        %v521 = vunpack.c.l.b16 %v441
        %v522 = vunpack.c.l.b16 %v442
        %v523 = vpack.c.b16 %v492, %v491
        %v524 = vpack.c.b16 %v494, %v493
        %v525 = vpack.c.b16 %v496, %v495
        %v526 = vpack.c.b16 %v498, %v497
        %v527 = vpack.c.b16 %v500, %v499
        %v528 = vpack.c.b16 %v502, %v501
        %v529 = vpack.c.b16 %v504, %v503
        %v530 = vpack.c.b16 %v506, %v505
        %v531 = vpack.c.b16 %v508, %v507
        %v532 = vpack.c.b16 %v510, %v509
        %v533 = vpack.c.b16 %v512, %v511
        %v534 = vpack.c.b16 %v514, %v513
        %v535 = vpack.c.b16 %v516, %v515
        %v536 = vpack.c.b16 %v518, %v517
        %v537 = vpack.c.b16 %v520, %v519
        %v538 = vpack.c.b16 %v522, %v521
        %v571 = vunpack.c.l.b16 %v443
        %v572 = vunpack.c.l.b16 %v444
        %v573 = vunpack.c.l.b16 %v445
        %v574 = vunpack.c.l.b16 %v446
        %v575 = vunpack.c.l.b16 %v447
        %v576 = vunpack.c.l.b16 %v448
        %v577 = vunpack.c.l.b16 %v449
        %v578 = vunpack.c.l.b16 %v450
        %v579 = vunpack.c.l.b16 %v451
        %v580 = vunpack.c.l.b16 %v452
        %v581 = vunpack.c.l.b16 %v453
        %v582 = vunpack.c.l.b16 %v454
        %v583 = vunpack.c.l.b16 %v455
        %v584 = vunpack.c.l.b16 %v456
        %v585 = vunpack.c.l.b16 %v457
        %v586 = vunpack.c.l.b16 %v458
        %v587 = vpack.c.b16 %v572, %v571
        %v588 = vpack.c.b16 %v574, %v573
        %v589 = vpack.c.b16 %v576, %v575
        %v590 = vpack.c.b16 %v578, %v577
        %v591 = vpack.c.b16 %v580, %v579
        %v592 = vpack.c.b16 %v582, %v581
        %v593 = vpack.c.b16 %v584, %v583
        %v594 = vpack.c.b16 %v586, %v585
        %603 = vmatpush.bf16.msra.mxu0 %v594
        %604 = vmatpush.bf16.msra.mxu0 %v593
        %605 = vmatpush.bf16.msra.mxu0 %v592
        %606 = vmatpush.bf16.msra.mxu0 %v591
        %607 = vmatpush.bf16.msra.mxu0 %v590
        %608 = vmatpush.bf16.msra.mxu0 %v589
        %609 = vmatpush.bf16.msra.mxu0 %v588
        %610 = vmatpush.bf16.msra.mxu0 %v587
        %611 = vmatmul.bf16.gmra.mxu0 %v523
        %v612 = vpop.f32.mrf.mxu0
        %v613 = vadd.f32 0.0, %v612
        %v614 = vpop.f32.mrf.mxu0
        %v615 = vadd.f32 0.0, %v614
        %616 = vmatmul.bf16.gmra.mxu0 %v524
        %v617 = vpop.f32.mrf.mxu0
        %v618 = vadd.f32 0.0, %v617
        %v619 = vpop.f32.mrf.mxu0
        %v620 = vadd.f32 0.0, %v619
        %621 = vmatmul.bf16.gmra.mxu0 %v525
        %v622 = vpop.f32.mrf.mxu0
        %v623 = vadd.f32 0.0, %v622
        %v624 = vpop.f32.mrf.mxu0
        %v625 = vadd.f32 0.0, %v624
        %626 = vmatmul.bf16.gmra.mxu0 %v526
        %v627 = vpop.f32.mrf.mxu0
        %v628 = vadd.f32 0.0, %v627
        %v629 = vpop.f32.mrf.mxu0
        %v630 = vadd.f32 0.0, %v629
        %631 = vmatmul.bf16.gmra.mxu0 %v527
        %v632 = vpop.f32.mrf.mxu0
        %v633 = vadd.f32 0.0, %v632
        %v634 = vpop.f32.mrf.mxu0
        %v635 = vadd.f32 0.0, %v634
        %636 = vmatmul.bf16.gmra.mxu0 %v528
        %v637 = vpop.f32.mrf.mxu0
        %v638 = vadd.f32 0.0, %v637
        %v639 = vpop.f32.mrf.mxu0
        %v640 = vadd.f32 0.0, %v639
        %641 = vmatmul.bf16.gmra.mxu0 %v529
        %v642 = vpop.f32.mrf.mxu0
        %v643 = vadd.f32 0.0, %v642
        %v644 = vpop.f32.mrf.mxu0
        %v645 = vadd.f32 0.0, %v644
        %646 = vmatmul.bf16.gmra.mxu0 %v530
        %v647 = vpop.f32.mrf.mxu0
        %v648 = vadd.f32 0.0, %v647
        %v649 = vpop.f32.mrf.mxu0
        %v650 = vadd.f32 0.0, %v649
        %651 = vmatmul.bf16.gmra.mxu0 %v531
        %v652 = vpop.f32.mrf.mxu0
        %v653 = vadd.f32 0.0, %v652
        %v654 = vpop.f32.mrf.mxu0
        %v655 = vadd.f32 0.0, %v654
        %656 = vmatmul.bf16.gmra.mxu0 %v532
        %v657 = vpop.f32.mrf.mxu0
        %v658 = vadd.f32 0.0, %v657
        %v659 = vpop.f32.mrf.mxu0
        %v660 = vadd.f32 0.0, %v659
        %661 = vmatmul.bf16.gmra.mxu0 %v533
        %v662 = vpop.f32.mrf.mxu0
        %v663 = vadd.f32 0.0, %v662
        %v664 = vpop.f32.mrf.mxu0
        %v665 = vadd.f32 0.0, %v664
        %666 = vmatmul.bf16.gmra.mxu0 %v534
        %v667 = vpop.f32.mrf.mxu0
        %v668 = vadd.f32 0.0, %v667
        %v669 = vpop.f32.mrf.mxu0
        %v670 = vadd.f32 0.0, %v669
        %671 = vmatmul.bf16.gmra.mxu0 %v535
        %v672 = vpop.f32.mrf.mxu0
        %v673 = vadd.f32 0.0, %v672
        %v674 = vpop.f32.mrf.mxu0
        %v675 = vadd.f32 0.0, %v674
        %676 = vmatmul.bf16.gmra.mxu0 %v536
        %v677 = vpop.f32.mrf.mxu0
        %v678 = vadd.f32 0.0, %v677
        %v679 = vpop.f32.mrf.mxu0
        %v680 = vadd.f32 0.0, %v679
        %681 = vmatmul.bf16.gmra.mxu0 %v537
        %v682 = vpop.f32.mrf.mxu0
        %v683 = vadd.f32 0.0, %v682
        %v684 = vpop.f32.mrf.mxu0
        %v685 = vadd.f32 0.0, %v684
        %686 = vmatmul.bf16.gmra.mxu0 %v538
        %v687 = vpop.f32.mrf.mxu0
        %v688 = vadd.f32 0.0, %v687
        %v689 = vpop.f32.mrf.mxu0
        %v690 = vadd.f32 0.0, %v689
        %691 = vdwg.mxu0
        %v692 = vadd.f32 %v379, %v613
        %v693 = vadd.f32 %v380, %v615
        %v694 = vadd.f32 %v381, %v618
        %v695 = vadd.f32 %v382, %v620
        %v696 = vadd.f32 %v383, %v623
        %v697 = vadd.f32 %v384, %v625
        %v698 = vadd.f32 %v385, %v628
        %v699 = vadd.f32 %v386, %v630
        %v700 = vadd.f32 %v387, %v633
        %v701 = vadd.f32 %v388, %v635
        %v702 = vadd.f32 %v389, %v638
        %v703 = vadd.f32 %v390, %v640
        %v704 = vadd.f32 %v391, %v643
        %v705 = vadd.f32 %v392, %v645
        %v706 = vadd.f32 %v393, %v648
        %v707 = vadd.f32 %v394, %v650
        %v708 = vadd.f32 %v395, %v653
        %v709 = vadd.f32 %v396, %v655
        %v710 = vadd.f32 %v397, %v658
        %v711 = vadd.f32 %v398, %v660
        %v712 = vadd.f32 %v399, %v663
        %v713 = vadd.f32 %v400, %v665
        %v714 = vadd.f32 %v401, %v668
        %v715 = vadd.f32 %v402, %v670
        %v716 = vadd.f32 %v403, %v673
        %v717 = vadd.f32 %v404, %v675
        %v718 = vadd.f32 %v405, %v678
        %v719 = vadd.f32 %v406, %v680
        %v720 = vadd.f32 %v407, %v683
        %v721 = vadd.f32 %v408, %v685
        %v722 = vadd.f32 %v409, %v688
        %v723 = vadd.f32 %v410, %v690
        %724 = vst [vmem:[#allocation2] sm:$0xff] %v692
        %725 = vst [vmem:[#allocation2 + $0x8] sm:$0xff] %v693
        %726 = vst [vmem:[#allocation2 + $0x10] sm:$0xff] %v694
        %727 = vst [vmem:[#allocation2 + $0x18] sm:$0xff] %v695
        %728 = vst [vmem:[#allocation2 + $0x20] sm:$0xff] %v696
        %729 = vst [vmem:[#allocation2 + $0x28] sm:$0xff] %v697
        %730 = vst [vmem:[#allocation2 + $0x30] sm:$0xff] %v698
        %731 = vst [vmem:[#allocation2 + $0x38] sm:$0xff] %v699
        %732 = vst [vmem:[#allocation2 + $0x40] sm:$0xff] %v700
        %733 = vst [vmem:[#allocation2 + $0x48] sm:$0xff] %v701
        %734 = vst [vmem:[#allocation2 + $0x50] sm:$0xff] %v702
        %735 = vst [vmem:[#allocation2 + $0x58] sm:$0xff] %v703
        %736 = vst [vmem:[#allocation2 + $0x60] sm:$0xff] %v704
        %737 = vst [vmem:[#allocation2 + $0x68] sm:$0xff] %v705
        %738 = vst [vmem:[#allocation2 + $0x70] sm:$0xff] %v706
        %739 = vst [vmem:[#allocation2 + $0x78] sm:$0xff] %v707
        %740 = vst [vmem:[#allocation2 + $0x80] sm:$0xff] %v708
        %741 = vst [vmem:[#allocation2 + $0x88] sm:$0xff] %v709
        %742 = vst [vmem:[#allocation2 + $0x90] sm:$0xff] %v710
        %743 = vst [vmem:[#allocation2 + $0x98] sm:$0xff] %v711
        %744 = vst [vmem:[#allocation2 + $0xa0] sm:$0xff] %v712
        %745 = vst [vmem:[#allocation2 + $0xa8] sm:$0xff] %v713
        %746 = vst [vmem:[#allocation2 + $0xb0] sm:$0xff] %v714
        %747 = vst [vmem:[#allocation2 + $0xb8] sm:$0xff] %v715
        %748 = vst [vmem:[#allocation2 + $0xc0] sm:$0xff] %v716
        %749 = vst [vmem:[#allocation2 + $0xc8] sm:$0xff] %v717
        %750 = vst [vmem:[#allocation2 + $0xd0] sm:$0xff] %v718
        %751 = vst [vmem:[#allocation2 + $0xd8] sm:$0xff] %v719
        %752 = vst [vmem:[#allocation2 + $0xe0] sm:$0xff] %v720
        %753 = vst [vmem:[#allocation2 + $0xe8] sm:$0xff] %v721
        %754 = vst [vmem:[#allocation2 + $0xf0] sm:$0xff] %v722
        %755 = vst [vmem:[#allocation2 + $0xf8] sm:$0xff] %v723
        // Predicated region
        $region78: #{attention_forward.3} parent=68 // pred_check
          %p756 = pneg %p343
        $region79: #{attention_forward.3} parent=68 // pred_check_branch
          %758 = sbr.rel (%p756) target = $region81
        $region80: #{attention_forward.3} parent=68 // pred_region
          %v759 = vld [vmem:[#allocation2] sm:$0xff]
          %v760 = vld [vmem:[#allocation2 + $0x8] sm:$0xff]
          %v761 = vld [vmem:[#allocation2 + $0x10] sm:$0xff]
          %v762 = vld [vmem:[#allocation2 + $0x18] sm:$0xff]
          %v763 = vld [vmem:[#allocation2 + $0x20] sm:$0xff]
          %v764 = vld [vmem:[#allocation2 + $0x28] sm:$0xff]
          %v765 = vld [vmem:[#allocation2 + $0x30] sm:$0xff]
          %v766 = vld [vmem:[#allocation2 + $0x38] sm:$0xff]
          %v767 = vld [vmem:[#allocation2 + $0x40] sm:$0xff]
          %v768 = vld [vmem:[#allocation2 + $0x48] sm:$0xff]
          %v769 = vld [vmem:[#allocation2 + $0x50] sm:$0xff]
          %v770 = vld [vmem:[#allocation2 + $0x58] sm:$0xff]
          %v771 = vld [vmem:[#allocation2 + $0x60] sm:$0xff]
          %v772 = vld [vmem:[#allocation2 + $0x68] sm:$0xff]
          %v773 = vld [vmem:[#allocation2 + $0x70] sm:$0xff]
          %v774 = vld [vmem:[#allocation2 + $0x78] sm:$0xff]
          %v775 = vld [vmem:[#allocation2 + $0x80] sm:$0xff]
          %v776 = vld [vmem:[#allocation2 + $0x88] sm:$0xff]
          %v777 = vld [vmem:[#allocation2 + $0x90] sm:$0xff]
          %v778 = vld [vmem:[#allocation2 + $0x98] sm:$0xff]
          %v779 = vld [vmem:[#allocation2 + $0xa0] sm:$0xff]
          %v780 = vld [vmem:[#allocation2 + $0xa8] sm:$0xff]
          %v781 = vld [vmem:[#allocation2 + $0xb0] sm:$0xff]
          %v782 = vld [vmem:[#allocation2 + $0xb8] sm:$0xff]
          %v783 = vld [vmem:[#allocation2 + $0xc0] sm:$0xff]
          %v784 = vld [vmem:[#allocation2 + $0xc8] sm:$0xff]
          %v785 = vld [vmem:[#allocation2 + $0xd0] sm:$0xff]
          %v786 = vld [vmem:[#allocation2 + $0xd8] sm:$0xff]
          %v787 = vld [vmem:[#allocation2 + $0xe0] sm:$0xff]
          %v788 = vld [vmem:[#allocation2 + $0xe8] sm:$0xff]
          %v789 = vld [vmem:[#allocation2 + $0xf0] sm:$0xff]
          %v790 = vld [vmem:[#allocation2 + $0xf8] sm:$0xff]
          %v791 = vld [vmem:[%s341] sm:$0x1]
          %v793 = vperm.slane %v791, 0
          %v795 = vadd.f32 %v759, %v793
          %v796 = vadd.f32 %v760, %v793
          %v797 = vadd.f32 %v761, %v793
          %v798 = vadd.f32 %v762, %v793
          %v799 = vadd.f32 %v763, %v793
          %v800 = vadd.f32 %v764, %v793
          %v801 = vadd.f32 %v765, %v793
          %v802 = vadd.f32 %v766, %v793
          %v803 = vadd.f32 %v767, %v793
          %v804 = vadd.f32 %v768, %v793
          %v805 = vadd.f32 %v769, %v793
          %v806 = vadd.f32 %v770, %v793
          %v807 = vadd.f32 %v771, %v793
          %v808 = vadd.f32 %v772, %v793
          %v809 = vadd.f32 %v773, %v793
          %v810 = vadd.f32 %v774, %v793
          %v811 = vadd.f32 %v775, %v793
          %v812 = vadd.f32 %v776, %v793
          %v813 = vadd.f32 %v777, %v793
          %v814 = vadd.f32 %v778, %v793
          %v815 = vadd.f32 %v779, %v793
          %v816 = vadd.f32 %v780, %v793
          %v817 = vadd.f32 %v781, %v793
          %v818 = vadd.f32 %v782, %v793
          %v819 = vadd.f32 %v783, %v793
          %v820 = vadd.f32 %v784, %v793
          %v821 = vadd.f32 %v785, %v793
          %v822 = vadd.f32 %v786, %v793
          %v823 = vadd.f32 %v787, %v793
          %v824 = vadd.f32 %v788, %v793
          %v825 = vadd.f32 %v789, %v793
          %v826 = vadd.f32 %v790, %v793
          %v827 = vpack.c.bf16 %v795, %v795
          %v828 = vpack.c.bf16 %v796, %v796
          %v829 = vpack.c.bf16 %v797, %v797
          %v830 = vpack.c.bf16 %v798, %v798
          %v831 = vpack.c.bf16 %v799, %v799
          %v832 = vpack.c.bf16 %v800, %v800
          %v833 = vpack.c.bf16 %v801, %v801
          %v834 = vpack.c.bf16 %v802, %v802
          %v835 = vpack.c.bf16 %v803, %v803
          %v836 = vpack.c.bf16 %v804, %v804
          %v837 = vpack.c.bf16 %v805, %v805
          %v838 = vpack.c.bf16 %v806, %v806
          %v839 = vpack.c.bf16 %v807, %v807
          %v840 = vpack.c.bf16 %v808, %v808
          %v841 = vpack.c.bf16 %v809, %v809
          %v842 = vpack.c.bf16 %v810, %v810
          %v843 = vpack.c.bf16 %v811, %v811
          %v844 = vpack.c.bf16 %v812, %v812
          %v845 = vpack.c.bf16 %v813, %v813
          %v846 = vpack.c.bf16 %v814, %v814
          %v847 = vpack.c.bf16 %v815, %v815
          %v848 = vpack.c.bf16 %v816, %v816
          %v849 = vpack.c.bf16 %v817, %v817
          %v850 = vpack.c.bf16 %v818, %v818
          %v851 = vpack.c.bf16 %v819, %v819
          %v852 = vpack.c.bf16 %v820, %v820
          %v853 = vpack.c.bf16 %v821, %v821
          %v854 = vpack.c.bf16 %v822, %v822
          %v855 = vpack.c.bf16 %v823, %v823
          %v856 = vpack.c.bf16 %v824, %v824
          %v857 = vpack.c.bf16 %v825, %v825
          %v858 = vpack.c.bf16 %v826, %v826
          %859 = vst [vmem:[%s328] sm:$0xf] %v827
          %860 = vst [vmem:[%s328 + $0x4] sm:$0xf] %v828
          %861 = vst [vmem:[%s328 + $0x8] sm:$0xf] %v829
          %862 = vst [vmem:[%s328 + $0xc] sm:$0xf] %v830
          %863 = vst [vmem:[%s328 + $0x10] sm:$0xf] %v831
          %864 = vst [vmem:[%s328 + $0x14] sm:$0xf] %v832
          %865 = vst [vmem:[%s328 + $0x18] sm:$0xf] %v833
          %866 = vst [vmem:[%s328 + $0x1c] sm:$0xf] %v834
          %867 = vst [vmem:[%s328 + $0x20] sm:$0xf] %v835
          %868 = vst [vmem:[%s328 + $0x24] sm:$0xf] %v836
          %869 = vst [vmem:[%s328 + $0x28] sm:$0xf] %v837
          %870 = vst [vmem:[%s328 + $0x2c] sm:$0xf] %v838
          %871 = vst [vmem:[%s328 + $0x30] sm:$0xf] %v839
          %872 = vst [vmem:[%s328 + $0x34] sm:$0xf] %v840
          %873 = vst [vmem:[%s328 + $0x38] sm:$0xf] %v841
          %874 = vst [vmem:[%s328 + $0x3c] sm:$0xf] %v842
          %875 = vst [vmem:[%s328 + $0x40] sm:$0xf] %v843
          %876 = vst [vmem:[%s328 + $0x44] sm:$0xf] %v844
          %877 = vst [vmem:[%s328 + $0x48] sm:$0xf] %v845
          %878 = vst [vmem:[%s328 + $0x4c] sm:$0xf] %v846
          %879 = vst [vmem:[%s328 + $0x50] sm:$0xf] %v847
          %880 = vst [vmem:[%s328 + $0x54] sm:$0xf] %v848
          %881 = vst [vmem:[%s328 + $0x58] sm:$0xf] %v849
          %882 = vst [vmem:[%s328 + $0x5c] sm:$0xf] %v850
          %883 = vst [vmem:[%s328 + $0x60] sm:$0xf] %v851
          %884 = vst [vmem:[%s328 + $0x64] sm:$0xf] %v852
          %885 = vst [vmem:[%s328 + $0x68] sm:$0xf] %v853
          %886 = vst [vmem:[%s328 + $0x6c] sm:$0xf] %v854
          %887 = vst [vmem:[%s328 + $0x70] sm:$0xf] %v855
          %888 = vst [vmem:[%s328 + $0x74] sm:$0xf] %v856
          %889 = vst [vmem:[%s328 + $0x78] sm:$0xf] %v857
          %890 = vst [vmem:[%s328 + $0x7c] sm:$0xf] %v858
        $region81: #{attention_forward.3} parent=68 // pred_fallthru
          _
        %s891 = sand.u32 %s125, 1
        %s892 = sand.u32 %s125, 1
        %s893 = smul.addr %s892, 128
        %s894 = scalar_lea.vmem [#allocation4], %s893
        // Predicated region
        $region82: #{attention_forward.3} parent=68 // pred_check
          %p895 = pneg %p135
        $region83: #{attention_forward.3} parent=68 // pred_check_branch
          %897 = sbr.rel (%p895) target = $region85
        $region84: #{attention_forward.3} parent=68 // pred_region
          %s898 = smul.u32 32, %s19
          %s899 = smul.addr %s898, 3
          %s900 = sadd.s32 %s20, %s899
          %s901 = smul.addr %s900, 4
          %s902 = scalar_lea.vmem %s3, %s901
          // Predicated region
          $region86: #{attention_forward.3} parent=84 // pred_check
            _
          $region87: #{attention_forward.3} parent=84 // pred_check_branch
            %904 = sbr.rel (0) target = $region89
          $region88: #{attention_forward.3} parent=84 // pred_region
            // Predicated region
            $region90: #{attention_forward.3} parent=88 // pred_check
              _
            $region91: #{attention_forward.3} parent=88 // pred_check_branch
              %906 = sbr.rel target = $region93
            $region92: #{attention_forward.3} parent=88 // pred_region
              // Predicated region
              $region105: #{attention_forward.3} parent=92 // pred_check
                _
              $region106: #{attention_forward.3} parent=92 // pred_check_branch
                %984 = sbr.rel (0) target = $region108
              $region107: #{attention_forward.3} parent=92 // pred_region
                loop: start=0, step=1, limit=1
                $region109: #{attention_forward.3} parent=107 // loop_pre_header
                  _
                $region110: #{attention_forward.3} parent=107 // loop_header
                  %s986 = sphi 0, %s990
                  %p987 = scmp.ge.s32.totalorder %s986, 1
                  %s991 = sphi %s894, %s894
                  %s992 = sphi %s902, %s902
                $region111: #{attention_forward.3} parent=107 // loop_header_branch
                  %989 = sbr.rel (%p987) target = $region115
                $region112: #{attention_forward.3} parent=107 // loop_body
                  _
                $region113: #{attention_forward.3} parent=107 // loop_footer
                  %s990 = sadd.s32 1, %s986
                $region114: #{attention_forward.3} parent=107 // loop_footer_branch
                  %985 = sbr.rel target = $region110
                $region115: #{attention_forward.3} parent=107 // loop_exit
                  _
                %s994 = ssub.s32 16, 1
                loop: start=0, step=1, limit=1
                $region116: #{attention_forward.3} parent=107 // loop_pre_header
                  _
                $region117: #{attention_forward.3} parent=107 // loop_header
                  %s996 = sphi 0, %s1000
                  %p997 = scmp.ge.s32.totalorder %s996, 1
                  %s1001 = sphi %s894, %s894
                  %s1002 = sphi %s902, %s902
                $region118: #{attention_forward.3} parent=107 // loop_header_branch
                  %999 = sbr.rel (%p997) target = $region122
                $region119: #{attention_forward.3} parent=107 // loop_body
                  %v1003 = vld [vmem:[%s1001] sm:%s994]
                  %1004 = vst [vmem:[%s1002] sm:%s994] %v1003
                  %v1005 = vld [vmem:[%s1001 + $0x4] sm:%s994]
                  %1006 = vst [vmem:[%s1002 + $0xc] sm:%s994] %v1005
                  %v1007 = vld [vmem:[%s1001 + $0x8] sm:%s994]
                  %1008 = vst [vmem:[%s1002 + $0x18] sm:%s994] %v1007
                  %v1009 = vld [vmem:[%s1001 + $0xc] sm:%s994]
                  %1010 = vst [vmem:[%s1002 + $0x24] sm:%s994] %v1009
                  %v1011 = vld [vmem:[%s1001 + $0x10] sm:%s994]
                  %1012 = vst [vmem:[%s1002 + $0x30] sm:%s994] %v1011
                  %v1013 = vld [vmem:[%s1001 + $0x14] sm:%s994]
                  %1014 = vst [vmem:[%s1002 + $0x3c] sm:%s994] %v1013
                  %v1015 = vld [vmem:[%s1001 + $0x18] sm:%s994]
                  %1016 = vst [vmem:[%s1002 + $0x48] sm:%s994] %v1015
                  %v1017 = vld [vmem:[%s1001 + $0x1c] sm:%s994]
                  %1018 = vst [vmem:[%s1002 + $0x54] sm:%s994] %v1017
                  %v1019 = vld [vmem:[%s1001 + $0x20] sm:%s994]
                  %1020 = vst [vmem:[%s1002 + $0x60] sm:%s994] %v1019
                  %v1021 = vld [vmem:[%s1001 + $0x24] sm:%s994]
                  %1022 = vst [vmem:[%s1002 + $0x6c] sm:%s994] %v1021
                  %v1023 = vld [vmem:[%s1001 + $0x28] sm:%s994]
                  %1024 = vst [vmem:[%s1002 + $0x78] sm:%s994] %v1023
                  %v1025 = vld [vmem:[%s1001 + $0x2c] sm:%s994]
                  %1026 = vst [vmem:[%s1002 + $0x84] sm:%s994] %v1025
                  %v1027 = vld [vmem:[%s1001 + $0x30] sm:%s994]
                  %1028 = vst [vmem:[%s1002 + $0x90] sm:%s994] %v1027
                  %v1029 = vld [vmem:[%s1001 + $0x34] sm:%s994]
                  %1030 = vst [vmem:[%s1002 + $0x9c] sm:%s994] %v1029
                  %v1031 = vld [vmem:[%s1001 + $0x38] sm:%s994]
                  %1032 = vst [vmem:[%s1002 + $0xa8] sm:%s994] %v1031
                  %v1033 = vld [vmem:[%s1001 + $0x3c] sm:%s994]
                  %1034 = vst [vmem:[%s1002 + $0xb4] sm:%s994] %v1033
                  %v1035 = vld [vmem:[%s1001 + $0x40] sm:%s994]
                  %1036 = vst [vmem:[%s1002 + $0xc0] sm:%s994] %v1035
                  %v1037 = vld [vmem:[%s1001 + $0x44] sm:%s994]
                  %1038 = vst [vmem:[%s1002 + $0xcc] sm:%s994] %v1037
                  %v1039 = vld [vmem:[%s1001 + $0x48] sm:%s994]
                  %1040 = vst [vmem:[%s1002 + $0xd8] sm:%s994] %v1039
                  %v1041 = vld [vmem:[%s1001 + $0x4c] sm:%s994]
                  %1042 = vst [vmem:[%s1002 + $0xe4] sm:%s994] %v1041
                  %v1043 = vld [vmem:[%s1001 + $0x50] sm:%s994]
                  %1044 = vst [vmem:[%s1002 + $0xf0] sm:%s994] %v1043
                  %v1045 = vld [vmem:[%s1001 + $0x54] sm:%s994]
                  %1046 = vst [vmem:[%s1002 + $0xfc] sm:%s994] %v1045
                  %v1047 = vld [vmem:[%s1001 + $0x58] sm:%s994]
                  %1048 = vst [vmem:[%s1002 + $0x108] sm:%s994] %v1047
                  %v1049 = vld [vmem:[%s1001 + $0x5c] sm:%s994]
                  %1050 = vst [vmem:[%s1002 + $0x114] sm:%s994] %v1049
                  %v1051 = vld [vmem:[%s1001 + $0x60] sm:%s994]
                  %1052 = vst [vmem:[%s1002 + $0x120] sm:%s994] %v1051
                  %v1053 = vld [vmem:[%s1001 + $0x64] sm:%s994]
                  %1054 = vst [vmem:[%s1002 + $0x12c] sm:%s994] %v1053
                  %v1055 = vld [vmem:[%s1001 + $0x68] sm:%s994]
                  %1056 = vst [vmem:[%s1002 + $0x138] sm:%s994] %v1055
                  %v1057 = vld [vmem:[%s1001 + $0x6c] sm:%s994]
                  %1058 = vst [vmem:[%s1002 + $0x144] sm:%s994] %v1057
                  %v1059 = vld [vmem:[%s1001 + $0x70] sm:%s994]
                  %1060 = vst [vmem:[%s1002 + $0x150] sm:%s994] %v1059
                  %v1061 = vld [vmem:[%s1001 + $0x74] sm:%s994]
                  %1062 = vst [vmem:[%s1002 + $0x15c] sm:%s994] %v1061
                  %v1063 = vld [vmem:[%s1001 + $0x78] sm:%s994]
                  %1064 = vst [vmem:[%s1002 + $0x168] sm:%s994] %v1063
                  %v1065 = vld [vmem:[%s1001 + $0x7c] sm:%s994]
                  %1066 = vst [vmem:[%s1002 + $0x174] sm:%s994] %v1065
                $region120: #{attention_forward.3} parent=107 // loop_footer
                  %s1000 = sadd.s32 1, %s996
                $region121: #{attention_forward.3} parent=107 // loop_footer_branch
                  %995 = sbr.rel target = $region117
                $region122: #{attention_forward.3} parent=107 // loop_exit
                  _
              $region108: #{attention_forward.3} parent=92 // pred_fallthru
                _
            $region93: #{attention_forward.3} parent=88 // pred_fallthru
              _
            // Predicated region
            $region94: #{attention_forward.3} parent=88 // pred_check
              _
            $region95: #{attention_forward.3} parent=88 // pred_check_branch
              %908 = sbr.rel (0) target = $region97
            $region96: #{attention_forward.3} parent=88 // pred_region
              %s910 = ssub.s32 16, 1
              loop: start=0, step=1, limit=1
              $region98: #{attention_forward.3} parent=96 // loop_pre_header
                _
              $region99: #{attention_forward.3} parent=96 // loop_header
                %s912 = sphi 0, %s916
                %p913 = scmp.ge.s32.totalorder %s912, 1
                %s917 = sphi %s894, %s894
                %s918 = sphi %s902, %s902
              $region100: #{attention_forward.3} parent=96 // loop_header_branch
                %915 = sbr.rel (%p913) target = $region104
              $region101: #{attention_forward.3} parent=96 // loop_body
                %v919 = vld [vmem:[%s917] sm:%s910]
                %920 = vst [vmem:[%s918] sm:%s910] %v919
                %v921 = vld [vmem:[%s917 + $0x4] sm:%s910]
                %922 = vst [vmem:[%s918 + $0xc] sm:%s910] %v921
                %v923 = vld [vmem:[%s917 + $0x8] sm:%s910]
                %924 = vst [vmem:[%s918 + $0x18] sm:%s910] %v923
                %v925 = vld [vmem:[%s917 + $0xc] sm:%s910]
                %926 = vst [vmem:[%s918 + $0x24] sm:%s910] %v925
                %v927 = vld [vmem:[%s917 + $0x10] sm:%s910]
                %928 = vst [vmem:[%s918 + $0x30] sm:%s910] %v927
                %v929 = vld [vmem:[%s917 + $0x14] sm:%s910]
                %930 = vst [vmem:[%s918 + $0x3c] sm:%s910] %v929
                %v931 = vld [vmem:[%s917 + $0x18] sm:%s910]
                %932 = vst [vmem:[%s918 + $0x48] sm:%s910] %v931
                %v933 = vld [vmem:[%s917 + $0x1c] sm:%s910]
                %934 = vst [vmem:[%s918 + $0x54] sm:%s910] %v933
                %v935 = vld [vmem:[%s917 + $0x20] sm:%s910]
                %936 = vst [vmem:[%s918 + $0x60] sm:%s910] %v935
                %v937 = vld [vmem:[%s917 + $0x24] sm:%s910]
                %938 = vst [vmem:[%s918 + $0x6c] sm:%s910] %v937
                %v939 = vld [vmem:[%s917 + $0x28] sm:%s910]
                %940 = vst [vmem:[%s918 + $0x78] sm:%s910] %v939
                %v941 = vld [vmem:[%s917 + $0x2c] sm:%s910]
                %942 = vst [vmem:[%s918 + $0x84] sm:%s910] %v941
                %v943 = vld [vmem:[%s917 + $0x30] sm:%s910]
                %944 = vst [vmem:[%s918 + $0x90] sm:%s910] %v943
                %v945 = vld [vmem:[%s917 + $0x34] sm:%s910]
                %946 = vst [vmem:[%s918 + $0x9c] sm:%s910] %v945
                %v947 = vld [vmem:[%s917 + $0x38] sm:%s910]
                %948 = vst [vmem:[%s918 + $0xa8] sm:%s910] %v947
                %v949 = vld [vmem:[%s917 + $0x3c] sm:%s910]
                %950 = vst [vmem:[%s918 + $0xb4] sm:%s910] %v949
                %v951 = vld [vmem:[%s917 + $0x40] sm:%s910]
                %952 = vst [vmem:[%s918 + $0xc0] sm:%s910] %v951
                %v953 = vld [vmem:[%s917 + $0x44] sm:%s910]
                %954 = vst [vmem:[%s918 + $0xcc] sm:%s910] %v953
                %v955 = vld [vmem:[%s917 + $0x48] sm:%s910]
                %956 = vst [vmem:[%s918 + $0xd8] sm:%s910] %v955
                %v957 = vld [vmem:[%s917 + $0x4c] sm:%s910]
                %958 = vst [vmem:[%s918 + $0xe4] sm:%s910] %v957
                %v959 = vld [vmem:[%s917 + $0x50] sm:%s910]
                %960 = vst [vmem:[%s918 + $0xf0] sm:%s910] %v959
                %v961 = vld [vmem:[%s917 + $0x54] sm:%s910]
                %962 = vst [vmem:[%s918 + $0xfc] sm:%s910] %v961
                %v963 = vld [vmem:[%s917 + $0x58] sm:%s910]
                %964 = vst [vmem:[%s918 + $0x108] sm:%s910] %v963
                %v965 = vld [vmem:[%s917 + $0x5c] sm:%s910]
                %966 = vst [vmem:[%s918 + $0x114] sm:%s910] %v965
                %v967 = vld [vmem:[%s917 + $0x60] sm:%s910]
                %968 = vst [vmem:[%s918 + $0x120] sm:%s910] %v967
                %v969 = vld [vmem:[%s917 + $0x64] sm:%s910]
                %970 = vst [vmem:[%s918 + $0x12c] sm:%s910] %v969
                %v971 = vld [vmem:[%s917 + $0x68] sm:%s910]
                %972 = vst [vmem:[%s918 + $0x138] sm:%s910] %v971
                %v973 = vld [vmem:[%s917 + $0x6c] sm:%s910]
                %974 = vst [vmem:[%s918 + $0x144] sm:%s910] %v973
                %v975 = vld [vmem:[%s917 + $0x70] sm:%s910]
                %976 = vst [vmem:[%s918 + $0x150] sm:%s910] %v975
                %v977 = vld [vmem:[%s917 + $0x74] sm:%s910]
                %978 = vst [vmem:[%s918 + $0x15c] sm:%s910] %v977
                %v979 = vld [vmem:[%s917 + $0x78] sm:%s910]
                %980 = vst [vmem:[%s918 + $0x168] sm:%s910] %v979
                %v981 = vld [vmem:[%s917 + $0x7c] sm:%s910]
                %982 = vst [vmem:[%s918 + $0x174] sm:%s910] %v981
              $region102: #{attention_forward.3} parent=96 // loop_footer
                %s916 = sadd.s32 1, %s912
              $region103: #{attention_forward.3} parent=96 // loop_footer_branch
                %911 = sbr.rel target = $region99
              $region104: #{attention_forward.3} parent=96 // loop_exit
                _
            $region97: #{attention_forward.3} parent=88 // pred_fallthru
              _
          $region89: #{attention_forward.3} parent=84 // pred_fallthru
            _
          %1067 = vnop
        $region85: #{attention_forward.3} parent=68 // pred_fallthru
          _
      $region69: #{attention_forward.3} parent=5 // pred_fallthru
        _
      %p1068 = scmp.le.s32.totalorder 2, %s9
      // Predicated region
      $region123: #{attention_forward.3} parent=5 // pred_check
        %p1069 = pneg %p1068
      $region124: #{attention_forward.3} parent=5 // pred_check_branch
        %1071 = sbr.rel (%p1069) target = $region126
      $region125: #{attention_forward.3} parent=5 // pred_region
        %s1072 = ssub.s32 %s9, 2
        // Predicated region
        $region127: #{attention_forward.3} parent=125 // pred_check
          %p1073 = pneg %p141
        $region128: #{attention_forward.3} parent=125 // pred_check_branch
          %1075 = sbr.rel (%p1073) target = $region130
        $region129: #{attention_forward.3} parent=125 // pred_region
          %s1076 = sand.u32 %s126, 1
          %s1077 = sand.u32 %s126, 1
          %s1078 = smul.addr %s1077, 128
          %s1079 = scalar_lea.vmem [#allocation4], %s1078
        $region130: #{attention_forward.3} parent=125 // pred_fallthru
          _
      $region126: #{attention_forward.3} parent=5 // pred_fallthru
        _
    $region6: #{attention_forward.3} parent=1 // loop_footer
      %s13 = sadd.s32 1, %s9
    $region7: #{attention_forward.3} parent=1 // loop_footer_branch
      %8 = sbr.rel target = $region3
    $region8: #{attention_forward.3} parent=1 // loop_exit
      _

// kernel: attention_forward.5
$region0: #{attention_forward.5}
  #allocation0 [shape = 'u32[]', space=smem, size = 0x4, offset = 0x4, fixed_abs, tag = 'smem constant byte address 0x4 - core index']
  #allocation1 [shape = 'u32[72,128]{1,0:T(1,128)}', space=vmem, size = 0x9000, scoped, tag = 'internal scratch']
  #allocation2 [shape = 'f32[256,128]{1,0:T(8,128)}', space=vmem, size = 0x20000, scoped, tag = 'scratch operand']
  %s0 = inlined_call_operand.vmem [shape: bf16[256,128], index: 0, kind: input, shape index: {}]
  %s1 = inlined_call_operand.vmem [shape: bf16[128,128], index: 1, kind: input, shape index: {}]
  %s2 = inlined_call_operand.vmem [shape: f32[1,128], index: 2, kind: input, shape index: {}]
  %s3 = inlined_call_operand.vmem [shape: f32[256,128], index: 3, kind: output, shape index: {}]
  %s4 = sld [smem:[#allocation0]]
  $region30: #{attention_forward.5} parent=0
    _
  %s6 = ssub.s32 1, %s4
  %s7 = scalar_select 0, %s6, %s4
  // Predicated region
  $region2: #{attention_forward.5} parent=0 // pred_check
    _
  $region3: #{attention_forward.5} parent=0 // pred_check_branch
    %9 = sbr.rel (0) target = $region5
  $region4: #{attention_forward.5} parent=0 // pred_region
    _
  $region5: #{attention_forward.5} parent=0 // pred_fallthru
    _
  // Predicated region
  $region6: #{attention_forward.5} parent=0 // pred_check
    _
  $region7: #{attention_forward.5} parent=0 // pred_check_branch
    %11 = sbr.rel (0) target = $region9
  $region8: #{attention_forward.5} parent=0 // pred_region
    _
  $region9: #{attention_forward.5} parent=0 // pred_fallthru
    _
  // Predicated region
  $region10: #{attention_forward.5} parent=0 // pred_check
    _
  $region11: #{attention_forward.5} parent=0 // pred_check_branch
    %13 = sbr.rel (0) target = $region13
  $region12: #{attention_forward.5} parent=0 // pred_region
    _
  $region13: #{attention_forward.5} parent=0 // pred_fallthru
    _
  %p14 = scmp.eq.s32.totalorder 0, 0
  // Predicated region
  $region14: #{attention_forward.5} parent=0 // pred_check
    %p15 = pneg %p14
  $region15: #{attention_forward.5} parent=0 // pred_check_branch
    %17 = sbr.rel (%p15) target = $region17
  $region16: #{attention_forward.5} parent=0 // pred_region
    %18 = vst [vmem:[#allocation2] sm:$0xff] 0.0
    %19 = vst [vmem:[#allocation2 + $0x8] sm:$0xff] 0.0
    %20 = vst [vmem:[#allocation2 + $0x10] sm:$0xff] 0.0
    %21 = vst [vmem:[#allocation2 + $0x18] sm:$0xff] 0.0
    %22 = vst [vmem:[#allocation2 + $0x20] sm:$0xff] 0.0
    %23 = vst [vmem:[#allocation2 + $0x28] sm:$0xff] 0.0
    %24 = vst [vmem:[#allocation2 + $0x30] sm:$0xff] 0.0
    %25 = vst [vmem:[#allocation2 + $0x38] sm:$0xff] 0.0
    %26 = vst [vmem:[#allocation2 + $0x40] sm:$0xff] 0.0
    %27 = vst [vmem:[#allocation2 + $0x48] sm:$0xff] 0.0
    %28 = vst [vmem:[#allocation2 + $0x50] sm:$0xff] 0.0
    %29 = vst [vmem:[#allocation2 + $0x58] sm:$0xff] 0.0
    %30 = vst [vmem:[#allocation2 + $0x60] sm:$0xff] 0.0
    %31 = vst [vmem:[#allocation2 + $0x68] sm:$0xff] 0.0
    %32 = vst [vmem:[#allocation2 + $0x70] sm:$0xff] 0.0
    %33 = vst [vmem:[#allocation2 + $0x78] sm:$0xff] 0.0
    %34 = vst [vmem:[#allocation2 + $0x80] sm:$0xff] 0.0
    %35 = vst [vmem:[#allocation2 + $0x88] sm:$0xff] 0.0
    %36 = vst [vmem:[#allocation2 + $0x90] sm:$0xff] 0.0
    %37 = vst [vmem:[#allocation2 + $0x98] sm:$0xff] 0.0
    %38 = vst [vmem:[#allocation2 + $0xa0] sm:$0xff] 0.0
    %39 = vst [vmem:[#allocation2 + $0xa8] sm:$0xff] 0.0
    %40 = vst [vmem:[#allocation2 + $0xb0] sm:$0xff] 0.0
    %41 = vst [vmem:[#allocation2 + $0xb8] sm:$0xff] 0.0
    %42 = vst [vmem:[#allocation2 + $0xc0] sm:$0xff] 0.0
    %43 = vst [vmem:[#allocation2 + $0xc8] sm:$0xff] 0.0
    %44 = vst [vmem:[#allocation2 + $0xd0] sm:$0xff] 0.0
    %45 = vst [vmem:[#allocation2 + $0xd8] sm:$0xff] 0.0
    %46 = vst [vmem:[#allocation2 + $0xe0] sm:$0xff] 0.0
    %47 = vst [vmem:[#allocation2 + $0xe8] sm:$0xff] 0.0
    %48 = vst [vmem:[#allocation2 + $0xf0] sm:$0xff] 0.0
    %49 = vst [vmem:[#allocation2 + $0xf8] sm:$0xff] 0.0
  $region17: #{attention_forward.5} parent=0 // pred_fallthru
    _
  %v50 = vld [vmem:[#allocation2] sm:$0xff]
  %v51 = vld [vmem:[#allocation2 + $0x8] sm:$0xff]
  %v52 = vld [vmem:[#allocation2 + $0x10] sm:$0xff]
  %v53 = vld [vmem:[#allocation2 + $0x18] sm:$0xff]
  %v54 = vld [vmem:[#allocation2 + $0x20] sm:$0xff]
  %v55 = vld [vmem:[#allocation2 + $0x28] sm:$0xff]
  %v56 = vld [vmem:[#allocation2 + $0x30] sm:$0xff]
  %v57 = vld [vmem:[#allocation2 + $0x38] sm:$0xff]
  %v58 = vld [vmem:[#allocation2 + $0x40] sm:$0xff]
  %v59 = vld [vmem:[#allocation2 + $0x48] sm:$0xff]
  %v60 = vld [vmem:[#allocation2 + $0x50] sm:$0xff]
  %v61 = vld [vmem:[#allocation2 + $0x58] sm:$0xff]
  %v62 = vld [vmem:[#allocation2 + $0x60] sm:$0xff]
  %v63 = vld [vmem:[#allocation2 + $0x68] sm:$0xff]
  %v64 = vld [vmem:[#allocation2 + $0x70] sm:$0xff]
  %v65 = vld [vmem:[#allocation2 + $0x78] sm:$0xff]
  %v66 = vld [vmem:[#allocation2 + $0x80] sm:$0xff]
  %v67 = vld [vmem:[#allocation2 + $0x88] sm:$0xff]
  %v68 = vld [vmem:[#allocation2 + $0x90] sm:$0xff]
  %v69 = vld [vmem:[#allocation2 + $0x98] sm:$0xff]
  %v70 = vld [vmem:[#allocation2 + $0xa0] sm:$0xff]
  %v71 = vld [vmem:[#allocation2 + $0xa8] sm:$0xff]
  %v72 = vld [vmem:[#allocation2 + $0xb0] sm:$0xff]
  %v73 = vld [vmem:[#allocation2 + $0xb8] sm:$0xff]
  %v74 = vld [vmem:[#allocation2 + $0xc0] sm:$0xff]
  %v75 = vld [vmem:[#allocation2 + $0xc8] sm:$0xff]
  %v76 = vld [vmem:[#allocation2 + $0xd0] sm:$0xff]
  %v77 = vld [vmem:[#allocation2 + $0xd8] sm:$0xff]
  %v78 = vld [vmem:[#allocation2 + $0xe0] sm:$0xff]
  %v79 = vld [vmem:[#allocation2 + $0xe8] sm:$0xff]
  %v80 = vld [vmem:[#allocation2 + $0xf0] sm:$0xff]
  %v81 = vld [vmem:[#allocation2 + $0xf8] sm:$0xff]
  %v82 = vld [vmem:[%s0] sm:$0xf]
  %v83 = vld [vmem:[%s0 + $0x4] sm:$0xf]
  %v84 = vld [vmem:[%s0 + $0x8] sm:$0xf]
  %v85 = vld [vmem:[%s0 + $0xc] sm:$0xf]
  %v86 = vld [vmem:[%s0 + $0x10] sm:$0xf]
  %v87 = vld [vmem:[%s0 + $0x14] sm:$0xf]
  %v88 = vld [vmem:[%s0 + $0x18] sm:$0xf]
  %v89 = vld [vmem:[%s0 + $0x1c] sm:$0xf]
  %v90 = vld [vmem:[%s0 + $0x20] sm:$0xf]
  %v91 = vld [vmem:[%s0 + $0x24] sm:$0xf]
  %v92 = vld [vmem:[%s0 + $0x28] sm:$0xf]
  %v93 = vld [vmem:[%s0 + $0x2c] sm:$0xf]
  %v94 = vld [vmem:[%s0 + $0x30] sm:$0xf]
  %v95 = vld [vmem:[%s0 + $0x34] sm:$0xf]
  %v96 = vld [vmem:[%s0 + $0x38] sm:$0xf]
  %v97 = vld [vmem:[%s0 + $0x3c] sm:$0xf]
  %v98 = vld [vmem:[%s0 + $0x40] sm:$0xf]
  %v99 = vld [vmem:[%s0 + $0x44] sm:$0xf]
  %v100 = vld [vmem:[%s0 + $0x48] sm:$0xf]
  %v101 = vld [vmem:[%s0 + $0x4c] sm:$0xf]
  %v102 = vld [vmem:[%s0 + $0x50] sm:$0xf]
  %v103 = vld [vmem:[%s0 + $0x54] sm:$0xf]
  %v104 = vld [vmem:[%s0 + $0x58] sm:$0xf]
  %v105 = vld [vmem:[%s0 + $0x5c] sm:$0xf]
  %v106 = vld [vmem:[%s0 + $0x60] sm:$0xf]
  %v107 = vld [vmem:[%s0 + $0x64] sm:$0xf]
  %v108 = vld [vmem:[%s0 + $0x68] sm:$0xf]
  %v109 = vld [vmem:[%s0 + $0x6c] sm:$0xf]
  %v110 = vld [vmem:[%s0 + $0x70] sm:$0xf]
  %v111 = vld [vmem:[%s0 + $0x74] sm:$0xf]
  %v112 = vld [vmem:[%s0 + $0x78] sm:$0xf]
  %v113 = vld [vmem:[%s0 + $0x7c] sm:$0xf]
  %v114 = vld [vmem:[%s1] sm:$0xf]
  %v115 = vld [vmem:[%s1 + $0x4] sm:$0xf]
  %v116 = vld [vmem:[%s1 + $0x8] sm:$0xf]
  %v117 = vld [vmem:[%s1 + $0xc] sm:$0xf]
  %v118 = vld [vmem:[%s1 + $0x10] sm:$0xf]
  %v119 = vld [vmem:[%s1 + $0x14] sm:$0xf]
  %v120 = vld [vmem:[%s1 + $0x18] sm:$0xf]
  %v121 = vld [vmem:[%s1 + $0x1c] sm:$0xf]
  %v122 = vld [vmem:[%s1 + $0x20] sm:$0xf]
  %v123 = vld [vmem:[%s1 + $0x24] sm:$0xf]
  %v124 = vld [vmem:[%s1 + $0x28] sm:$0xf]
  %v125 = vld [vmem:[%s1 + $0x2c] sm:$0xf]
  %v126 = vld [vmem:[%s1 + $0x30] sm:$0xf]
  %v127 = vld [vmem:[%s1 + $0x34] sm:$0xf]
  %v128 = vld [vmem:[%s1 + $0x38] sm:$0xf]
  %v129 = vld [vmem:[%s1 + $0x3c] sm:$0xf]
  %v162 = vunpack.c.l.b16 %v82
  %v163 = vunpack.c.l.b16 %v83
  %v164 = vunpack.c.l.b16 %v84
  %v165 = vunpack.c.l.b16 %v85
  %v166 = vunpack.c.l.b16 %v86
  %v167 = vunpack.c.l.b16 %v87
  %v168 = vunpack.c.l.b16 %v88
  %v169 = vunpack.c.l.b16 %v89
  %v170 = vunpack.c.l.b16 %v90
  %v171 = vunpack.c.l.b16 %v91
  %v172 = vunpack.c.l.b16 %v92
  %v173 = vunpack.c.l.b16 %v93
  %v174 = vunpack.c.l.b16 %v94
  %v175 = vunpack.c.l.b16 %v95
  %v176 = vunpack.c.l.b16 %v96
  %v177 = vunpack.c.l.b16 %v97
  %v178 = vunpack.c.l.b16 %v98
  %v179 = vunpack.c.l.b16 %v99
  %v180 = vunpack.c.l.b16 %v100
  %v181 = vunpack.c.l.b16 %v101
  %v182 = vunpack.c.l.b16 %v102
  %v183 = vunpack.c.l.b16 %v103
  %v184 = vunpack.c.l.b16 %v104
  %v185 = vunpack.c.l.b16 %v105
  %v186 = vunpack.c.l.b16 %v106
  %v187 = vunpack.c.l.b16 %v107
  %v188 = vunpack.c.l.b16 %v108
  %v189 = vunpack.c.l.b16 %v109
  %v190 = vunpack.c.l.b16 %v110
  %v191 = vunpack.c.l.b16 %v111
  %v192 = vunpack.c.l.b16 %v112
  %v193 = vunpack.c.l.b16 %v113
  %v194 = vpack.c.b16 %v163, %v162
  %v195 = vpack.c.b16 %v165, %v164
  %v196 = vpack.c.b16 %v167, %v166
  %v197 = vpack.c.b16 %v169, %v168
  %v198 = vpack.c.b16 %v171, %v170
  %v199 = vpack.c.b16 %v173, %v172
  %v200 = vpack.c.b16 %v175, %v174
  %v201 = vpack.c.b16 %v177, %v176
  %v202 = vpack.c.b16 %v179, %v178
  %v203 = vpack.c.b16 %v181, %v180
  %v204 = vpack.c.b16 %v183, %v182
  %v205 = vpack.c.b16 %v185, %v184
  %v206 = vpack.c.b16 %v187, %v186
  %v207 = vpack.c.b16 %v189, %v188
  %v208 = vpack.c.b16 %v191, %v190
  %v209 = vpack.c.b16 %v193, %v192
  %v242 = vunpack.c.l.b16 %v114
  %v243 = vunpack.c.l.b16 %v115
  %v244 = vunpack.c.l.b16 %v116
  %v245 = vunpack.c.l.b16 %v117
  %v246 = vunpack.c.l.b16 %v118
  %v247 = vunpack.c.l.b16 %v119
  %v248 = vunpack.c.l.b16 %v120
  %v249 = vunpack.c.l.b16 %v121
  %v250 = vunpack.c.l.b16 %v122
  %v251 = vunpack.c.l.b16 %v123
  %v252 = vunpack.c.l.b16 %v124
  %v253 = vunpack.c.l.b16 %v125
  %v254 = vunpack.c.l.b16 %v126
  %v255 = vunpack.c.l.b16 %v127
  %v256 = vunpack.c.l.b16 %v128
  %v257 = vunpack.c.l.b16 %v129
  %v258 = vpack.c.b16 %v243, %v242
  %v259 = vpack.c.b16 %v245, %v244
  %v260 = vpack.c.b16 %v247, %v246
  %v261 = vpack.c.b16 %v249, %v248
  %v262 = vpack.c.b16 %v251, %v250
  %v263 = vpack.c.b16 %v253, %v252
  %v264 = vpack.c.b16 %v255, %v254
  %v265 = vpack.c.b16 %v257, %v256
  %274 = vmatpush.bf16.msra.mxu0 %v265
  %275 = vmatpush.bf16.msra.mxu0 %v264
  %276 = vmatpush.bf16.msra.mxu0 %v263
  %277 = vmatpush.bf16.msra.mxu0 %v262
  %278 = vmatpush.bf16.msra.mxu0 %v261
  %279 = vmatpush.bf16.msra.mxu0 %v260
  %280 = vmatpush.bf16.msra.mxu0 %v259
  %281 = vmatpush.bf16.msra.mxu0 %v258
  %282 = vmatmul.bf16.gmra.mxu0 %v194
  %v283 = vpop.f32.mrf.mxu0
  %v284 = vadd.f32 0.0, %v283
  %v285 = vpop.f32.mrf.mxu0
  %v286 = vadd.f32 0.0, %v285
  %287 = vmatmul.bf16.gmra.mxu0 %v195
  %v288 = vpop.f32.mrf.mxu0
  %v289 = vadd.f32 0.0, %v288
  %v290 = vpop.f32.mrf.mxu0
  %v291 = vadd.f32 0.0, %v290
  %292 = vmatmul.bf16.gmra.mxu0 %v196
  %v293 = vpop.f32.mrf.mxu0
  %v294 = vadd.f32 0.0, %v293
  %v295 = vpop.f32.mrf.mxu0
  %v296 = vadd.f32 0.0, %v295
  %297 = vmatmul.bf16.gmra.mxu0 %v197
  %v298 = vpop.f32.mrf.mxu0
  %v299 = vadd.f32 0.0, %v298
  %v300 = vpop.f32.mrf.mxu0
  %v301 = vadd.f32 0.0, %v300
  %302 = vmatmul.bf16.gmra.mxu0 %v198
  %v303 = vpop.f32.mrf.mxu0
  %v304 = vadd.f32 0.0, %v303
  %v305 = vpop.f32.mrf.mxu0
  %v306 = vadd.f32 0.0, %v305
  %307 = vmatmul.bf16.gmra.mxu0 %v199
  %v308 = vpop.f32.mrf.mxu0
  %v309 = vadd.f32 0.0, %v308
  %v310 = vpop.f32.mrf.mxu0
  %v311 = vadd.f32 0.0, %v310
  %312 = vmatmul.bf16.gmra.mxu0 %v200
  %v313 = vpop.f32.mrf.mxu0
  %v314 = vadd.f32 0.0, %v313
  %v315 = vpop.f32.mrf.mxu0
  %v316 = vadd.f32 0.0, %v315
  %317 = vmatmul.bf16.gmra.mxu0 %v201
  %v318 = vpop.f32.mrf.mxu0
  %v319 = vadd.f32 0.0, %v318
  %v320 = vpop.f32.mrf.mxu0
  %v321 = vadd.f32 0.0, %v320
  %322 = vmatmul.bf16.gmra.mxu0 %v202
  %v323 = vpop.f32.mrf.mxu0
  %v324 = vadd.f32 0.0, %v323
  %v325 = vpop.f32.mrf.mxu0
  %v326 = vadd.f32 0.0, %v325
  %327 = vmatmul.bf16.gmra.mxu0 %v203
  %v328 = vpop.f32.mrf.mxu0
  %v329 = vadd.f32 0.0, %v328
  %v330 = vpop.f32.mrf.mxu0
  %v331 = vadd.f32 0.0, %v330
  %332 = vmatmul.bf16.gmra.mxu0 %v204
  %v333 = vpop.f32.mrf.mxu0
  %v334 = vadd.f32 0.0, %v333
  %v335 = vpop.f32.mrf.mxu0
  %v336 = vadd.f32 0.0, %v335
  %337 = vmatmul.bf16.gmra.mxu0 %v205
  %v338 = vpop.f32.mrf.mxu0
  %v339 = vadd.f32 0.0, %v338
  %v340 = vpop.f32.mrf.mxu0
  %v341 = vadd.f32 0.0, %v340
  %342 = vmatmul.bf16.gmra.mxu0 %v206
  %v343 = vpop.f32.mrf.mxu0
  %v344 = vadd.f32 0.0, %v343
  %v345 = vpop.f32.mrf.mxu0
  %v346 = vadd.f32 0.0, %v345
  %347 = vmatmul.bf16.gmra.mxu0 %v207
  %v348 = vpop.f32.mrf.mxu0
  %v349 = vadd.f32 0.0, %v348
  %v350 = vpop.f32.mrf.mxu0
  %v351 = vadd.f32 0.0, %v350
  %352 = vmatmul.bf16.gmra.mxu0 %v208
  %v353 = vpop.f32.mrf.mxu0
  %v354 = vadd.f32 0.0, %v353
  %v355 = vpop.f32.mrf.mxu0
  %v356 = vadd.f32 0.0, %v355
  %357 = vmatmul.bf16.gmra.mxu0 %v209
  %v358 = vpop.f32.mrf.mxu0
  %v359 = vadd.f32 0.0, %v358
  %v360 = vpop.f32.mrf.mxu0
  %v361 = vadd.f32 0.0, %v360
  %362 = vdwg.mxu0
  %v363 = vadd.f32 %v50, %v284
  %v364 = vadd.f32 %v51, %v286
  %v365 = vadd.f32 %v52, %v289
  %v366 = vadd.f32 %v53, %v291
  %v367 = vadd.f32 %v54, %v294
  %v368 = vadd.f32 %v55, %v296
  %v369 = vadd.f32 %v56, %v299
  %v370 = vadd.f32 %v57, %v301
  %v371 = vadd.f32 %v58, %v304
  %v372 = vadd.f32 %v59, %v306
  %v373 = vadd.f32 %v60, %v309
  %v374 = vadd.f32 %v61, %v311
  %v375 = vadd.f32 %v62, %v314
  %v376 = vadd.f32 %v63, %v316
  %v377 = vadd.f32 %v64, %v319
  %v378 = vadd.f32 %v65, %v321
  %v379 = vadd.f32 %v66, %v324
  %v380 = vadd.f32 %v67, %v326
  %v381 = vadd.f32 %v68, %v329
  %v382 = vadd.f32 %v69, %v331
  %v383 = vadd.f32 %v70, %v334
  %v384 = vadd.f32 %v71, %v336
  %v385 = vadd.f32 %v72, %v339
  %v386 = vadd.f32 %v73, %v341
  %v387 = vadd.f32 %v74, %v344
  %v388 = vadd.f32 %v75, %v346
  %v389 = vadd.f32 %v76, %v349
  %v390 = vadd.f32 %v77, %v351
  %v391 = vadd.f32 %v78, %v354
  %v392 = vadd.f32 %v79, %v356
  %v393 = vadd.f32 %v80, %v359
  %v394 = vadd.f32 %v81, %v361
  %395 = vst [vmem:[#allocation2] sm:$0xff] %v363
  %396 = vst [vmem:[#allocation2 + $0x8] sm:$0xff] %v364
  %397 = vst [vmem:[#allocation2 + $0x10] sm:$0xff] %v365
  %398 = vst [vmem:[#allocation2 + $0x18] sm:$0xff] %v366
  %399 = vst [vmem:[#allocation2 + $0x20] sm:$0xff] %v367
  %400 = vst [vmem:[#allocation2 + $0x28] sm:$0xff] %v368
  %401 = vst [vmem:[#allocation2 + $0x30] sm:$0xff] %v369
  %402 = vst [vmem:[#allocation2 + $0x38] sm:$0xff] %v370
  %403 = vst [vmem:[#allocation2 + $0x40] sm:$0xff] %v371
  %404 = vst [vmem:[#allocation2 + $0x48] sm:$0xff] %v372
  %405 = vst [vmem:[#allocation2 + $0x50] sm:$0xff] %v373
  %406 = vst [vmem:[#allocation2 + $0x58] sm:$0xff] %v374
  %407 = vst [vmem:[#allocation2 + $0x60] sm:$0xff] %v375
  %408 = vst [vmem:[#allocation2 + $0x68] sm:$0xff] %v376
  %409 = vst [vmem:[#allocation2 + $0x70] sm:$0xff] %v377
  %410 = vst [vmem:[#allocation2 + $0x78] sm:$0xff] %v378
  %411 = vst [vmem:[#allocation2 + $0x80] sm:$0xff] %v379
  %412 = vst [vmem:[#allocation2 + $0x88] sm:$0xff] %v380
  %413 = vst [vmem:[#allocation2 + $0x90] sm:$0xff] %v381
  %414 = vst [vmem:[#allocation2 + $0x98] sm:$0xff] %v382
  %415 = vst [vmem:[#allocation2 + $0xa0] sm:$0xff] %v383
  %416 = vst [vmem:[#allocation2 + $0xa8] sm:$0xff] %v384
  %417 = vst [vmem:[#allocation2 + $0xb0] sm:$0xff] %v385
  %418 = vst [vmem:[#allocation2 + $0xb8] sm:$0xff] %v386
  %419 = vst [vmem:[#allocation2 + $0xc0] sm:$0xff] %v387
  %420 = vst [vmem:[#allocation2 + $0xc8] sm:$0xff] %v388
  %421 = vst [vmem:[#allocation2 + $0xd0] sm:$0xff] %v389
  %422 = vst [vmem:[#allocation2 + $0xd8] sm:$0xff] %v390
  %423 = vst [vmem:[#allocation2 + $0xe0] sm:$0xff] %v391
  %424 = vst [vmem:[#allocation2 + $0xe8] sm:$0xff] %v392
  %425 = vst [vmem:[#allocation2 + $0xf0] sm:$0xff] %v393
  %426 = vst [vmem:[#allocation2 + $0xf8] sm:$0xff] %v394
  // Predicated region
  $region18: #{attention_forward.5} parent=0 // pred_check
    %p427 = pneg %p14
  $region19: #{attention_forward.5} parent=0 // pred_check_branch
    %429 = sbr.rel (%p427) target = $region21
  $region20: #{attention_forward.5} parent=0 // pred_region
    %v430 = vld [vmem:[#allocation2] sm:$0xff]
    %v431 = vld [vmem:[#allocation2 + $0x8] sm:$0xff]
    %v432 = vld [vmem:[#allocation2 + $0x10] sm:$0xff]
    %v433 = vld [vmem:[#allocation2 + $0x18] sm:$0xff]
    %v434 = vld [vmem:[#allocation2 + $0x20] sm:$0xff]
    %v435 = vld [vmem:[#allocation2 + $0x28] sm:$0xff]
    %v436 = vld [vmem:[#allocation2 + $0x30] sm:$0xff]
    %v437 = vld [vmem:[#allocation2 + $0x38] sm:$0xff]
    %v438 = vld [vmem:[#allocation2 + $0x40] sm:$0xff]
    %v439 = vld [vmem:[#allocation2 + $0x48] sm:$0xff]
    %v440 = vld [vmem:[#allocation2 + $0x50] sm:$0xff]
    %v441 = vld [vmem:[#allocation2 + $0x58] sm:$0xff]
    %v442 = vld [vmem:[#allocation2 + $0x60] sm:$0xff]
    %v443 = vld [vmem:[#allocation2 + $0x68] sm:$0xff]
    %v444 = vld [vmem:[#allocation2 + $0x70] sm:$0xff]
    %v445 = vld [vmem:[#allocation2 + $0x78] sm:$0xff]
    %v446 = vld [vmem:[#allocation2 + $0x80] sm:$0xff]
    %v447 = vld [vmem:[#allocation2 + $0x88] sm:$0xff]
    %v448 = vld [vmem:[#allocation2 + $0x90] sm:$0xff]
    %v449 = vld [vmem:[#allocation2 + $0x98] sm:$0xff]
    %v450 = vld [vmem:[#allocation2 + $0xa0] sm:$0xff]
    %v451 = vld [vmem:[#allocation2 + $0xa8] sm:$0xff]
    %v452 = vld [vmem:[#allocation2 + $0xb0] sm:$0xff]
    %v453 = vld [vmem:[#allocation2 + $0xb8] sm:$0xff]
    %v454 = vld [vmem:[#allocation2 + $0xc0] sm:$0xff]
    %v455 = vld [vmem:[#allocation2 + $0xc8] sm:$0xff]
    %v456 = vld [vmem:[#allocation2 + $0xd0] sm:$0xff]
    %v457 = vld [vmem:[#allocation2 + $0xd8] sm:$0xff]
    %v458 = vld [vmem:[#allocation2 + $0xe0] sm:$0xff]
    %v459 = vld [vmem:[#allocation2 + $0xe8] sm:$0xff]
    %v460 = vld [vmem:[#allocation2 + $0xf0] sm:$0xff]
    %v461 = vld [vmem:[#allocation2 + $0xf8] sm:$0xff]
    %v462 = vld [vmem:[%s2] sm:$0x1]
    %v464 = vperm.slane %v462, 0
    %v466 = vadd.f32 %v430, %v464
    %v467 = vadd.f32 %v431, %v464
    %v468 = vadd.f32 %v432, %v464
    %v469 = vadd.f32 %v433, %v464
    %v470 = vadd.f32 %v434, %v464
    %v471 = vadd.f32 %v435, %v464
    %v472 = vadd.f32 %v436, %v464
    %v473 = vadd.f32 %v437, %v464
    %v474 = vadd.f32 %v438, %v464
    %v475 = vadd.f32 %v439, %v464
    %v476 = vadd.f32 %v440, %v464
    %v477 = vadd.f32 %v441, %v464
    %v478 = vadd.f32 %v442, %v464
    %v479 = vadd.f32 %v443, %v464
    %v480 = vadd.f32 %v444, %v464
    %v481 = vadd.f32 %v445, %v464
    %v482 = vadd.f32 %v446, %v464
    %v483 = vadd.f32 %v447, %v464
    %v484 = vadd.f32 %v448, %v464
    %v485 = vadd.f32 %v449, %v464
    %v486 = vadd.f32 %v450, %v464
    %v487 = vadd.f32 %v451, %v464
    %v488 = vadd.f32 %v452, %v464
    %v489 = vadd.f32 %v453, %v464
    %v490 = vadd.f32 %v454, %v464
    %v491 = vadd.f32 %v455, %v464
    %v492 = vadd.f32 %v456, %v464
    %v493 = vadd.f32 %v457, %v464
    %v494 = vadd.f32 %v458, %v464
    %v495 = vadd.f32 %v459, %v464
    %v496 = vadd.f32 %v460, %v464
    %v497 = vadd.f32 %v461, %v464
    %498 = vst [vmem:[%s3] sm:$0xff] %v466
    %499 = vst [vmem:[%s3 + $0x8] sm:$0xff] %v467
    %500 = vst [vmem:[%s3 + $0x10] sm:$0xff] %v468
    %501 = vst [vmem:[%s3 + $0x18] sm:$0xff] %v469
    %502 = vst [vmem:[%s3 + $0x20] sm:$0xff] %v470
    %503 = vst [vmem:[%s3 + $0x28] sm:$0xff] %v471
    %504 = vst [vmem:[%s3 + $0x30] sm:$0xff] %v472
    %505 = vst [vmem:[%s3 + $0x38] sm:$0xff] %v473
    %506 = vst [vmem:[%s3 + $0x40] sm:$0xff] %v474
    %507 = vst [vmem:[%s3 + $0x48] sm:$0xff] %v475
    %508 = vst [vmem:[%s3 + $0x50] sm:$0xff] %v476
    %509 = vst [vmem:[%s3 + $0x58] sm:$0xff] %v477
    %510 = vst [vmem:[%s3 + $0x60] sm:$0xff] %v478
    %511 = vst [vmem:[%s3 + $0x68] sm:$0xff] %v479
    %512 = vst [vmem:[%s3 + $0x70] sm:$0xff] %v480
    %513 = vst [vmem:[%s3 + $0x78] sm:$0xff] %v481
    %514 = vst [vmem:[%s3 + $0x80] sm:$0xff] %v482
    %515 = vst [vmem:[%s3 + $0x88] sm:$0xff] %v483
    %516 = vst [vmem:[%s3 + $0x90] sm:$0xff] %v484
    %517 = vst [vmem:[%s3 + $0x98] sm:$0xff] %v485
    %518 = vst [vmem:[%s3 + $0xa0] sm:$0xff] %v486
    %519 = vst [vmem:[%s3 + $0xa8] sm:$0xff] %v487
    %520 = vst [vmem:[%s3 + $0xb0] sm:$0xff] %v488
    %521 = vst [vmem:[%s3 + $0xb8] sm:$0xff] %v489
    %522 = vst [vmem:[%s3 + $0xc0] sm:$0xff] %v490
    %523 = vst [vmem:[%s3 + $0xc8] sm:$0xff] %v491
    %524 = vst [vmem:[%s3 + $0xd0] sm:$0xff] %v492
    %525 = vst [vmem:[%s3 + $0xd8] sm:$0xff] %v493
    %526 = vst [vmem:[%s3 + $0xe0] sm:$0xff] %v494
    %527 = vst [vmem:[%s3 + $0xe8] sm:$0xff] %v495
    %528 = vst [vmem:[%s3 + $0xf0] sm:$0xff] %v496
    %529 = vst [vmem:[%s3 + $0xf8] sm:$0xff] %v497
  $region21: #{attention_forward.5} parent=0 // pred_fallthru
    _
  // Predicated region
  $region22: #{attention_forward.5} parent=0 // pred_check
    _
  $region23: #{attention_forward.5} parent=0 // pred_check_branch
    %531 = sbr.rel (0) target = $region25
  $region24: #{attention_forward.5} parent=0 // pred_region
    _
  $region25: #{attention_forward.5} parent=0 // pred_fallthru
    _
  // Predicated region
  $region26: #{attention_forward.5} parent=0 // pred_check
    _
  $region27: #{attention_forward.5} parent=0 // pred_check_branch
    %533 = sbr.rel (0) target = $region29
  $region28: #{attention_forward.5} parent=0 // pred_region
    _
  $region29: #{attention_forward.5} parent=0 // pred_fallthru
    _

// kernel: attention_forward.4
$region0: #{attention_forward.4}
  #allocation0 [shape = 'u32[]', space=smem, size = 0x4, offset = 0x4, fixed_abs, tag = 'smem constant byte address 0x4 - core index']
  #allocation1 [shape = 'u32[72,128]{1,0:T(1,128)}', space=vmem, size = 0x9000, scoped, tag = 'internal scratch']
  #allocation2 [shape = 'f32[128,1]{1,0:T(8,128)}', space=vmem, size = 0x10000, scoped, tag = 'scratch operand']
  #allocation3 [shape = 'f32[128,1]{1,0:T(8,128)}', space=vmem, size = 0x10000, scoped, tag = 'scratch operand']
  #allocation4 [shape = 'f32[128,32]{1,0:T(8,128)}', space=vmem, size = 0x10000, scoped, tag = 'scratch operand']
  %s0 = inlined_call_operand.vmem [shape: bf16[2,4,128,32], index: 0, kind: input, shape index: {}]
  %s1 = inlined_call_operand.vmem [shape: bf16[2,4,128,32], index: 1, kind: input, shape index: {}]
  %s2 = inlined_call_operand.vmem [shape: bf16[2,4,128,32], index: 2, kind: input, shape index: {}]
  %s3 = inlined_call_operand.vmem [shape: bf16[4,128,128], index: 3, kind: input, shape index: {}]
  %s4 = inlined_call_operand.vmem [shape: bf16[2,4,128,32], index: 4, kind: output, shape index: {}]
  %s5 = sld [smem:[#allocation0]]
  $region57: #{attention_forward.4} parent=0
    _
  %s7 = ssub.s32 1, %s5
  %s8 = scalar_select 0, %s7, %s5
  loop: start=0, step=1, limit=10
  $region2: #{attention_forward.4} parent=0 // loop_pre_header
    _
  $region3: #{attention_forward.4} parent=0 // loop_header
    %s10 = sphi 0, %s14
    %p11 = scmp.ge.s32.totalorder %s10, 10
    %s17 = sphi 0, %s43
    %s18 = sphi 0, %s39
    %s19 = sphi 0, %s35
    %s20 = sphi 0, %s31
    %s21 = sphi 0, %s17
    %s22 = sphi 0, %s18
    %s23 = sphi 0, %s19
    %s24 = sphi 0, %s20
    %s25 = sphi 0, %s21
    %s26 = sphi 0, %s22
    %s27 = sphi 0, %s23
    %s28 = sphi 0, %s24
    %s50 = sphi 0, %s52
    %s53 = sphi 0, %s50
    %s54 = sphi 0, %s53
    %s70 = sphi 0, %s54
    %s80 = sphi 0, %s82
    %s83 = sphi 0, %s80
    %s84 = sphi 0, %s83
    %s100 = sphi 0, %s84
    %s110 = sphi 0, %s112
    %s113 = sphi 0, %s110
    %s114 = sphi 0, %s113
    %s130 = sphi 0, %s114
    %s140 = sphi 0, %s142
    %s143 = sphi 0, %s140
    %s144 = sphi 0, %s143
    %s160 = sphi 0, %s144
    %s170 = sphi 0, %s172
    %s173 = sphi 0, %s170
    %s174 = sphi 0, %s173
    %s190 = sphi 0, %s174
  $region4: #{attention_forward.4} parent=0 // loop_header_branch
    %13 = sbr.rel (%p11) target = $region8
  $region5: #{attention_forward.4} parent=0 // loop_body
    %s15 = ssub.s32 %s10, 1
    %s16 = ssub.s32 %s10, 2
    %s29 = sadd.s32 1, %s20
    %p30 = scmp.ge.s32.totalorder %s29, 1
    %s31 = scalar_select %p30, 0, %s29
    %s32 = sadd.s32 1, %s19
    %s33 = scalar_select %p30, %s32, %s19
    %p34 = scmp.ge.s32.totalorder %s33, 1
    %s35 = scalar_select %p34, 0, %s33
    %s36 = sadd.s32 1, %s18
    %s37 = scalar_select %p34, %s36, %s18
    %p38 = scmp.ge.s32.totalorder %s37, 4
    %s39 = scalar_select %p38, 0, %s37
    %s40 = sadd.s32 1, %s17
    %s41 = scalar_select %p38, %s40, %s17
    %p42 = scmp.ge.s32.totalorder %s41, 2
    %s43 = scalar_select %p42, 0, %s41
    %s44 = ssub.s32 %s17, %s43
    %s45 = ssub.s32 %s18, %s39
    %s46 = sor.u32 %s44, %s45
    %s47 = ssub.s32 %s19, %s35
    %s48 = sor.u32 %s46, %s47
    %p49 = scmp.eq.s32.totalorder %s48, 0
    %s51 = sadd.s32 %s50, 1
    %s52 = scalar_select %p49, %s50, %s51
    %p55 = pneg %p49
    %p56 = scmp.eq.s32.totalorder %s10, 7
    %p57 = por %p55, %p56
    %p58 = scmp.ne.s32.totalorder %s50, %s53
    %p59 = scmp.eq.s32.totalorder %s10, 0
    %p60 = por %p58, %p59
    %p61 = scmp.ne.s32.totalorder %s50, %s53
    %p62 = scmp.eq.s32.totalorder %s15, 7
    %p63 = por %p61, %p62
    %p64 = scmp.ne.s32.totalorder %s53, %s54
    %p65 = scmp.eq.s32.totalorder %s15, 0
    %p66 = por %p64, %p65
    %p67 = scmp.ne.s32.totalorder %s53, %s54
    %p68 = scmp.eq.s32.totalorder %s16, 7
    %p69 = por %p67, %p68
    %p71 = scmp.ne.s32.totalorder %s54, %s70
    %p72 = scmp.eq.s32.totalorder %s16, 0
    %p73 = por %p71, %p72
    %s74 = ssub.s32 %s17, %s43
    %s75 = ssub.s32 %s18, %s39
    %s76 = sor.u32 %s74, %s75
    %s77 = ssub.s32 %s20, %s31
    %s78 = sor.u32 %s76, %s77
    %p79 = scmp.eq.s32.totalorder %s78, 0
    %s81 = sadd.s32 %s80, 1
    %s82 = scalar_select %p79, %s80, %s81
    %p85 = pneg %p79
    %p86 = scmp.eq.s32.totalorder %s10, 7
    %p87 = por %p85, %p86
    %p88 = scmp.ne.s32.totalorder %s80, %s83
    %p89 = scmp.eq.s32.totalorder %s10, 0
    %p90 = por %p88, %p89
    %p91 = scmp.ne.s32.totalorder %s80, %s83
    %p92 = scmp.eq.s32.totalorder %s15, 7
    %p93 = por %p91, %p92
    %p94 = scmp.ne.s32.totalorder %s83, %s84
    %p95 = scmp.eq.s32.totalorder %s15, 0
    %p96 = por %p94, %p95
    %p97 = scmp.ne.s32.totalorder %s83, %s84
    %p98 = scmp.eq.s32.totalorder %s16, 7
    %p99 = por %p97, %p98
    %p101 = scmp.ne.s32.totalorder %s84, %s100
    %p102 = scmp.eq.s32.totalorder %s16, 0
    %p103 = por %p101, %p102
    %s104 = ssub.s32 %s17, %s43
    %s105 = ssub.s32 %s18, %s39
    %s106 = sor.u32 %s104, %s105
    %s107 = ssub.s32 %s20, %s31
    %s108 = sor.u32 %s106, %s107
    %p109 = scmp.eq.s32.totalorder %s108, 0
    %s111 = sadd.s32 %s110, 1
    %s112 = scalar_select %p109, %s110, %s111
    %p115 = pneg %p109
    %p116 = scmp.eq.s32.totalorder %s10, 7
    %p117 = por %p115, %p116
    %p118 = scmp.ne.s32.totalorder %s110, %s113
    %p119 = scmp.eq.s32.totalorder %s10, 0
    %p120 = por %p118, %p119
    %p121 = scmp.ne.s32.totalorder %s110, %s113
    %p122 = scmp.eq.s32.totalorder %s15, 7
    %p123 = por %p121, %p122
    %p124 = scmp.ne.s32.totalorder %s113, %s114
    %p125 = scmp.eq.s32.totalorder %s15, 0
    %p126 = por %p124, %p125
    %p127 = scmp.ne.s32.totalorder %s113, %s114
    %p128 = scmp.eq.s32.totalorder %s16, 7
    %p129 = por %p127, %p128
    %p131 = scmp.ne.s32.totalorder %s114, %s130
    %p132 = scmp.eq.s32.totalorder %s16, 0
    %p133 = por %p131, %p132
    %s134 = ssub.s32 %s18, %s39
    %s135 = ssub.s32 %s19, %s35
    %s136 = sor.u32 %s134, %s135
    %s137 = ssub.s32 %s20, %s31
    %s138 = sor.u32 %s136, %s137
    %p139 = scmp.eq.s32.totalorder %s138, 0
    %s141 = sadd.s32 %s140, 1
    %s142 = scalar_select %p139, %s140, %s141
    %p145 = pneg %p139
    %p146 = scmp.eq.s32.totalorder %s10, 7
    %p147 = por %p145, %p146
    %p148 = scmp.ne.s32.totalorder %s140, %s143
    %p149 = scmp.eq.s32.totalorder %s10, 0
    %p150 = por %p148, %p149
    %p151 = scmp.ne.s32.totalorder %s140, %s143
    %p152 = scmp.eq.s32.totalorder %s15, 7
    %p153 = por %p151, %p152
    %p154 = scmp.ne.s32.totalorder %s143, %s144
    %p155 = scmp.eq.s32.totalorder %s15, 0
    %p156 = por %p154, %p155
    %p157 = scmp.ne.s32.totalorder %s143, %s144
    %p158 = scmp.eq.s32.totalorder %s16, 7
    %p159 = por %p157, %p158
    %p161 = scmp.ne.s32.totalorder %s144, %s160
    %p162 = scmp.eq.s32.totalorder %s16, 0
    %p163 = por %p161, %p162
    %s164 = ssub.s32 %s17, %s43
    %s165 = ssub.s32 %s18, %s39
    %s166 = sor.u32 %s164, %s165
    %s167 = ssub.s32 %s19, %s35
    %s168 = sor.u32 %s166, %s167
    %p169 = scmp.eq.s32.totalorder %s168, 0
    %s171 = sadd.s32 %s170, 1
    %s172 = scalar_select %p169, %s170, %s171
    %p175 = pneg %p169
    %p176 = scmp.eq.s32.totalorder %s10, 7
    %p177 = por %p175, %p176
    %p178 = scmp.ne.s32.totalorder %s170, %s173
    %p179 = scmp.eq.s32.totalorder %s10, 0
    %p180 = por %p178, %p179
    %p181 = scmp.ne.s32.totalorder %s170, %s173
    %p182 = scmp.eq.s32.totalorder %s15, 7
    %p183 = por %p181, %p182
    %p184 = scmp.ne.s32.totalorder %s173, %s174
    %p185 = scmp.eq.s32.totalorder %s15, 0
    %p186 = por %p184, %p185
    %p187 = scmp.ne.s32.totalorder %s173, %s174
    %p188 = scmp.eq.s32.totalorder %s16, 7
    %p189 = por %p187, %p188
    %p191 = scmp.ne.s32.totalorder %s174, %s190
    %p192 = scmp.eq.s32.totalorder %s16, 0
    %p193 = por %p191, %p192
    %p194 = scmp.le.s32.totalorder 1, %s10
    %p195 = scmp.lt.s32.totalorder %s10, 9
    %p196 = pnand %p194, %p195
    %p197 = pneg %p196
    // Predicated region
    $region9: #{attention_forward.4} parent=5 // pred_check
      _
    $region10: #{attention_forward.4} parent=5 // pred_check_branch
      %199 = sbr.rel (%p196) target = $region12
    $region11: #{attention_forward.4} parent=5 // pred_region
      %s200 = ssub.s32 %s10, 1
    $region12: #{attention_forward.4} parent=5 // pred_fallthru
      _
    %p201 = scmp.lt.s32.totalorder %s10, 8
    // Predicated region
    $region13: #{attention_forward.4} parent=5 // pred_check
      %p202 = pneg %p201
    $region14: #{attention_forward.4} parent=5 // pred_check_branch
      %204 = sbr.rel (%p202) target = $region16
    $region15: #{attention_forward.4} parent=5 // pred_region
      // Predicated region
      $region17: #{attention_forward.4} parent=15 // pred_check
        %p205 = pneg %p60
      $region18: #{attention_forward.4} parent=15 // pred_check_branch
        %207 = sbr.rel (%p205) target = $region20
      $region19: #{attention_forward.4} parent=15 // pred_region
        %s208 = smul.u32 16, %s19
        %p209 = scmp.lt.s32.totalorder %s17, 1
        %s210 = scalar_select %p209, %s17, 1
        %p211 = scmp.lt.s32.totalorder %s18, 3
        %s212 = scalar_select %p211, %s18, 3
        %p213 = scmp.lt.s32.totalorder %s208, 15
        %s214 = scalar_select %p213, %s208, 15
        %s215 = smul.addr %s212, 16
        %s216 = sadd.s32 %s214, %s215
        %s217 = smul.addr %s210, 64
        %s218 = sadd.s32 %s216, %s217
        %s219 = smul.addr %s218, 4
        %s220 = scalar_lea.vmem %s0, %s219
        %s221 = smul.u32 16, %s19
      $region20: #{attention_forward.4} parent=15 // pred_fallthru
        _
      // Predicated region
      $region21: #{attention_forward.4} parent=15 // pred_check
        %p222 = pneg %p90
      $region22: #{attention_forward.4} parent=15 // pred_check_branch
        %224 = sbr.rel (%p222) target = $region24
      $region23: #{attention_forward.4} parent=15 // pred_region
        %s225 = smul.u32 16, %s20
        %p226 = scmp.lt.s32.totalorder %s17, 1
        %s227 = scalar_select %p226, %s17, 1
        %p228 = scmp.lt.s32.totalorder %s18, 3
        %s229 = scalar_select %p228, %s18, 3
        %p230 = scmp.lt.s32.totalorder %s225, 15
        %s231 = scalar_select %p230, %s225, 15
        %s232 = smul.addr %s229, 16
        %s233 = sadd.s32 %s231, %s232
        %s234 = smul.addr %s227, 64
        %s235 = sadd.s32 %s233, %s234
        %s236 = smul.addr %s235, 4
        %s237 = scalar_lea.vmem %s1, %s236
        %s238 = smul.u32 16, %s20
      $region24: #{attention_forward.4} parent=15 // pred_fallthru
        _
      // Predicated region
      $region25: #{attention_forward.4} parent=15 // pred_check
        %p239 = pneg %p120
      $region26: #{attention_forward.4} parent=15 // pred_check_branch
        %241 = sbr.rel (%p239) target = $region28
      $region27: #{attention_forward.4} parent=15 // pred_region
        %s242 = smul.u32 16, %s20
        %p243 = scmp.lt.s32.totalorder %s17, 1
        %s244 = scalar_select %p243, %s17, 1
        %p245 = scmp.lt.s32.totalorder %s18, 3
        %s246 = scalar_select %p245, %s18, 3
        %p247 = scmp.lt.s32.totalorder %s242, 15
        %s248 = scalar_select %p247, %s242, 15
        %s249 = smul.addr %s246, 16
        %s250 = sadd.s32 %s248, %s249
        %s251 = smul.addr %s244, 64
        %s252 = sadd.s32 %s250, %s251
        %s253 = smul.addr %s252, 4
        %s254 = scalar_lea.vmem %s2, %s253
        %s255 = smul.u32 16, %s20
      $region28: #{attention_forward.4} parent=15 // pred_fallthru
        _
      // Predicated region
      $region29: #{attention_forward.4} parent=15 // pred_check
        %p256 = pneg %p150
      $region30: #{attention_forward.4} parent=15 // pred_check_branch
        %258 = sbr.rel (%p256) target = $region32
      $region31: #{attention_forward.4} parent=15 // pred_region
        %s259 = smul.u32 16, %s19
        %p260 = scmp.lt.s32.totalorder %s18, 3
        %s261 = scalar_select %p260, %s18, 3
        %p262 = scmp.lt.s32.totalorder %s259, 15
        %s263 = scalar_select %p262, %s259, 15
        %p264 = scmp.lt.s32.totalorder %s20, 0
        %s265 = scalar_select %p264, %s20, 0
        %s266 = sadd.s32 %s265, %s263
        %s267 = smul.addr %s261, 16
        %s268 = sadd.s32 %s266, %s267
        %s269 = smul.addr %s268, 4
        %s270 = scalar_lea.vmem %s3, %s269
        %s271 = smul.u32 16, %s19
      $region32: #{attention_forward.4} parent=15 // pred_fallthru
        _
    $region16: #{attention_forward.4} parent=5 // pred_fallthru
      _
    %p272 = scmp.le.s32.totalorder 1, %s10
    %p273 = scmp.lt.s32.totalorder %s10, 9
    %p274 = pnand %p272, %p273
    %p275 = pneg %p274
    // Predicated region
    $region33: #{attention_forward.4} parent=5 // pred_check
      _
    $region34: #{attention_forward.4} parent=5 // pred_check_branch
      %277 = sbr.rel (%p274) target = $region36
    $region35: #{attention_forward.4} parent=5 // pred_region
      %s278 = ssub.s32 %s10, 1
      %s279 = smul.u32 16, %s23
      %p280 = scmp.lt.s32.totalorder %s21, 1
      %s281 = scalar_select %p280, %s21, 1
      %p282 = scmp.lt.s32.totalorder %s22, 3
      %s283 = scalar_select %p282, %s22, 3
      %p284 = scmp.lt.s32.totalorder %s279, 15
      %s285 = scalar_select %p284, %s279, 15
      %s286 = smul.addr %s283, 16
      %s287 = sadd.s32 %s285, %s286
      %s288 = smul.addr %s281, 64
      %s289 = sadd.s32 %s287, %s288
      %s290 = smul.addr %s289, 4
      %s291 = scalar_lea.vmem %s0, %s290
      %p292 = pneg %p66
      %p293 = pneg %p63
      %s294 = smul.u32 16, %s24
      %p295 = scmp.lt.s32.totalorder %s21, 1
      %s296 = scalar_select %p295, %s21, 1
      %p297 = scmp.lt.s32.totalorder %s22, 3
      %s298 = scalar_select %p297, %s22, 3
      %p299 = scmp.lt.s32.totalorder %s294, 15
      %s300 = scalar_select %p299, %s294, 15
      %s301 = smul.addr %s298, 16
      %s302 = sadd.s32 %s300, %s301
      %s303 = smul.addr %s296, 64
      %s304 = sadd.s32 %s302, %s303
      %s305 = smul.addr %s304, 4
      %s306 = scalar_lea.vmem %s1, %s305
      %p307 = pneg %p96
      %p308 = pneg %p93
      %s309 = smul.u32 16, %s24
      %p310 = scmp.lt.s32.totalorder %s21, 1
      %s311 = scalar_select %p310, %s21, 1
      %p312 = scmp.lt.s32.totalorder %s22, 3
      %s313 = scalar_select %p312, %s22, 3
      %p314 = scmp.lt.s32.totalorder %s309, 15
      %s315 = scalar_select %p314, %s309, 15
      %s316 = smul.addr %s313, 16
      %s317 = sadd.s32 %s315, %s316
      %s318 = smul.addr %s311, 64
      %s319 = sadd.s32 %s317, %s318
      %s320 = smul.addr %s319, 4
      %s321 = scalar_lea.vmem %s2, %s320
      %p322 = pneg %p126
      %p323 = pneg %p123
      %s324 = smul.u32 16, %s23
      %p325 = scmp.lt.s32.totalorder %s22, 3
      %s326 = scalar_select %p325, %s22, 3
      %p327 = scmp.lt.s32.totalorder %s324, 15
      %s328 = scalar_select %p327, %s324, 15
      %p329 = scmp.lt.s32.totalorder %s24, 0
      %s330 = scalar_select %p329, %s24, 0
      %s331 = sadd.s32 %s330, %s328
      %s332 = smul.addr %s326, 16
      %s333 = sadd.s32 %s331, %s332
      %s334 = smul.addr %s333, 4
      %s335 = scalar_lea.vmem %s3, %s334
      %p336 = pneg %p156
      %p337 = pneg %p153
      %p338 = pneg %p186
      %p339 = pneg %p183
      %s340 = smul.u32 16, %s23
      %p341 = scmp.lt.s32.totalorder %s21, 1
      %s342 = scalar_select %p341, %s21, 1
      %p343 = scmp.lt.s32.totalorder %s22, 3
      %s344 = scalar_select %p343, %s22, 3
      %p345 = scmp.lt.s32.totalorder %s340, 15
      %s346 = scalar_select %p345, %s340, 15
      %s347 = smul.addr %s344, 16
      %s348 = sadd.s32 %s346, %s347
      %s349 = smul.addr %s342, 64
      %s350 = sadd.s32 %s348, %s349
      %s351 = smul.addr %s350, 4
      %s352 = scalar_lea.vmem %s4, %s351
      %s353 = smul.u32 16, %s23
      %p354 = scmp.lt.s32.totalorder %s21, 1
      %s355 = scalar_select %p354, %s21, 1
      %p356 = scmp.lt.s32.totalorder %s22, 3
      %s357 = scalar_select %p356, %s22, 3
      %p358 = scmp.lt.s32.totalorder %s353, 15
      %s359 = scalar_select %p358, %s353, 15
      %s360 = smul.addr %s357, 16
      %s361 = sadd.s32 %s359, %s360
      %s362 = smul.addr %s355, 64
      %s363 = sadd.s32 %s361, %s362
      %s364 = smul.addr %s363, 4
      %s365 = scalar_lea.vmem %s0, %s364
      %s366 = smul.u32 16, %s23
      %s367 = smul.u32 16, %s24
      %p368 = scmp.lt.s32.totalorder %s21, 1
      %s369 = scalar_select %p368, %s21, 1
      %p370 = scmp.lt.s32.totalorder %s22, 3
      %s371 = scalar_select %p370, %s22, 3
      %p372 = scmp.lt.s32.totalorder %s367, 15
      %s373 = scalar_select %p372, %s367, 15
      %s374 = smul.addr %s371, 16
      %s375 = sadd.s32 %s373, %s374
      %s376 = smul.addr %s369, 64
      %s377 = sadd.s32 %s375, %s376
      %s378 = smul.addr %s377, 4
      %s379 = scalar_lea.vmem %s1, %s378
      %s380 = smul.u32 16, %s24
      %s381 = smul.u32 16, %s24
      %p382 = scmp.lt.s32.totalorder %s21, 1
      %s383 = scalar_select %p382, %s21, 1
      %p384 = scmp.lt.s32.totalorder %s22, 3
      %s385 = scalar_select %p384, %s22, 3
      %p386 = scmp.lt.s32.totalorder %s381, 15
      %s387 = scalar_select %p386, %s381, 15
      %s388 = smul.addr %s385, 16
      %s389 = sadd.s32 %s387, %s388
      %s390 = smul.addr %s383, 64
      %s391 = sadd.s32 %s389, %s390
      %s392 = smul.addr %s391, 4
      %s393 = scalar_lea.vmem %s2, %s392
      %s394 = smul.u32 16, %s24
      %s395 = smul.u32 16, %s23
      %p396 = scmp.lt.s32.totalorder %s22, 3
      %s397 = scalar_select %p396, %s22, 3
      %p398 = scmp.lt.s32.totalorder %s395, 15
      %s399 = scalar_select %p398, %s395, 15
      %p400 = scmp.lt.s32.totalorder %s24, 0
      %s401 = scalar_select %p400, %s24, 0
      %s402 = sadd.s32 %s401, %s399
      %s403 = smul.addr %s397, 16
      %s404 = sadd.s32 %s402, %s403
      %s405 = smul.addr %s404, 4
      %s406 = scalar_lea.vmem %s3, %s405
      %s407 = smul.u32 16, %s23
      %s408 = smul.u32 16, %s23
      %p409 = scmp.lt.s32.totalorder %s21, 1
      %s410 = scalar_select %p409, %s21, 1
      %p411 = scmp.lt.s32.totalorder %s22, 3
      %s412 = scalar_select %p411, %s22, 3
      %p413 = scmp.lt.s32.totalorder %s408, 15
      %s414 = scalar_select %p413, %s408, 15
      %s415 = smul.addr %s412, 16
      %s416 = sadd.s32 %s414, %s415
      %s417 = smul.addr %s410, 64
      %s418 = sadd.s32 %s416, %s417
      %s419 = smul.addr %s418, 4
      %s420 = scalar_lea.vmem %s4, %s419
      %s421 = smul.u32 16, %s23
      %p422 = scmp.eq.s32.totalorder %s24, 0
      // Predicated region
      $region37: #{attention_forward.4} parent=35 // pred_check
        %p423 = pneg %p422
      $region38: #{attention_forward.4} parent=35 // pred_check_branch
        %425 = sbr.rel (%p423) target = $region40
      $region39: #{attention_forward.4} parent=35 // pred_region
        %vm426 = vcmask 7168
        %427 = vst.msk [vmem:[#allocation2] sm:$0xff] %vm426, -inf
        %428 = vst.msk [vmem:[#allocation2 + $0x8] sm:$0xff] %vm426, -inf
        %429 = vst.msk [vmem:[#allocation2 + $0x10] sm:$0xff] %vm426, -inf
        %430 = vst.msk [vmem:[#allocation2 + $0x18] sm:$0xff] %vm426, -inf
        %431 = vst.msk [vmem:[#allocation2 + $0x20] sm:$0xff] %vm426, -inf
        %432 = vst.msk [vmem:[#allocation2 + $0x28] sm:$0xff] %vm426, -inf
        %433 = vst.msk [vmem:[#allocation2 + $0x30] sm:$0xff] %vm426, -inf
        %434 = vst.msk [vmem:[#allocation2 + $0x38] sm:$0xff] %vm426, -inf
        %435 = vst.msk [vmem:[#allocation2 + $0x40] sm:$0xff] %vm426, -inf
        %436 = vst.msk [vmem:[#allocation2 + $0x48] sm:$0xff] %vm426, -inf
        %437 = vst.msk [vmem:[#allocation2 + $0x50] sm:$0xff] %vm426, -inf
        %438 = vst.msk [vmem:[#allocation2 + $0x58] sm:$0xff] %vm426, -inf
        %439 = vst.msk [vmem:[#allocation2 + $0x60] sm:$0xff] %vm426, -inf
        %440 = vst.msk [vmem:[#allocation2 + $0x68] sm:$0xff] %vm426, -inf
        %441 = vst.msk [vmem:[#allocation2 + $0x70] sm:$0xff] %vm426, -inf
        %442 = vst.msk [vmem:[#allocation2 + $0x78] sm:$0xff] %vm426, -inf
        %443 = vst.msk [vmem:[#allocation3] sm:$0xff] %vm426, 0.0
        %444 = vst.msk [vmem:[#allocation3 + $0x8] sm:$0xff] %vm426, 0.0
        %445 = vst.msk [vmem:[#allocation3 + $0x10] sm:$0xff] %vm426, 0.0
        %446 = vst.msk [vmem:[#allocation3 + $0x18] sm:$0xff] %vm426, 0.0
        %447 = vst.msk [vmem:[#allocation3 + $0x20] sm:$0xff] %vm426, 0.0
        %448 = vst.msk [vmem:[#allocation3 + $0x28] sm:$0xff] %vm426, 0.0
        %449 = vst.msk [vmem:[#allocation3 + $0x30] sm:$0xff] %vm426, 0.0
        %450 = vst.msk [vmem:[#allocation3 + $0x38] sm:$0xff] %vm426, 0.0
        %451 = vst.msk [vmem:[#allocation3 + $0x40] sm:$0xff] %vm426, 0.0
        %452 = vst.msk [vmem:[#allocation3 + $0x48] sm:$0xff] %vm426, 0.0
        %453 = vst.msk [vmem:[#allocation3 + $0x50] sm:$0xff] %vm426, 0.0
        %454 = vst.msk [vmem:[#allocation3 + $0x58] sm:$0xff] %vm426, 0.0
        %455 = vst.msk [vmem:[#allocation3 + $0x60] sm:$0xff] %vm426, 0.0
        %456 = vst.msk [vmem:[#allocation3 + $0x68] sm:$0xff] %vm426, 0.0
        %457 = vst.msk [vmem:[#allocation3 + $0x70] sm:$0xff] %vm426, 0.0
        %458 = vst.msk [vmem:[#allocation3 + $0x78] sm:$0xff] %vm426, 0.0
        %vm459 = vcmask 261120
        %460 = vst.msk [vmem:[#allocation4] sm:$0xff] %vm459, 0.0
        %461 = vst.msk [vmem:[#allocation4 + $0x8] sm:$0xff] %vm459, 0.0
        %462 = vst.msk [vmem:[#allocation4 + $0x10] sm:$0xff] %vm459, 0.0
        %463 = vst.msk [vmem:[#allocation4 + $0x18] sm:$0xff] %vm459, 0.0
        %464 = vst.msk [vmem:[#allocation4 + $0x20] sm:$0xff] %vm459, 0.0
        %465 = vst.msk [vmem:[#allocation4 + $0x28] sm:$0xff] %vm459, 0.0
        %466 = vst.msk [vmem:[#allocation4 + $0x30] sm:$0xff] %vm459, 0.0
        %467 = vst.msk [vmem:[#allocation4 + $0x38] sm:$0xff] %vm459, 0.0
        %468 = vst.msk [vmem:[#allocation4 + $0x40] sm:$0xff] %vm459, 0.0
        %469 = vst.msk [vmem:[#allocation4 + $0x48] sm:$0xff] %vm459, 0.0
        %470 = vst.msk [vmem:[#allocation4 + $0x50] sm:$0xff] %vm459, 0.0
        %471 = vst.msk [vmem:[#allocation4 + $0x58] sm:$0xff] %vm459, 0.0
        %472 = vst.msk [vmem:[#allocation4 + $0x60] sm:$0xff] %vm459, 0.0
        %473 = vst.msk [vmem:[#allocation4 + $0x68] sm:$0xff] %vm459, 0.0
        %474 = vst.msk [vmem:[#allocation4 + $0x70] sm:$0xff] %vm459, 0.0
        %475 = vst.msk [vmem:[#allocation4 + $0x78] sm:$0xff] %vm459, 0.0
      $region40: #{attention_forward.4} parent=35 // pred_fallthru
        _
      %v476 = vld [vmem:[%s365] sm:$0xf]
      %v477 = vld [vmem:[%s365 + $0x4] sm:$0xf]
      %v478 = vld [vmem:[%s365 + $0x8] sm:$0xf]
      %v479 = vld [vmem:[%s365 + $0xc] sm:$0xf]
      %v480 = vld [vmem:[%s365 + $0x10] sm:$0xf]
      %v481 = vld [vmem:[%s365 + $0x14] sm:$0xf]
      %v482 = vld [vmem:[%s365 + $0x18] sm:$0xf]
      %v483 = vld [vmem:[%s365 + $0x1c] sm:$0xf]
      %v484 = vld [vmem:[%s365 + $0x20] sm:$0xf]
      %v485 = vld [vmem:[%s365 + $0x24] sm:$0xf]
      %v486 = vld [vmem:[%s365 + $0x28] sm:$0xf]
      %v487 = vld [vmem:[%s365 + $0x2c] sm:$0xf]
      %v488 = vld [vmem:[%s365 + $0x30] sm:$0xf]
      %v489 = vld [vmem:[%s365 + $0x34] sm:$0xf]
      %v490 = vld [vmem:[%s365 + $0x38] sm:$0xf]
      %v491 = vld [vmem:[%s365 + $0x3c] sm:$0xf]
      %v492 = vld [vmem:[%s379] sm:$0xf]
      %v493 = vld [vmem:[%s379 + $0x4] sm:$0xf]
      %v494 = vld [vmem:[%s379 + $0x8] sm:$0xf]
      %v495 = vld [vmem:[%s379 + $0xc] sm:$0xf]
      %v496 = vld [vmem:[%s379 + $0x10] sm:$0xf]
      %v497 = vld [vmem:[%s379 + $0x14] sm:$0xf]
      %v498 = vld [vmem:[%s379 + $0x18] sm:$0xf]
      %v499 = vld [vmem:[%s379 + $0x1c] sm:$0xf]
      %v500 = vld [vmem:[%s379 + $0x20] sm:$0xf]
      %v501 = vld [vmem:[%s379 + $0x24] sm:$0xf]
      %v502 = vld [vmem:[%s379 + $0x28] sm:$0xf]
      %v503 = vld [vmem:[%s379 + $0x2c] sm:$0xf]
      %v504 = vld [vmem:[%s379 + $0x30] sm:$0xf]
      %v505 = vld [vmem:[%s379 + $0x34] sm:$0xf]
      %v506 = vld [vmem:[%s379 + $0x38] sm:$0xf]
      %v507 = vld [vmem:[%s379 + $0x3c] sm:$0xf]
      %v508 = vld [vmem:[%s393] sm:$0xf]
      %v509 = vld [vmem:[%s393 + $0x4] sm:$0xf]
      %v510 = vld [vmem:[%s393 + $0x8] sm:$0xf]
      %v511 = vld [vmem:[%s393 + $0xc] sm:$0xf]
      %v512 = vld [vmem:[%s393 + $0x10] sm:$0xf]
      %v513 = vld [vmem:[%s393 + $0x14] sm:$0xf]
      %v514 = vld [vmem:[%s393 + $0x18] sm:$0xf]
      %v515 = vld [vmem:[%s393 + $0x1c] sm:$0xf]
      %v516 = vld [vmem:[%s393 + $0x20] sm:$0xf]
      %v517 = vld [vmem:[%s393 + $0x24] sm:$0xf]
      %v518 = vld [vmem:[%s393 + $0x28] sm:$0xf]
      %v519 = vld [vmem:[%s393 + $0x2c] sm:$0xf]
      %v520 = vld [vmem:[%s393 + $0x30] sm:$0xf]
      %v521 = vld [vmem:[%s393 + $0x34] sm:$0xf]
      %v522 = vld [vmem:[%s393 + $0x38] sm:$0xf]
      %v523 = vld [vmem:[%s393 + $0x3c] sm:$0xf]
      %v524 = vld [vmem:[%s406] sm:$0xf]
      %v525 = vld [vmem:[%s406 + $0x4] sm:$0xf]
      %v526 = vld [vmem:[%s406 + $0x8] sm:$0xf]
      %v527 = vld [vmem:[%s406 + $0xc] sm:$0xf]
      %v528 = vld [vmem:[%s406 + $0x10] sm:$0xf]
      %v529 = vld [vmem:[%s406 + $0x14] sm:$0xf]
      %v530 = vld [vmem:[%s406 + $0x18] sm:$0xf]
      %v531 = vld [vmem:[%s406 + $0x1c] sm:$0xf]
      %v532 = vld [vmem:[%s406 + $0x20] sm:$0xf]
      %v533 = vld [vmem:[%s406 + $0x24] sm:$0xf]
      %v534 = vld [vmem:[%s406 + $0x28] sm:$0xf]
      %v535 = vld [vmem:[%s406 + $0x2c] sm:$0xf]
      %v536 = vld [vmem:[%s406 + $0x30] sm:$0xf]
      %v537 = vld [vmem:[%s406 + $0x34] sm:$0xf]
      %v538 = vld [vmem:[%s406 + $0x38] sm:$0xf]
      %v539 = vld [vmem:[%s406 + $0x3c] sm:$0xf]
      %v540 = vunpack.c.l.bf16 %v524
      %v541 = vunpack.c.l.bf16 %v525
      %v542 = vunpack.c.l.bf16 %v526
      %v543 = vunpack.c.l.bf16 %v527
      %v544 = vunpack.c.l.bf16 %v528
      %v545 = vunpack.c.l.bf16 %v529
      %v546 = vunpack.c.l.bf16 %v530
      %v547 = vunpack.c.l.bf16 %v531
      %v548 = vunpack.c.l.bf16 %v532
      %v549 = vunpack.c.l.bf16 %v533
      %v550 = vunpack.c.l.bf16 %v534
      %v551 = vunpack.c.l.bf16 %v535
      %v552 = vunpack.c.l.bf16 %v536
      %v553 = vunpack.c.l.bf16 %v537
      %v554 = vunpack.c.l.bf16 %v538
      %v555 = vunpack.c.l.bf16 %v539
      %v572 = vunpack.c.l.b16 %v476
      %v573 = vunpack.c.l.b16 %v477
      %v574 = vunpack.c.l.b16 %v478
      %v575 = vunpack.c.l.b16 %v479
      %v576 = vunpack.c.l.b16 %v480
      %v577 = vunpack.c.l.b16 %v481
      %v578 = vunpack.c.l.b16 %v482
      %v579 = vunpack.c.l.b16 %v483
      %v580 = vunpack.c.l.b16 %v484
      %v581 = vunpack.c.l.b16 %v485
      %v582 = vunpack.c.l.b16 %v486
      %v583 = vunpack.c.l.b16 %v487
      %v584 = vunpack.c.l.b16 %v488
      %v585 = vunpack.c.l.b16 %v489
      %v586 = vunpack.c.l.b16 %v490
      %v587 = vunpack.c.l.b16 %v491
      %v588 = vpack.c.b16 %v573, %v572
      %v589 = vpack.c.b16 %v575, %v574
      %v590 = vpack.c.b16 %v577, %v576
      %v591 = vpack.c.b16 %v579, %v578
      %v592 = vpack.c.b16 %v581, %v580
      %v593 = vpack.c.b16 %v583, %v582
      %v594 = vpack.c.b16 %v585, %v584
      %v595 = vpack.c.b16 %v587, %v586
      %v612 = vunpack.c.l.b16 %v492
      %v613 = vunpack.c.l.b16 %v493
      %v614 = vunpack.c.l.b16 %v494
      %v615 = vunpack.c.l.b16 %v495
      %v616 = vunpack.c.l.b16 %v496
      %v617 = vunpack.c.l.b16 %v497
      %v618 = vunpack.c.l.b16 %v498
      %v619 = vunpack.c.l.b16 %v499
      %v620 = vunpack.c.l.b16 %v500
      %v621 = vunpack.c.l.b16 %v501
      %v622 = vunpack.c.l.b16 %v502
      %v623 = vunpack.c.l.b16 %v503
      %v624 = vunpack.c.l.b16 %v504
      %v625 = vunpack.c.l.b16 %v505
      %v626 = vunpack.c.l.b16 %v506
      %v627 = vunpack.c.l.b16 %v507
      %v628 = vpack.c.b16 %v613, %v612
      %v629 = vpack.c.b16 %v615, %v614
      %v630 = vpack.c.b16 %v617, %v616
      %v631 = vpack.c.b16 %v619, %v618
      %v632 = vpack.c.b16 %v621, %v620
      %v633 = vpack.c.b16 %v623, %v622
      %v634 = vpack.c.b16 %v625, %v624
      %v635 = vpack.c.b16 %v627, %v626
      %vm636 = vcmask 261120
      %v638 = vsel %vm636, %v588, 0
      %v641 = vsel %vm636, %v589, 0
      %v644 = vsel %vm636, %v590, 0
      %v647 = vsel %vm636, %v591, 0
      %v650 = vsel %vm636, %v592, 0
      %v653 = vsel %vm636, %v593, 0
      %v656 = vsel %vm636, %v594, 0
      %v659 = vsel %vm636, %v595, 0
      %v662 = vsel %vm636, %v628, 0
      %v665 = vsel %vm636, %v629, 0
      %v668 = vsel %vm636, %v630, 0
      %v671 = vsel %vm636, %v631, 0
      %v674 = vsel %vm636, %v632, 0
      %v677 = vsel %vm636, %v633, 0
      %v680 = vsel %vm636, %v634, 0
      %v683 = vsel %vm636, %v635, 0
      %685 = vmatpush.bf16.xpose.msra.mxu0 %v683
      %686 = vmatpush.bf16.xpose.msra.mxu0 %v680
      %687 = vmatpush.bf16.xpose.msra.mxu0 %v677
      %688 = vmatpush.bf16.xpose.msra.mxu0 %v674
      %689 = vmatpush.bf16.xpose.msra.mxu0 %v671
      %690 = vmatpush.bf16.xpose.msra.mxu0 %v668
      %691 = vmatpush.bf16.xpose.msra.mxu0 %v665
      %692 = vmatpush.bf16.xpose.msra.mxu0 %v662
      %693 = vmatmul.bf16.gmra.mxu0 %v638
      %v694 = vpop.f32.mrf.mxu0
      %v695 = vadd.f32 %v540, %v694
      %v696 = vpop.f32.mrf.mxu0
      %v697 = vadd.f32 %v541, %v696
      %698 = vmatmul.bf16.gmra.mxu0 %v641
      %v699 = vpop.f32.mrf.mxu0
      %v700 = vadd.f32 %v542, %v699
      %v701 = vpop.f32.mrf.mxu0
      %v702 = vadd.f32 %v543, %v701
      %703 = vmatmul.bf16.gmra.mxu0 %v644
      %v704 = vpop.f32.mrf.mxu0
      %v705 = vadd.f32 %v544, %v704
      %v706 = vpop.f32.mrf.mxu0
      %v707 = vadd.f32 %v545, %v706
      %708 = vmatmul.bf16.gmra.mxu0 %v647
      %v709 = vpop.f32.mrf.mxu0
      %v710 = vadd.f32 %v546, %v709
      %v711 = vpop.f32.mrf.mxu0
      %v712 = vadd.f32 %v547, %v711
      %713 = vmatmul.bf16.gmra.mxu0 %v650
      %v714 = vpop.f32.mrf.mxu0
      %v715 = vadd.f32 %v548, %v714
      %v716 = vpop.f32.mrf.mxu0
      %v717 = vadd.f32 %v549, %v716
      %718 = vmatmul.bf16.gmra.mxu0 %v653
      %v719 = vpop.f32.mrf.mxu0
      %v720 = vadd.f32 %v550, %v719
      %v721 = vpop.f32.mrf.mxu0
      %v722 = vadd.f32 %v551, %v721
      %723 = vmatmul.bf16.gmra.mxu0 %v656
      %v724 = vpop.f32.mrf.mxu0
      %v725 = vadd.f32 %v552, %v724
      %v726 = vpop.f32.mrf.mxu0
      %v727 = vadd.f32 %v553, %v726
      %728 = vmatmul.bf16.gmra.mxu0 %v659
      %v729 = vpop.f32.mrf.mxu0
      %v730 = vadd.f32 %v554, %v729
      %v731 = vpop.f32.mrf.mxu0
      %v732 = vadd.f32 %v555, %v731
      %733 = vdwg.mxu0
      %v734 = vld [vmem:[#allocation2] sm:$0xff]
      %v735 = vld [vmem:[#allocation2 + $0x8] sm:$0xff]
      %v736 = vld [vmem:[#allocation2 + $0x10] sm:$0xff]
      %v737 = vld [vmem:[#allocation2 + $0x18] sm:$0xff]
      %v738 = vld [vmem:[#allocation2 + $0x20] sm:$0xff]
      %v739 = vld [vmem:[#allocation2 + $0x28] sm:$0xff]
      %v740 = vld [vmem:[#allocation2 + $0x30] sm:$0xff]
      %v741 = vld [vmem:[#allocation2 + $0x38] sm:$0xff]
      %v742 = vld [vmem:[#allocation2 + $0x40] sm:$0xff]
      %v743 = vld [vmem:[#allocation2 + $0x48] sm:$0xff]
      %v744 = vld [vmem:[#allocation2 + $0x50] sm:$0xff]
      %v745 = vld [vmem:[#allocation2 + $0x58] sm:$0xff]
      %v746 = vld [vmem:[#allocation2 + $0x60] sm:$0xff]
      %v747 = vld [vmem:[#allocation2 + $0x68] sm:$0xff]
      %v748 = vld [vmem:[#allocation2 + $0x70] sm:$0xff]
      %v749 = vld [vmem:[#allocation2 + $0x78] sm:$0xff]
      %750 = vmax.xlane.f32.xlu0 %v695
      %v751 = vpop.xlane.xlu0 %750
      %752 = vmax.xlane.f32.xlu0 %v697
      %v753 = vpop.xlane.xlu0 %752
      %754 = vmax.xlane.f32.xlu0 %v700
      %v755 = vpop.xlane.xlu0 %754
      %756 = vmax.xlane.f32.xlu0 %v702
      %v757 = vpop.xlane.xlu0 %756
      %758 = vmax.xlane.f32.xlu0 %v705
      %v759 = vpop.xlane.xlu0 %758
      %760 = vmax.xlane.f32.xlu0 %v707
      %v761 = vpop.xlane.xlu0 %760
      %762 = vmax.xlane.f32.xlu0 %v710
      %v763 = vpop.xlane.xlu0 %762
      %764 = vmax.xlane.f32.xlu0 %v712
      %v765 = vpop.xlane.xlu0 %764
      %766 = vmax.xlane.f32.xlu0 %v715
      %v767 = vpop.xlane.xlu0 %766
      %768 = vmax.xlane.f32.xlu0 %v717
      %v769 = vpop.xlane.xlu0 %768
      %770 = vmax.xlane.f32.xlu0 %v720
      %v771 = vpop.xlane.xlu0 %770
      %772 = vmax.xlane.f32.xlu0 %v722
      %v773 = vpop.xlane.xlu0 %772
      %774 = vmax.xlane.f32.xlu0 %v725
      %v775 = vpop.xlane.xlu0 %774
      %776 = vmax.xlane.f32.xlu0 %v727
      %v777 = vpop.xlane.xlu0 %776
      %778 = vmax.xlane.f32.xlu0 %v730
      %v779 = vpop.xlane.xlu0 %778
      %780 = vmax.xlane.f32.xlu0 %v732
      %v781 = vpop.xlane.xlu0 %780
      %v782 = vmax.f32 %v734, %v751
      %v783 = vmax.f32 %v735, %v753
      %v784 = vmax.f32 %v736, %v755
      %v785 = vmax.f32 %v737, %v757
      %v786 = vmax.f32 %v738, %v759
      %v787 = vmax.f32 %v739, %v761
      %v788 = vmax.f32 %v740, %v763
      %v789 = vmax.f32 %v741, %v765
      %v790 = vmax.f32 %v742, %v767
      %v791 = vmax.f32 %v743, %v769
      %v792 = vmax.f32 %v744, %v771
      %v793 = vmax.f32 %v745, %v773
      %v794 = vmax.f32 %v746, %v775
      %v795 = vmax.f32 %v747, %v777
      %v796 = vmax.f32 %v748, %v779
      %v797 = vmax.f32 %v749, %v781
      %v798 = vsub.f32 %v734, %v782
      %v799 = vsub.f32 %v735, %v783
      %v800 = vsub.f32 %v736, %v784
      %v801 = vsub.f32 %v737, %v785
      %v802 = vsub.f32 %v738, %v786
      %v803 = vsub.f32 %v739, %v787
      %v804 = vsub.f32 %v740, %v788
      %v805 = vsub.f32 %v741, %v789
      %v806 = vsub.f32 %v742, %v790
      %v807 = vsub.f32 %v743, %v791
      %v808 = vsub.f32 %v744, %v792
      %v809 = vsub.f32 %v745, %v793
      %v810 = vsub.f32 %v746, %v794
      %v811 = vsub.f32 %v747, %v795
      %v812 = vsub.f32 %v748, %v796
      %v813 = vsub.f32 %v749, %v797
      %v814 = vmul.f32 %v798, 1.442695
      %v815 = vpow.pop %v814
      %v816 = vmul.f32 %v799, 1.442695
      %v817 = vpow.pop %v816
      %v818 = vmul.f32 %v800, 1.442695
      %v819 = vpow.pop %v818
      %v820 = vmul.f32 %v801, 1.442695
      %v821 = vpow.pop %v820
      %v822 = vmul.f32 %v802, 1.442695
      %v823 = vpow.pop %v822
      %v824 = vmul.f32 %v803, 1.442695
      %v825 = vpow.pop %v824
      %v826 = vmul.f32 %v804, 1.442695
      %v827 = vpow.pop %v826
      %v828 = vmul.f32 %v805, 1.442695
      %v829 = vpow.pop %v828
      %v830 = vmul.f32 %v806, 1.442695
      %v831 = vpow.pop %v830
      %v832 = vmul.f32 %v807, 1.442695
      %v833 = vpow.pop %v832
      %v834 = vmul.f32 %v808, 1.442695
      %v835 = vpow.pop %v834
      %v836 = vmul.f32 %v809, 1.442695
      %v837 = vpow.pop %v836
      %v838 = vmul.f32 %v810, 1.442695
      %v839 = vpow.pop %v838
      %v840 = vmul.f32 %v811, 1.442695
      %v841 = vpow.pop %v840
      %v842 = vmul.f32 %v812, 1.442695
      %v843 = vpow.pop %v842
      %v844 = vmul.f32 %v813, 1.442695
      %v845 = vpow.pop %v844
      %847 = vset.pattern.permute.xlu0 0
      %848 = vperm.xlu0 %847, %v782
      %v849 = vpop.permute.xlu0 %848
      %852 = vset.pattern.permute.xlu0 0
      %853 = vperm.xlu0 %852, %v783
      %v854 = vpop.permute.xlu0 %853
      %857 = vset.pattern.permute.xlu0 0
      %858 = vperm.xlu0 %857, %v784
      %v859 = vpop.permute.xlu0 %858
      %862 = vset.pattern.permute.xlu0 0
      %863 = vperm.xlu0 %862, %v785
      %v864 = vpop.permute.xlu0 %863
      %867 = vset.pattern.permute.xlu0 0
      %868 = vperm.xlu0 %867, %v786
      %v869 = vpop.permute.xlu0 %868
      %872 = vset.pattern.permute.xlu0 0
      %873 = vperm.xlu0 %872, %v787
      %v874 = vpop.permute.xlu0 %873
      %877 = vset.pattern.permute.xlu0 0
      %878 = vperm.xlu0 %877, %v788
      %v879 = vpop.permute.xlu0 %878
      %882 = vset.pattern.permute.xlu0 0
      %883 = vperm.xlu0 %882, %v789
      %v884 = vpop.permute.xlu0 %883
      %887 = vset.pattern.permute.xlu0 0
      %888 = vperm.xlu0 %887, %v790
      %v889 = vpop.permute.xlu0 %888
      %892 = vset.pattern.permute.xlu0 0
      %893 = vperm.xlu0 %892, %v791
      %v894 = vpop.permute.xlu0 %893
      %897 = vset.pattern.permute.xlu0 0
      %898 = vperm.xlu0 %897, %v792
      %v899 = vpop.permute.xlu0 %898
      %902 = vset.pattern.permute.xlu0 0
      %903 = vperm.xlu0 %902, %v793
      %v904 = vpop.permute.xlu0 %903
      %907 = vset.pattern.permute.xlu0 0
      %908 = vperm.xlu0 %907, %v794
      %v909 = vpop.permute.xlu0 %908
      %912 = vset.pattern.permute.xlu0 0
      %913 = vperm.xlu0 %912, %v795
      %v914 = vpop.permute.xlu0 %913
      %917 = vset.pattern.permute.xlu0 0
      %918 = vperm.xlu0 %917, %v796
      %v919 = vpop.permute.xlu0 %918
      %922 = vset.pattern.permute.xlu0 0
      %923 = vperm.xlu0 %922, %v797
      %v924 = vpop.permute.xlu0 %923
      %v926 = vsub.f32 %v695, %v849
      %v927 = vsub.f32 %v697, %v854
      %v928 = vsub.f32 %v700, %v859
      %v929 = vsub.f32 %v702, %v864
      %v930 = vsub.f32 %v705, %v869
      %v931 = vsub.f32 %v707, %v874
      %v932 = vsub.f32 %v710, %v879
      %v933 = vsub.f32 %v712, %v884
      %v934 = vsub.f32 %v715, %v889
      %v935 = vsub.f32 %v717, %v894
      %v936 = vsub.f32 %v720, %v899
      %v937 = vsub.f32 %v722, %v904
      %v938 = vsub.f32 %v725, %v909
      %v939 = vsub.f32 %v727, %v914
      %v940 = vsub.f32 %v730, %v919
      %v941 = vsub.f32 %v732, %v924
      %v942 = vpack.c.bf16 %v927, %v926
      %v943 = vpack.c.bf16 %v929, %v928
      %v944 = vpack.c.bf16 %v931, %v930
      %v945 = vpack.c.bf16 %v933, %v932
      %v946 = vpack.c.bf16 %v935, %v934
      %v947 = vpack.c.bf16 %v937, %v936
      %v948 = vpack.c.bf16 %v939, %v938
      %v949 = vpack.c.bf16 %v941, %v940
      %v950 = vunpack.c.l.bf16 %v942
      %v951 = vunpack.c.h.bf16 %v942
      %v952 = vunpack.c.l.bf16 %v943
      %v953 = vunpack.c.h.bf16 %v943
      %v954 = vunpack.c.l.bf16 %v944
      %v955 = vunpack.c.h.bf16 %v944
      %v956 = vunpack.c.l.bf16 %v945
      %v957 = vunpack.c.h.bf16 %v945
      %v958 = vunpack.c.l.bf16 %v946
      %v959 = vunpack.c.h.bf16 %v946
      %v960 = vunpack.c.l.bf16 %v947
      %v961 = vunpack.c.h.bf16 %v947
      %v962 = vunpack.c.l.bf16 %v948
      %v963 = vunpack.c.h.bf16 %v948
      %v964 = vunpack.c.l.bf16 %v949
      %v965 = vunpack.c.h.bf16 %v949
      %v966 = vmul.f32 %v950, 1.442695
      %v967 = vpow.pop %v966
      %v968 = vmul.f32 %v951, 1.442695
      %v969 = vpow.pop %v968
      %v970 = vmul.f32 %v952, 1.442695
      %v971 = vpow.pop %v970
      %v972 = vmul.f32 %v953, 1.442695
      %v973 = vpow.pop %v972
      %v974 = vmul.f32 %v954, 1.442695
      %v975 = vpow.pop %v974
      %v976 = vmul.f32 %v955, 1.442695
      %v977 = vpow.pop %v976
      %v978 = vmul.f32 %v956, 1.442695
      %v979 = vpow.pop %v978
      %v980 = vmul.f32 %v957, 1.442695
      %v981 = vpow.pop %v980
      %v982 = vmul.f32 %v958, 1.442695
      %v983 = vpow.pop %v982
      %v984 = vmul.f32 %v959, 1.442695
      %v985 = vpow.pop %v984
      %v986 = vmul.f32 %v960, 1.442695
      %v987 = vpow.pop %v986
      %v988 = vmul.f32 %v961, 1.442695
      %v989 = vpow.pop %v988
      %v990 = vmul.f32 %v962, 1.442695
      %v991 = vpow.pop %v990
      %v992 = vmul.f32 %v963, 1.442695
      %v993 = vpow.pop %v992
      %v994 = vmul.f32 %v964, 1.442695
      %v995 = vpow.pop %v994
      %v996 = vmul.f32 %v965, 1.442695
      %v997 = vpow.pop %v996
      %v998 = vpack.c.bf16 %v969, %v967
      %v999 = vpack.c.bf16 %v973, %v971
      %v1000 = vpack.c.bf16 %v977, %v975
      %v1001 = vpack.c.bf16 %v981, %v979
      %v1002 = vpack.c.bf16 %v985, %v983
      %v1003 = vpack.c.bf16 %v989, %v987
      %v1004 = vpack.c.bf16 %v993, %v991
      %v1005 = vpack.c.bf16 %v997, %v995
      %v1006 = vld [vmem:[#allocation3] sm:$0xff]
      %v1007 = vld [vmem:[#allocation3 + $0x8] sm:$0xff]
      %v1008 = vld [vmem:[#allocation3 + $0x10] sm:$0xff]
      %v1009 = vld [vmem:[#allocation3 + $0x18] sm:$0xff]
      %v1010 = vld [vmem:[#allocation3 + $0x20] sm:$0xff]
      %v1011 = vld [vmem:[#allocation3 + $0x28] sm:$0xff]
      %v1012 = vld [vmem:[#allocation3 + $0x30] sm:$0xff]
      %v1013 = vld [vmem:[#allocation3 + $0x38] sm:$0xff]
      %v1014 = vld [vmem:[#allocation3 + $0x40] sm:$0xff]
      %v1015 = vld [vmem:[#allocation3 + $0x48] sm:$0xff]
      %v1016 = vld [vmem:[#allocation3 + $0x50] sm:$0xff]
      %v1017 = vld [vmem:[#allocation3 + $0x58] sm:$0xff]
      %v1018 = vld [vmem:[#allocation3 + $0x60] sm:$0xff]
      %v1019 = vld [vmem:[#allocation3 + $0x68] sm:$0xff]
      %v1020 = vld [vmem:[#allocation3 + $0x70] sm:$0xff]
      %v1021 = vld [vmem:[#allocation3 + $0x78] sm:$0xff]
      %v1022 = vmul.f32 %v815, %v1006
      %v1023 = vmul.f32 %v817, %v1007
      %v1024 = vmul.f32 %v819, %v1008
      %v1025 = vmul.f32 %v821, %v1009
      %v1026 = vmul.f32 %v823, %v1010
      %v1027 = vmul.f32 %v825, %v1011
      %v1028 = vmul.f32 %v827, %v1012
      %v1029 = vmul.f32 %v829, %v1013
      %v1030 = vmul.f32 %v831, %v1014
      %v1031 = vmul.f32 %v833, %v1015
      %v1032 = vmul.f32 %v835, %v1016
      %v1033 = vmul.f32 %v837, %v1017
      %v1034 = vmul.f32 %v839, %v1018
      %v1035 = vmul.f32 %v841, %v1019
      %v1036 = vmul.f32 %v843, %v1020
      %v1037 = vmul.f32 %v845, %v1021
      %v1038 = vunpack.c.l.bf16 %v998
      %v1039 = vunpack.c.h.bf16 %v998
      %v1040 = vunpack.c.l.bf16 %v999
      %v1041 = vunpack.c.h.bf16 %v999
      %v1042 = vunpack.c.l.bf16 %v1000
      %v1043 = vunpack.c.h.bf16 %v1000
      %v1044 = vunpack.c.l.bf16 %v1001
      %v1045 = vunpack.c.h.bf16 %v1001
      %v1046 = vunpack.c.l.bf16 %v1002
      %v1047 = vunpack.c.h.bf16 %v1002
      %v1048 = vunpack.c.l.bf16 %v1003
      %v1049 = vunpack.c.h.bf16 %v1003
      %v1050 = vunpack.c.l.bf16 %v1004
      %v1051 = vunpack.c.h.bf16 %v1004
      %v1052 = vunpack.c.l.bf16 %v1005
      %v1053 = vunpack.c.h.bf16 %v1005
      %1054 = vadd.xlane.f32.xlu0 %v1038
      %v1055 = vpop.xlane.xlu0 %1054
      %1056 = vadd.xlane.f32.xlu0 %v1039
      %v1057 = vpop.xlane.xlu0 %1056
      %1058 = vadd.xlane.f32.xlu0 %v1040
      %v1059 = vpop.xlane.xlu0 %1058
      %1060 = vadd.xlane.f32.xlu0 %v1041
      %v1061 = vpop.xlane.xlu0 %1060
      %1062 = vadd.xlane.f32.xlu0 %v1042
      %v1063 = vpop.xlane.xlu0 %1062
      %1064 = vadd.xlane.f32.xlu0 %v1043
      %v1065 = vpop.xlane.xlu0 %1064
      %1066 = vadd.xlane.f32.xlu0 %v1044
      %v1067 = vpop.xlane.xlu0 %1066
      %1068 = vadd.xlane.f32.xlu0 %v1045
      %v1069 = vpop.xlane.xlu0 %1068
      %1070 = vadd.xlane.f32.xlu0 %v1046
      %v1071 = vpop.xlane.xlu0 %1070
      %1072 = vadd.xlane.f32.xlu0 %v1047
      %v1073 = vpop.xlane.xlu0 %1072
      %1074 = vadd.xlane.f32.xlu0 %v1048
      %v1075 = vpop.xlane.xlu0 %1074
      %1076 = vadd.xlane.f32.xlu0 %v1049
      %v1077 = vpop.xlane.xlu0 %1076
      %1078 = vadd.xlane.f32.xlu0 %v1050
      %v1079 = vpop.xlane.xlu0 %1078
      %1080 = vadd.xlane.f32.xlu0 %v1051
      %v1081 = vpop.xlane.xlu0 %1080
      %1082 = vadd.xlane.f32.xlu0 %v1052
      %v1083 = vpop.xlane.xlu0 %1082
      %1084 = vadd.xlane.f32.xlu0 %v1053
      %v1085 = vpop.xlane.xlu0 %1084
      %v1086 = vadd.f32 %v1022, %v1055
      %v1087 = vadd.f32 %v1023, %v1057
      %v1088 = vadd.f32 %v1024, %v1059
      %v1089 = vadd.f32 %v1025, %v1061
      %v1090 = vadd.f32 %v1026, %v1063
      %v1091 = vadd.f32 %v1027, %v1065
      %v1092 = vadd.f32 %v1028, %v1067
      %v1093 = vadd.f32 %v1029, %v1069
      %v1094 = vadd.f32 %v1030, %v1071
      %v1095 = vadd.f32 %v1031, %v1073
      %v1096 = vadd.f32 %v1032, %v1075
      %v1097 = vadd.f32 %v1033, %v1077
      %v1098 = vadd.f32 %v1034, %v1079
      %v1099 = vadd.f32 %v1035, %v1081
      %v1100 = vadd.f32 %v1036, %v1083
      %v1101 = vadd.f32 %v1037, %v1085
      %vm1102 = vcmask 7168
      %1103 = vst.msk [vmem:[#allocation3] sm:$0xff] %vm1102, %v1086
      %1104 = vst.msk [vmem:[#allocation3 + $0x8] sm:$0xff] %vm1102, %v1087
      %1105 = vst.msk [vmem:[#allocation3 + $0x10] sm:$0xff] %vm1102, %v1088
      %1106 = vst.msk [vmem:[#allocation3 + $0x18] sm:$0xff] %vm1102, %v1089
      %1107 = vst.msk [vmem:[#allocation3 + $0x20] sm:$0xff] %vm1102, %v1090
      %1108 = vst.msk [vmem:[#allocation3 + $0x28] sm:$0xff] %vm1102, %v1091
      %1109 = vst.msk [vmem:[#allocation3 + $0x30] sm:$0xff] %vm1102, %v1092
      %1110 = vst.msk [vmem:[#allocation3 + $0x38] sm:$0xff] %vm1102, %v1093
      %1111 = vst.msk [vmem:[#allocation3 + $0x40] sm:$0xff] %vm1102, %v1094
      %1112 = vst.msk [vmem:[#allocation3 + $0x48] sm:$0xff] %vm1102, %v1095
      %1113 = vst.msk [vmem:[#allocation3 + $0x50] sm:$0xff] %vm1102, %v1096
      %1114 = vst.msk [vmem:[#allocation3 + $0x58] sm:$0xff] %vm1102, %v1097
      %1115 = vst.msk [vmem:[#allocation3 + $0x60] sm:$0xff] %vm1102, %v1098
      %1116 = vst.msk [vmem:[#allocation3 + $0x68] sm:$0xff] %vm1102, %v1099
      %1117 = vst.msk [vmem:[#allocation3 + $0x70] sm:$0xff] %vm1102, %v1100
      %1118 = vst.msk [vmem:[#allocation3 + $0x78] sm:$0xff] %vm1102, %v1101
      %v1119 = vld [vmem:[#allocation4] sm:$0xff]
      %v1120 = vld [vmem:[#allocation4 + $0x8] sm:$0xff]
      %v1121 = vld [vmem:[#allocation4 + $0x10] sm:$0xff]
      %v1122 = vld [vmem:[#allocation4 + $0x18] sm:$0xff]
      %v1123 = vld [vmem:[#allocation4 + $0x20] sm:$0xff]
      %v1124 = vld [vmem:[#allocation4 + $0x28] sm:$0xff]
      %v1125 = vld [vmem:[#allocation4 + $0x30] sm:$0xff]
      %v1126 = vld [vmem:[#allocation4 + $0x38] sm:$0xff]
      %v1127 = vld [vmem:[#allocation4 + $0x40] sm:$0xff]
      %v1128 = vld [vmem:[#allocation4 + $0x48] sm:$0xff]
      %v1129 = vld [vmem:[#allocation4 + $0x50] sm:$0xff]
      %v1130 = vld [vmem:[#allocation4 + $0x58] sm:$0xff]
      %v1131 = vld [vmem:[#allocation4 + $0x60] sm:$0xff]
      %v1132 = vld [vmem:[#allocation4 + $0x68] sm:$0xff]
      %v1133 = vld [vmem:[#allocation4 + $0x70] sm:$0xff]
      %v1134 = vld [vmem:[#allocation4 + $0x78] sm:$0xff]
      %1136 = vset.pattern.permute.xlu0 0
      %1137 = vperm.xlu0 %1136, %v815
      %v1138 = vpop.permute.xlu0 %1137
      %1141 = vset.pattern.permute.xlu0 0
      %1142 = vperm.xlu0 %1141, %v817
      %v1143 = vpop.permute.xlu0 %1142
      %1146 = vset.pattern.permute.xlu0 0
      %1147 = vperm.xlu0 %1146, %v819
      %v1148 = vpop.permute.xlu0 %1147
      %1151 = vset.pattern.permute.xlu0 0
      %1152 = vperm.xlu0 %1151, %v821
      %v1153 = vpop.permute.xlu0 %1152
      %1156 = vset.pattern.permute.xlu0 0
      %1157 = vperm.xlu0 %1156, %v823
      %v1158 = vpop.permute.xlu0 %1157
      %1161 = vset.pattern.permute.xlu0 0
      %1162 = vperm.xlu0 %1161, %v825
      %v1163 = vpop.permute.xlu0 %1162
      %1166 = vset.pattern.permute.xlu0 0
      %1167 = vperm.xlu0 %1166, %v827
      %v1168 = vpop.permute.xlu0 %1167
      %1171 = vset.pattern.permute.xlu0 0
      %1172 = vperm.xlu0 %1171, %v829
      %v1173 = vpop.permute.xlu0 %1172
      %1176 = vset.pattern.permute.xlu0 0
      %1177 = vperm.xlu0 %1176, %v831
      %v1178 = vpop.permute.xlu0 %1177
      %1181 = vset.pattern.permute.xlu0 0
      %1182 = vperm.xlu0 %1181, %v833
      %v1183 = vpop.permute.xlu0 %1182
      %1186 = vset.pattern.permute.xlu0 0
      %1187 = vperm.xlu0 %1186, %v835
      %v1188 = vpop.permute.xlu0 %1187
      %1191 = vset.pattern.permute.xlu0 0
      %1192 = vperm.xlu0 %1191, %v837
      %v1193 = vpop.permute.xlu0 %1192
      %1196 = vset.pattern.permute.xlu0 0
      %1197 = vperm.xlu0 %1196, %v839
      %v1198 = vpop.permute.xlu0 %1197
      %1201 = vset.pattern.permute.xlu0 0
      %1202 = vperm.xlu0 %1201, %v841
      %v1203 = vpop.permute.xlu0 %1202
      %1206 = vset.pattern.permute.xlu0 0
      %1207 = vperm.xlu0 %1206, %v843
      %v1208 = vpop.permute.xlu0 %1207
      %1211 = vset.pattern.permute.xlu0 0
      %1212 = vperm.xlu0 %1211, %v845
      %v1213 = vpop.permute.xlu0 %1212
      %v1215 = vmul.f32 %v1138, %v1119
      %v1216 = vmul.f32 %v1143, %v1120
      %v1217 = vmul.f32 %v1148, %v1121
      %v1218 = vmul.f32 %v1153, %v1122
      %v1219 = vmul.f32 %v1158, %v1123
      %v1220 = vmul.f32 %v1163, %v1124
      %v1221 = vmul.f32 %v1168, %v1125
      %v1222 = vmul.f32 %v1173, %v1126
      %v1223 = vmul.f32 %v1178, %v1127
      %v1224 = vmul.f32 %v1183, %v1128
      %v1225 = vmul.f32 %v1188, %v1129
      %v1226 = vmul.f32 %v1193, %v1130
      %v1227 = vmul.f32 %v1198, %v1131
      %v1228 = vmul.f32 %v1203, %v1132
      %v1229 = vmul.f32 %v1208, %v1133
      %v1230 = vmul.f32 %v1213, %v1134
      %v1247 = vunpack.c.l.b16 %v508
      %v1248 = vunpack.c.l.b16 %v509
      %v1249 = vunpack.c.l.b16 %v510
      %v1250 = vunpack.c.l.b16 %v511
      %v1251 = vunpack.c.l.b16 %v512
      %v1252 = vunpack.c.l.b16 %v513
      %v1253 = vunpack.c.l.b16 %v514
      %v1254 = vunpack.c.l.b16 %v515
      %v1255 = vunpack.c.l.b16 %v516
      %v1256 = vunpack.c.l.b16 %v517
      %v1257 = vunpack.c.l.b16 %v518
      %v1258 = vunpack.c.l.b16 %v519
      %v1259 = vunpack.c.l.b16 %v520
      %v1260 = vunpack.c.l.b16 %v521
      %v1261 = vunpack.c.l.b16 %v522
      %v1262 = vunpack.c.l.b16 %v523
      %v1263 = vpack.c.b16 %v1248, %v1247
      %v1264 = vpack.c.b16 %v1250, %v1249
      %v1265 = vpack.c.b16 %v1252, %v1251
      %v1266 = vpack.c.b16 %v1254, %v1253
      %v1267 = vpack.c.b16 %v1256, %v1255
      %v1268 = vpack.c.b16 %v1258, %v1257
      %v1269 = vpack.c.b16 %v1260, %v1259
      %v1270 = vpack.c.b16 %v1262, %v1261
      %1279 = vmatpush.bf16.msra.mxu0 %v1270
      %1280 = vmatpush.bf16.msra.mxu0 %v1269
      %1281 = vmatpush.bf16.msra.mxu0 %v1268
      %1282 = vmatpush.bf16.msra.mxu0 %v1267
      %1283 = vmatpush.bf16.msra.mxu0 %v1266
      %1284 = vmatpush.bf16.msra.mxu0 %v1265
      %1285 = vmatpush.bf16.msra.mxu0 %v1264
      %1286 = vmatpush.bf16.msra.mxu0 %v1263
      %1287 = vmatmul.bf16.gmra.mxu0 %v998
      %v1288 = vpop.f32.mrf.mxu0
      %v1289 = vadd.f32 0.0, %v1288
      %v1290 = vpop.f32.mrf.mxu0
      %v1291 = vadd.f32 0.0, %v1290
      %1292 = vmatmul.bf16.gmra.mxu0 %v999
      %v1293 = vpop.f32.mrf.mxu0
      %v1294 = vadd.f32 0.0, %v1293
      %v1295 = vpop.f32.mrf.mxu0
      %v1296 = vadd.f32 0.0, %v1295
      %1297 = vmatmul.bf16.gmra.mxu0 %v1000
      %v1298 = vpop.f32.mrf.mxu0
      %v1299 = vadd.f32 0.0, %v1298
      %v1300 = vpop.f32.mrf.mxu0
      %v1301 = vadd.f32 0.0, %v1300
      %1302 = vmatmul.bf16.gmra.mxu0 %v1001
      %v1303 = vpop.f32.mrf.mxu0
      %v1304 = vadd.f32 0.0, %v1303
      %v1305 = vpop.f32.mrf.mxu0
      %v1306 = vadd.f32 0.0, %v1305
      %1307 = vmatmul.bf16.gmra.mxu0 %v1002
      %v1308 = vpop.f32.mrf.mxu0
      %v1309 = vadd.f32 0.0, %v1308
      %v1310 = vpop.f32.mrf.mxu0
      %v1311 = vadd.f32 0.0, %v1310
      %1312 = vmatmul.bf16.gmra.mxu0 %v1003
      %v1313 = vpop.f32.mrf.mxu0
      %v1314 = vadd.f32 0.0, %v1313
      %v1315 = vpop.f32.mrf.mxu0
      %v1316 = vadd.f32 0.0, %v1315
      %1317 = vmatmul.bf16.gmra.mxu0 %v1004
      %v1318 = vpop.f32.mrf.mxu0
      %v1319 = vadd.f32 0.0, %v1318
      %v1320 = vpop.f32.mrf.mxu0
      %v1321 = vadd.f32 0.0, %v1320
      %1322 = vmatmul.bf16.gmra.mxu0 %v1005
      %v1323 = vpop.f32.mrf.mxu0
      %v1324 = vadd.f32 0.0, %v1323
      %v1325 = vpop.f32.mrf.mxu0
      %v1326 = vadd.f32 0.0, %v1325
      %1327 = vdwg.mxu0
      %v1328 = vadd.f32 %v1215, %v1289
      %v1329 = vadd.f32 %v1216, %v1291
      %v1330 = vadd.f32 %v1217, %v1294
      %v1331 = vadd.f32 %v1218, %v1296
      %v1332 = vadd.f32 %v1219, %v1299
      %v1333 = vadd.f32 %v1220, %v1301
      %v1334 = vadd.f32 %v1221, %v1304
      %v1335 = vadd.f32 %v1222, %v1306
      %v1336 = vadd.f32 %v1223, %v1309
      %v1337 = vadd.f32 %v1224, %v1311
      %v1338 = vadd.f32 %v1225, %v1314
      %v1339 = vadd.f32 %v1226, %v1316
      %v1340 = vadd.f32 %v1227, %v1319
      %v1341 = vadd.f32 %v1228, %v1321
      %v1342 = vadd.f32 %v1229, %v1324
      %v1343 = vadd.f32 %v1230, %v1326
      %1344 = vst.msk [vmem:[#allocation4] sm:$0xff] %vm636, %v1328
      %1345 = vst.msk [vmem:[#allocation4 + $0x8] sm:$0xff] %vm636, %v1329
      %1346 = vst.msk [vmem:[#allocation4 + $0x10] sm:$0xff] %vm636, %v1330
      %1347 = vst.msk [vmem:[#allocation4 + $0x18] sm:$0xff] %vm636, %v1331
      %1348 = vst.msk [vmem:[#allocation4 + $0x20] sm:$0xff] %vm636, %v1332
      %1349 = vst.msk [vmem:[#allocation4 + $0x28] sm:$0xff] %vm636, %v1333
      %1350 = vst.msk [vmem:[#allocation4 + $0x30] sm:$0xff] %vm636, %v1334
      %1351 = vst.msk [vmem:[#allocation4 + $0x38] sm:$0xff] %vm636, %v1335
      %1352 = vst.msk [vmem:[#allocation4 + $0x40] sm:$0xff] %vm636, %v1336
      %1353 = vst.msk [vmem:[#allocation4 + $0x48] sm:$0xff] %vm636, %v1337
      %1354 = vst.msk [vmem:[#allocation4 + $0x50] sm:$0xff] %vm636, %v1338
      %1355 = vst.msk [vmem:[#allocation4 + $0x58] sm:$0xff] %vm636, %v1339
      %1356 = vst.msk [vmem:[#allocation4 + $0x60] sm:$0xff] %vm636, %v1340
      %1357 = vst.msk [vmem:[#allocation4 + $0x68] sm:$0xff] %vm636, %v1341
      %1358 = vst.msk [vmem:[#allocation4 + $0x70] sm:$0xff] %vm636, %v1342
      %1359 = vst.msk [vmem:[#allocation4 + $0x78] sm:$0xff] %vm636, %v1343
      %1360 = vst.msk [vmem:[#allocation2] sm:$0xff] %vm1102, %v782
      %1361 = vst.msk [vmem:[#allocation2 + $0x8] sm:$0xff] %vm1102, %v783
      %1362 = vst.msk [vmem:[#allocation2 + $0x10] sm:$0xff] %vm1102, %v784
      %1363 = vst.msk [vmem:[#allocation2 + $0x18] sm:$0xff] %vm1102, %v785
      %1364 = vst.msk [vmem:[#allocation2 + $0x20] sm:$0xff] %vm1102, %v786
      %1365 = vst.msk [vmem:[#allocation2 + $0x28] sm:$0xff] %vm1102, %v787
      %1366 = vst.msk [vmem:[#allocation2 + $0x30] sm:$0xff] %vm1102, %v788
      %1367 = vst.msk [vmem:[#allocation2 + $0x38] sm:$0xff] %vm1102, %v789
      %1368 = vst.msk [vmem:[#allocation2 + $0x40] sm:$0xff] %vm1102, %v790
      %1369 = vst.msk [vmem:[#allocation2 + $0x48] sm:$0xff] %vm1102, %v791
      %1370 = vst.msk [vmem:[#allocation2 + $0x50] sm:$0xff] %vm1102, %v792
      %1371 = vst.msk [vmem:[#allocation2 + $0x58] sm:$0xff] %vm1102, %v793
      %1372 = vst.msk [vmem:[#allocation2 + $0x60] sm:$0xff] %vm1102, %v794
      %1373 = vst.msk [vmem:[#allocation2 + $0x68] sm:$0xff] %vm1102, %v795
      %1374 = vst.msk [vmem:[#allocation2 + $0x70] sm:$0xff] %vm1102, %v796
      %1375 = vst.msk [vmem:[#allocation2 + $0x78] sm:$0xff] %vm1102, %v797
      // Predicated region
      $region41: #{attention_forward.4} parent=35 // pred_check
        %p1376 = pneg %p422
      $region42: #{attention_forward.4} parent=35 // pred_check_branch
        %1378 = sbr.rel (%p1376) target = $region44
      $region43: #{attention_forward.4} parent=35 // pred_region
        %v1379 = vld [vmem:[#allocation4] sm:$0xff]
        %v1380 = vld [vmem:[#allocation4 + $0x8] sm:$0xff]
        %v1381 = vld [vmem:[#allocation4 + $0x10] sm:$0xff]
        %v1382 = vld [vmem:[#allocation4 + $0x18] sm:$0xff]
        %v1383 = vld [vmem:[#allocation4 + $0x20] sm:$0xff]
        %v1384 = vld [vmem:[#allocation4 + $0x28] sm:$0xff]
        %v1385 = vld [vmem:[#allocation4 + $0x30] sm:$0xff]
        %v1386 = vld [vmem:[#allocation4 + $0x38] sm:$0xff]
        %v1387 = vld [vmem:[#allocation4 + $0x40] sm:$0xff]
        %v1388 = vld [vmem:[#allocation4 + $0x48] sm:$0xff]
        %v1389 = vld [vmem:[#allocation4 + $0x50] sm:$0xff]
        %v1390 = vld [vmem:[#allocation4 + $0x58] sm:$0xff]
        %v1391 = vld [vmem:[#allocation4 + $0x60] sm:$0xff]
        %v1392 = vld [vmem:[#allocation4 + $0x68] sm:$0xff]
        %v1393 = vld [vmem:[#allocation4 + $0x70] sm:$0xff]
        %v1394 = vld [vmem:[#allocation4 + $0x78] sm:$0xff]
        %v1395 = vld [vmem:[#allocation3] sm:$0xff]
        %v1396 = vld [vmem:[#allocation3 + $0x8] sm:$0xff]
        %v1397 = vld [vmem:[#allocation3 + $0x10] sm:$0xff]
        %v1398 = vld [vmem:[#allocation3 + $0x18] sm:$0xff]
        %v1399 = vld [vmem:[#allocation3 + $0x20] sm:$0xff]
        %v1400 = vld [vmem:[#allocation3 + $0x28] sm:$0xff]
        %v1401 = vld [vmem:[#allocation3 + $0x30] sm:$0xff]
        %v1402 = vld [vmem:[#allocation3 + $0x38] sm:$0xff]
        %v1403 = vld [vmem:[#allocation3 + $0x40] sm:$0xff]
        %v1404 = vld [vmem:[#allocation3 + $0x48] sm:$0xff]
        %v1405 = vld [vmem:[#allocation3 + $0x50] sm:$0xff]
        %v1406 = vld [vmem:[#allocation3 + $0x58] sm:$0xff]
        %v1407 = vld [vmem:[#allocation3 + $0x60] sm:$0xff]
        %v1408 = vld [vmem:[#allocation3 + $0x68] sm:$0xff]
        %v1409 = vld [vmem:[#allocation3 + $0x70] sm:$0xff]
        %v1410 = vld [vmem:[#allocation3 + $0x78] sm:$0xff]
        %v1411 = vrcp.pop %v1395
        %v1412 = vrcp.pop %v1396
        %v1413 = vrcp.pop %v1397
        %v1414 = vrcp.pop %v1398
        %v1415 = vrcp.pop %v1399
        %v1416 = vrcp.pop %v1400
        %v1417 = vrcp.pop %v1401
        %v1418 = vrcp.pop %v1402
        %v1419 = vrcp.pop %v1403
        %v1420 = vrcp.pop %v1404
        %v1421 = vrcp.pop %v1405
        %v1422 = vrcp.pop %v1406
        %v1423 = vrcp.pop %v1407
        %v1424 = vrcp.pop %v1408
        %v1425 = vrcp.pop %v1409
        %v1426 = vrcp.pop %v1410
        %1428 = vset.pattern.permute.xlu0 0
        %1429 = vperm.xlu0 %1428, %v1411
        %v1430 = vpop.permute.xlu0 %1429
        %1433 = vset.pattern.permute.xlu0 0
        %1434 = vperm.xlu0 %1433, %v1412
        %v1435 = vpop.permute.xlu0 %1434
        %1438 = vset.pattern.permute.xlu0 0
        %1439 = vperm.xlu0 %1438, %v1413
        %v1440 = vpop.permute.xlu0 %1439
        %1443 = vset.pattern.permute.xlu0 0
        %1444 = vperm.xlu0 %1443, %v1414
        %v1445 = vpop.permute.xlu0 %1444
        %1448 = vset.pattern.permute.xlu0 0
        %1449 = vperm.xlu0 %1448, %v1415
        %v1450 = vpop.permute.xlu0 %1449
        %1453 = vset.pattern.permute.xlu0 0
        %1454 = vperm.xlu0 %1453, %v1416
        %v1455 = vpop.permute.xlu0 %1454
        %1458 = vset.pattern.permute.xlu0 0
        %1459 = vperm.xlu0 %1458, %v1417
        %v1460 = vpop.permute.xlu0 %1459
        %1463 = vset.pattern.permute.xlu0 0
        %1464 = vperm.xlu0 %1463, %v1418
        %v1465 = vpop.permute.xlu0 %1464
        %1468 = vset.pattern.permute.xlu0 0
        %1469 = vperm.xlu0 %1468, %v1419
        %v1470 = vpop.permute.xlu0 %1469
        %1473 = vset.pattern.permute.xlu0 0
        %1474 = vperm.xlu0 %1473, %v1420
        %v1475 = vpop.permute.xlu0 %1474
        %1478 = vset.pattern.permute.xlu0 0
        %1479 = vperm.xlu0 %1478, %v1421
        %v1480 = vpop.permute.xlu0 %1479
        %1483 = vset.pattern.permute.xlu0 0
        %1484 = vperm.xlu0 %1483, %v1422
        %v1485 = vpop.permute.xlu0 %1484
        %1488 = vset.pattern.permute.xlu0 0
        %1489 = vperm.xlu0 %1488, %v1423
        %v1490 = vpop.permute.xlu0 %1489
        %1493 = vset.pattern.permute.xlu0 0
        %1494 = vperm.xlu0 %1493, %v1424
        %v1495 = vpop.permute.xlu0 %1494
        %1498 = vset.pattern.permute.xlu0 0
        %1499 = vperm.xlu0 %1498, %v1425
        %v1500 = vpop.permute.xlu0 %1499
        %1503 = vset.pattern.permute.xlu0 0
        %1504 = vperm.xlu0 %1503, %v1426
        %v1505 = vpop.permute.xlu0 %1504
        %v1507 = vmul.f32 %v1379, %v1430
        %v1508 = vmul.f32 %v1380, %v1435
        %v1509 = vmul.f32 %v1381, %v1440
        %v1510 = vmul.f32 %v1382, %v1445
        %v1511 = vmul.f32 %v1383, %v1450
        %v1512 = vmul.f32 %v1384, %v1455
        %v1513 = vmul.f32 %v1385, %v1460
        %v1514 = vmul.f32 %v1386, %v1465
        %v1515 = vmul.f32 %v1387, %v1470
        %v1516 = vmul.f32 %v1388, %v1475
        %v1517 = vmul.f32 %v1389, %v1480
        %v1518 = vmul.f32 %v1390, %v1485
        %v1519 = vmul.f32 %v1391, %v1490
        %v1520 = vmul.f32 %v1392, %v1495
        %v1521 = vmul.f32 %v1393, %v1500
        %v1522 = vmul.f32 %v1394, %v1505
        %v1523 = vpack.c.bf16 %v1507, %v1507
        %v1524 = vpack.c.bf16 %v1508, %v1508
        %v1525 = vpack.c.bf16 %v1509, %v1509
        %v1526 = vpack.c.bf16 %v1510, %v1510
        %v1527 = vpack.c.bf16 %v1511, %v1511
        %v1528 = vpack.c.bf16 %v1512, %v1512
        %v1529 = vpack.c.bf16 %v1513, %v1513
        %v1530 = vpack.c.bf16 %v1514, %v1514
        %v1531 = vpack.c.bf16 %v1515, %v1515
        %v1532 = vpack.c.bf16 %v1516, %v1516
        %v1533 = vpack.c.bf16 %v1517, %v1517
        %v1534 = vpack.c.bf16 %v1518, %v1518
        %v1535 = vpack.c.bf16 %v1519, %v1519
        %v1536 = vpack.c.bf16 %v1520, %v1520
        %v1537 = vpack.c.bf16 %v1521, %v1521
        %v1538 = vpack.c.bf16 %v1522, %v1522
        %vm1539 = vcmask 257024
        %1540 = vst.msk [vmem:[%s420] sm:$0xf] %vm1539, %v1523
        %1541 = vst.msk [vmem:[%s420 + $0x4] sm:$0xf] %vm1539, %v1524
        %1542 = vst.msk [vmem:[%s420 + $0x8] sm:$0xf] %vm1539, %v1525
        %1543 = vst.msk [vmem:[%s420 + $0xc] sm:$0xf] %vm1539, %v1526
        %1544 = vst.msk [vmem:[%s420 + $0x10] sm:$0xf] %vm1539, %v1527
        %1545 = vst.msk [vmem:[%s420 + $0x14] sm:$0xf] %vm1539, %v1528
        %1546 = vst.msk [vmem:[%s420 + $0x18] sm:$0xf] %vm1539, %v1529
        %1547 = vst.msk [vmem:[%s420 + $0x1c] sm:$0xf] %vm1539, %v1530
        %1548 = vst.msk [vmem:[%s420 + $0x20] sm:$0xf] %vm1539, %v1531
        %1549 = vst.msk [vmem:[%s420 + $0x24] sm:$0xf] %vm1539, %v1532
        %1550 = vst.msk [vmem:[%s420 + $0x28] sm:$0xf] %vm1539, %v1533
        %1551 = vst.msk [vmem:[%s420 + $0x2c] sm:$0xf] %vm1539, %v1534
        %1552 = vst.msk [vmem:[%s420 + $0x30] sm:$0xf] %vm1539, %v1535
        %1553 = vst.msk [vmem:[%s420 + $0x34] sm:$0xf] %vm1539, %v1536
        %1554 = vst.msk [vmem:[%s420 + $0x38] sm:$0xf] %vm1539, %v1537
        %1555 = vst.msk [vmem:[%s420 + $0x3c] sm:$0xf] %vm1539, %v1538
      $region44: #{attention_forward.4} parent=35 // pred_fallthru
        _
      %s1556 = smul.u32 16, %s23
      %p1557 = scmp.lt.s32.totalorder %s21, 1
      %s1558 = scalar_select %p1557, %s21, 1
      %p1559 = scmp.lt.s32.totalorder %s22, 3
      %s1560 = scalar_select %p1559, %s22, 3
      %p1561 = scmp.lt.s32.totalorder %s1556, 15
      %s1562 = scalar_select %p1561, %s1556, 15
      %s1563 = smul.addr %s1560, 16
      %s1564 = sadd.s32 %s1562, %s1563
      %s1565 = smul.addr %s1558, 64
      %s1566 = sadd.s32 %s1564, %s1565
      %s1567 = smul.addr %s1566, 4
      %s1568 = scalar_lea.vmem %s4, %s1567
      // Predicated region
      $region45: #{attention_forward.4} parent=35 // pred_check
        %p1569 = pneg %p183
      $region46: #{attention_forward.4} parent=35 // pred_check_branch
        %1571 = sbr.rel (%p1569) target = $region48
      $region47: #{attention_forward.4} parent=35 // pred_region
        %s1572 = smul.u32 16, %s23
      $region48: #{attention_forward.4} parent=35 // pred_fallthru
        _
    $region36: #{attention_forward.4} parent=5 // pred_fallthru
      _
    %p1573 = scmp.le.s32.totalorder 2, %s10
    // Predicated region
    $region49: #{attention_forward.4} parent=5 // pred_check
      %p1574 = pneg %p1573
    $region50: #{attention_forward.4} parent=5 // pred_check_branch
      %1576 = sbr.rel (%p1574) target = $region52
    $region51: #{attention_forward.4} parent=5 // pred_region
      %s1577 = ssub.s32 %s10, 2
      // Predicated region
      $region53: #{attention_forward.4} parent=51 // pred_check
        %p1578 = pneg %p189
      $region54: #{attention_forward.4} parent=51 // pred_check_branch
        %1580 = sbr.rel (%p1578) target = $region56
      $region55: #{attention_forward.4} parent=51 // pred_region
        %s1581 = smul.u32 16, %s27
        %p1582 = scmp.lt.s32.totalorder %s25, 1
        %s1583 = scalar_select %p1582, %s25, 1
        %p1584 = scmp.lt.s32.totalorder %s26, 3
        %s1585 = scalar_select %p1584, %s26, 3
        %p1586 = scmp.lt.s32.totalorder %s1581, 15
        %s1587 = scalar_select %p1586, %s1581, 15
        %s1588 = smul.addr %s1585, 16
        %s1589 = sadd.s32 %s1587, %s1588
        %s1590 = smul.addr %s1583, 64
        %s1591 = sadd.s32 %s1589, %s1590
        %s1592 = smul.addr %s1591, 4
        %s1593 = scalar_lea.vmem %s4, %s1592
      $region56: #{attention_forward.4} parent=51 // pred_fallthru
        _
    $region52: #{attention_forward.4} parent=5 // pred_fallthru
      _
  $region6: #{attention_forward.4} parent=0 // loop_footer
    %s14 = sadd.s32 1, %s10
  $region7: #{attention_forward.4} parent=0 // loop_footer_branch
    %9 = sbr.rel target = $region3
  $region8: #{attention_forward.4} parent=0 // loop_exit
    _

</llo_original>
